<compile_context>
chip_gen: v6e
topology: v6e:2x2x1
jax: 0.10.0
libtpu: 0.0.40
codegen_flags: <defaults>
</compile_context>

<pallas_src>
import functools

import jax
import jax.numpy as jnp
from jax.experimental import pallas as pl
from jax.experimental.pallas import tpu as pltpu

# Hyper-parameters matching the PyTorch module.
CHANNELS = 4          # `channels` global in the PyTorch file
N = 16                # reservoir_n  (n x n grid)
R = 2                 # reservoir_r  (receptive-field radius)
K = 2 * R + 1         # kernel size (5)
T = 3                 # number of reservoir update steps
INPUT_DIM = 784       # input_dim <= n*n*channels = 1024
BATCH = 2

NN = N * N            # flattened (lane-dense) spatial axis: 256


def _reservoir_kernel(s_ref, w_ref, out_ref, *, steps, n, r, c, bs):
    """Reservoir update with batch packed into sublanes (no grid).

    s_ref   : [C*B, n*n]          initial state, row = channel*B + batch
    w_ref   : [k*k, C*C*B, n*n]   weights, row = c_in*(C*B) + c_out*B + batch,
                                  with spatial boundary masks pre-folded in
    out_ref : [B, n*n]            channel-mean pooled final state
    """
    k = 2 * r + 1
    nn = n * n
    cb = c * bs          # compact state rows (8)

    def replicate(s_c):
        # [C*B, nn] -> [C_in*C_out*B, nn]; row i*C*B + o*B + b holds s_c[i*B + b].
        slabs = []
        for i in range(c):
            blk = s_c[i * bs:(i + 1) * bs, :]                 # [B, nn]
            slabs.append(jnp.concatenate([blk] * c, axis=0))  # tile across c_out
        return jnp.concatenate(slabs, axis=0)                 # [C*C*B, nn]

    def step(_, s_c):
        s_rep = replicate(s_c)                                # [32, nn] full vregs
        acc = None
        # 25 statically-unrolled taps; one roll + one full-vreg MAC per tap.
        for dy in range(k):
            for dx in range(k):
                delta = (dy - r) * n + (dx - r)               # in [-34, 34]
                if delta == 0:
                    shifted = s_rep
                else:
                    # shifted[p] = s[p + delta]; wrapped lanes are zeroed by the
                    # boundary masks folded into the weights.
                    shifted = pltpu.roll(s_rep, shift=(-delta) % nn, axis=1)
                prod = shifted * w_ref[dy * k + dx]           # [32, nn]
                acc = prod if acc is None else acc + prod
        # Input-channel reduction: sum the 4 vreg-aligned row slabs.
        red = acc[0:cb, :]
        for i in range(1, c):
            red = red + acc[i * cb:(i + 1) * cb, :]
        # leaky_relu with negative_slope = 0.1
        return jnp.maximum(red, 0.1 * red)                    # [C*B, nn]

    s_final = jax.lax.fori_loop(0, steps, step, s_ref[...], unroll=True)

    # Average pooling over the channel dimension -> [B, nn] (lane-dense).
    pooled = s_final[0:bs, :]
    for o in range(1, c):
        pooled = pooled + s_final[o * bs:(o + 1) * bs, :]
    out_ref[...] = pooled * (1.0 / c)


@jax.jit
def reservoir_forward(x, W):
    """Forward pass of ReservoirLayer.

    x : [batch, input_dim]      (input_dim <= n*n*channels)
    W : [n, n, C, C, k, k]      (same layout as the PyTorch parameter)
    returns: [batch, n*n]
    """
    batch = x.shape[0]
    total = NN * CHANNELS

    # Project the input into the grid: pad to n*n*channels, view as [B, C, n*n],
    # then pack batch into sublanes: [C*B, n*n] with row = channel*B + batch.
    s0 = jnp.pad(x, ((0, 0), (0, total - x.shape[1]))).astype(jnp.float32)
    s0 = s0.reshape(batch, CHANNELS, NN)
    s_packed = jnp.transpose(s0, (1, 0, 2)).reshape(CHANNELS * batch, NN)

    # Weights: [n,n,Cout,Cin,k,k] -> [k*k, Cin, Cout, n*n] (glue).
    w_perm = jnp.transpose(W, (4, 5, 3, 2, 0, 1)) \
                .reshape(K * K, CHANNELS, CHANNELS, NN).astype(jnp.float32)

    # Fold per-tap spatial boundary masks into the weights so that shifted
    # reads that wrap across row boundaries / the 256-lane boundary (or leave
    # the grid) contribute exactly zero — this reproduces F.unfold's zero
    # padding after flattening the spatial grid.
    yy = jnp.arange(N)[:, None]
    xx = jnp.arange(N)[None, :]
    masks = []
    for dy in range(K):
        for dx in range(K):
            sy, sx = dy - R, dx - R
            ok = ((yy + sy >= 0) & (yy + sy < N)
                  & (xx + sx >= 0) & (xx + sx < N))
            masks.append(ok.reshape(-1))
    tap_mask = jnp.stack(masks).astype(jnp.float32)           # [k*k, n*n]
    w_perm = w_perm * tap_mask[:, None, None, :]

    # Replicate across batch so every in-kernel weight load is a full-vreg
    # load that lines up with the sublane-packed state:
    # row = c_in*(C*B) + c_out*B + b.
    w_k = jnp.broadcast_to(w_perm[:, :, :, None, :],
                           (K * K, CHANNELS, CHANNELS, batch, NN))
    w_k = w_k.reshape(K * K, CHANNELS * CHANNELS * batch, NN)

    kernel = functools.partial(_reservoir_kernel, steps=T, n=N, r=R,
                               c=CHANNELS, bs=batch)
    pooled = pl.pallas_call(
        kernel,
        out_shape=jax.ShapeDtypeStruct((batch, NN), jnp.float32),
        in_specs=[
            pl.BlockSpec(memory_space=pltpu.MemorySpace.VMEM),
            pl.BlockSpec(memory_space=pltpu.MemorySpace.VMEM),
        ],
        out_specs=pl.BlockSpec(memory_space=pltpu.MemorySpace.VMEM),
    )(s_packed, w_k)
    # Already [batch, n*n], row-major spatial — same as torch .view(batch, -1).
    return pooled


def reservoir_forward_ref(x, W):
    """Pure-jnp reference matching the PyTorch semantics (for verification)."""
    batch = x.shape[0]
    total = NN * CHANNELS
    s = jnp.pad(x, ((0, 0), (0, total - x.shape[1]))) \
           .reshape(batch, CHANNELS, N, N).astype(jnp.float32)
    for _ in range(T):
        sp = jnp.pad(s, ((0, 0), (0, 0), (R, R), (R, R)))
        out = jnp.zeros_like(s)
        for dy in range(K):
            for dx in range(K):
                out = out + jnp.einsum(
                    'biyx,yxoi->boyx',
                    sp[:, :, dy:dy + N, dx:dx + N],
                    W[:, :, :, :, dy, dx],
                    precision=jax.lax.Precision.HIGHEST,
                )
        s = jnp.where(out >= 0.0, out, 0.1 * out)
    return s.mean(axis=1).reshape(batch, -1)


if __name__ == "__main__":
    key = jax.random.PRNGKey(0)
    kx, kw, km = jax.random.split(key, 3)

    # Deterministic synthetic input + weights (module shapes from __init__).
    x = jax.random.normal(kx, (BATCH, INPUT_DIM), dtype=jnp.float32)
    W = jax.random.normal(kw, (N, N, CHANNELS, CHANNELS, K, K),
                          dtype=jnp.float32)
    # Sparse "connectivity" and small scale so the reservoir stays bounded.
    conn = (jax.random.uniform(km, W.shape) < 0.3).astype(jnp.float32)
    W = W * conn * (1.0 / (CHANNELS * K * K))

    out = jax.block_until_ready(reservoir_forward(x, W))
    ref = reservoir_forward_ref(x, W)

    assert out.shape == (BATCH, N * N), out.shape
    assert bool(jnp.all(jnp.isfinite(out)))
    assert bool(jnp.allclose(out, ref, atol=1e-4, rtol=1e-4)), \
        float(jnp.max(jnp.abs(out - ref)))

    print("KERNEL_OK")
</pallas_src>

<mosaic_0001>
module attributes {stable_mosaic.version = 11 : i64} {
  func.func @_reservoir_kernel(%arg0: memref<8x256xf32, #tpu.memory_space<vmem>>, %arg1: memref<25x32x256xf32, #tpu.memory_space<vmem>>, %arg2: memref<2x256xf32, #tpu.memory_space<vmem>>) attributes {dimension_semantics = [], scalar_prefetch = 0 : i64, scratch_operands = 0 : i64, tpu.core_type = #tpu.core_type<tc>} {
    %c0 = arith.constant 0 : index
    %c0_0 = arith.constant 0 : index
    %0 = vector.load %arg0[%c0, %c0_0] : memref<8x256xf32, #tpu.memory_space<vmem>>, vector<8x256xf32>
    %c0_i32 = arith.constant 0 : i32
    %1 = vector.extract_strided_slice %0 {offsets = [0, 0], sizes = [2, 256], strides = [1, 1]} : vector<8x256xf32> to vector<2x256xf32>
    %2 = tpu.concatenate %1, %1, %1, %1 in 0 : vector<2x256xf32>, vector<2x256xf32>, vector<2x256xf32>, vector<2x256xf32> -> vector<8x256xf32>
    %3 = vector.extract_strided_slice %0 {offsets = [2, 0], sizes = [2, 256], strides = [1, 1]} : vector<8x256xf32> to vector<2x256xf32>
    %4 = tpu.concatenate %3, %3, %3, %3 in 0 : vector<2x256xf32>, vector<2x256xf32>, vector<2x256xf32>, vector<2x256xf32> -> vector<8x256xf32>
    %5 = vector.extract_strided_slice %0 {offsets = [4, 0], sizes = [2, 256], strides = [1, 1]} : vector<8x256xf32> to vector<2x256xf32>
    %6 = tpu.concatenate %5, %5, %5, %5 in 0 : vector<2x256xf32>, vector<2x256xf32>, vector<2x256xf32>, vector<2x256xf32> -> vector<8x256xf32>
    %7 = vector.extract_strided_slice %0 {offsets = [6, 0], sizes = [2, 256], strides = [1, 1]} : vector<8x256xf32> to vector<2x256xf32>
    %8 = tpu.concatenate %7, %7, %7, %7 in 0 : vector<2x256xf32>, vector<2x256xf32>, vector<2x256xf32>, vector<2x256xf32> -> vector<8x256xf32>
    %9 = tpu.concatenate %2, %4, %6, %8 in 0 : vector<8x256xf32>, vector<8x256xf32>, vector<8x256xf32>, vector<8x256xf32> -> vector<32x256xf32>
    %c34_i32 = arith.constant 34 : i32
    %10 = tpu.dynamic_rotate %9 by %c34_i32 dim 1 : vector<32x256xf32>, i32 -> vector<32x256xf32>
    %c0_1 = arith.constant 0 : index
    %c0_2 = arith.constant 0 : index
    %c0_3 = arith.constant 0 : index
    %11 = vector.load %arg1[%c0_1, %c0_2, %c0_3] : memref<25x32x256xf32, #tpu.memory_space<vmem>>, vector<1x32x256xf32>
    %12 = vector.shape_cast %11 : vector<1x32x256xf32> to vector<32x256xf32>
    %13 = arith.mulf %10, %12 : vector<32x256xf32>
    %c33_i32 = arith.constant 33 : i32
    %14 = tpu.dynamic_rotate %9 by %c33_i32 dim 1 : vector<32x256xf32>, i32 -> vector<32x256xf32>
    %c1 = arith.constant 1 : index
    %c0_4 = arith.constant 0 : index
    %c0_5 = arith.constant 0 : index
    %15 = vector.load %arg1[%c1, %c0_4, %c0_5] : memref<25x32x256xf32, #tpu.memory_space<vmem>>, vector<1x32x256xf32>
    %16 = vector.shape_cast %15 : vector<1x32x256xf32> to vector<32x256xf32>
    %17 = arith.mulf %14, %16 : vector<32x256xf32>
    %18 = arith.addf %13, %17 : vector<32x256xf32>
    %c32_i32 = arith.constant 32 : i32
    %19 = tpu.dynamic_rotate %9 by %c32_i32 dim 1 : vector<32x256xf32>, i32 -> vector<32x256xf32>
    %c2 = arith.constant 2 : index
    %c0_6 = arith.constant 0 : index
    %c0_7 = arith.constant 0 : index
    %20 = vector.load %arg1[%c2, %c0_6, %c0_7] : memref<25x32x256xf32, #tpu.memory_space<vmem>>, vector<1x32x256xf32>
    %21 = vector.shape_cast %20 : vector<1x32x256xf32> to vector<32x256xf32>
    %22 = arith.mulf %19, %21 : vector<32x256xf32>
    %23 = arith.addf %18, %22 : vector<32x256xf32>
    %c31_i32 = arith.constant 31 : i32
    %24 = tpu.dynamic_rotate %9 by %c31_i32 dim 1 : vector<32x256xf32>, i32 -> vector<32x256xf32>
    %c3 = arith.constant 3 : index
    %c0_8 = arith.constant 0 : index
    %c0_9 = arith.constant 0 : index
    %25 = vector.load %arg1[%c3, %c0_8, %c0_9] : memref<25x32x256xf32, #tpu.memory_space<vmem>>, vector<1x32x256xf32>
    %26 = vector.shape_cast %25 : vector<1x32x256xf32> to vector<32x256xf32>
    %27 = arith.mulf %24, %26 : vector<32x256xf32>
    %28 = arith.addf %23, %27 : vector<32x256xf32>
    %c30_i32 = arith.constant 30 : i32
    %29 = tpu.dynamic_rotate %9 by %c30_i32 dim 1 : vector<32x256xf32>, i32 -> vector<32x256xf32>
    %c4 = arith.constant 4 : index
    %c0_10 = arith.constant 0 : index
    %c0_11 = arith.constant 0 : index
    %30 = vector.load %arg1[%c4, %c0_10, %c0_11] : memref<25x32x256xf32, #tpu.memory_space<vmem>>, vector<1x32x256xf32>
    %31 = vector.shape_cast %30 : vector<1x32x256xf32> to vector<32x256xf32>
    %32 = arith.mulf %29, %31 : vector<32x256xf32>
    %33 = arith.addf %28, %32 : vector<32x256xf32>
    %c18_i32 = arith.constant 18 : i32
    %34 = tpu.dynamic_rotate %9 by %c18_i32 dim 1 : vector<32x256xf32>, i32 -> vector<32x256xf32>
    %c5 = arith.constant 5 : index
    %c0_12 = arith.constant 0 : index
    %c0_13 = arith.constant 0 : index
    %35 = vector.load %arg1[%c5, %c0_12, %c0_13] : memref<25x32x256xf32, #tpu.memory_space<vmem>>, vector<1x32x256xf32>
    %36 = vector.shape_cast %35 : vector<1x32x256xf32> to vector<32x256xf32>
    %37 = arith.mulf %34, %36 : vector<32x256xf32>
    %38 = arith.addf %33, %37 : vector<32x256xf32>
    %c17_i32 = arith.constant 17 : i32
    %39 = tpu.dynamic_rotate %9 by %c17_i32 dim 1 : vector<32x256xf32>, i32 -> vector<32x256xf32>
    %c6 = arith.constant 6 : index
    %c0_14 = arith.constant 0 : index
    %c0_15 = arith.constant 0 : index
    %40 = vector.load %arg1[%c6, %c0_14, %c0_15] : memref<25x32x256xf32, #tpu.memory_space<vmem>>, vector<1x32x256xf32>
    %41 = vector.shape_cast %40 : vector<1x32x256xf32> to vector<32x256xf32>
    %42 = arith.mulf %39, %41 : vector<32x256xf32>
    %43 = arith.addf %38, %42 : vector<32x256xf32>
    %c16_i32 = arith.constant 16 : i32
    %44 = tpu.dynamic_rotate %9 by %c16_i32 dim 1 : vector<32x256xf32>, i32 -> vector<32x256xf32>
    %c7 = arith.constant 7 : index
    %c0_16 = arith.constant 0 : index
    %c0_17 = arith.constant 0 : index
    %45 = vector.load %arg1[%c7, %c0_16, %c0_17] : memref<25x32x256xf32, #tpu.memory_space<vmem>>, vector<1x32x256xf32>
    %46 = vector.shape_cast %45 : vector<1x32x256xf32> to vector<32x256xf32>
    %47 = arith.mulf %44, %46 : vector<32x256xf32>
    %48 = arith.addf %43, %47 : vector<32x256xf32>
    %c15_i32 = arith.constant 15 : i32
    %49 = tpu.dynamic_rotate %9 by %c15_i32 dim 1 : vector<32x256xf32>, i32 -> vector<32x256xf32>
    %c8 = arith.constant 8 : index
    %c0_18 = arith.constant 0 : index
    %c0_19 = arith.constant 0 : index
    %50 = vector.load %arg1[%c8, %c0_18, %c0_19] : memref<25x32x256xf32, #tpu.memory_space<vmem>>, vector<1x32x256xf32>
    %51 = vector.shape_cast %50 : vector<1x32x256xf32> to vector<32x256xf32>
    %52 = arith.mulf %49, %51 : vector<32x256xf32>
    %53 = arith.addf %48, %52 : vector<32x256xf32>
    %c14_i32 = arith.constant 14 : i32
    %54 = tpu.dynamic_rotate %9 by %c14_i32 dim 1 : vector<32x256xf32>, i32 -> vector<32x256xf32>
    %c9 = arith.constant 9 : index
    %c0_20 = arith.constant 0 : index
    %c0_21 = arith.constant 0 : index
    %55 = vector.load %arg1[%c9, %c0_20, %c0_21] : memref<25x32x256xf32, #tpu.memory_space<vmem>>, vector<1x32x256xf32>
    %56 = vector.shape_cast %55 : vector<1x32x256xf32> to vector<32x256xf32>
    %57 = arith.mulf %54, %56 : vector<32x256xf32>
    %58 = arith.addf %53, %57 : vector<32x256xf32>
    %c2_i32 = arith.constant 2 : i32
    %59 = tpu.dynamic_rotate %9 by %c2_i32 dim 1 : vector<32x256xf32>, i32 -> vector<32x256xf32>
    %c10 = arith.constant 10 : index
    %c0_22 = arith.constant 0 : index
    %c0_23 = arith.constant 0 : index
    %60 = vector.load %arg1[%c10, %c0_22, %c0_23] : memref<25x32x256xf32, #tpu.memory_space<vmem>>, vector<1x32x256xf32>
    %61 = vector.shape_cast %60 : vector<1x32x256xf32> to vector<32x256xf32>
    %62 = arith.mulf %59, %61 : vector<32x256xf32>
    %63 = arith.addf %58, %62 : vector<32x256xf32>
    %c1_i32 = arith.constant 1 : i32
    %64 = tpu.dynamic_rotate %9 by %c1_i32 dim 1 : vector<32x256xf32>, i32 -> vector<32x256xf32>
    %c11 = arith.constant 11 : index
    %c0_24 = arith.constant 0 : index
    %c0_25 = arith.constant 0 : index
    %65 = vector.load %arg1[%c11, %c0_24, %c0_25] : memref<25x32x256xf32, #tpu.memory_space<vmem>>, vector<1x32x256xf32>
    %66 = vector.shape_cast %65 : vector<1x32x256xf32> to vector<32x256xf32>
    %67 = arith.mulf %64, %66 : vector<32x256xf32>
    %68 = arith.addf %63, %67 : vector<32x256xf32>
    %c12 = arith.constant 12 : index
    %c0_26 = arith.constant 0 : index
    %c0_27 = arith.constant 0 : index
    %69 = vector.load %arg1[%c12, %c0_26, %c0_27] : memref<25x32x256xf32, #tpu.memory_space<vmem>>, vector<1x32x256xf32>
    %70 = vector.shape_cast %69 : vector<1x32x256xf32> to vector<32x256xf32>
    %71 = arith.mulf %9, %70 : vector<32x256xf32>
    %72 = arith.addf %68, %71 : vector<32x256xf32>
    %c255_i32 = arith.constant 255 : i32
    %73 = tpu.dynamic_rotate %9 by %c255_i32 dim 1 : vector<32x256xf32>, i32 -> vector<32x256xf32>
    %c13 = arith.constant 13 : index
    %c0_28 = arith.constant 0 : index
    %c0_29 = arith.constant 0 : index
    %74 = vector.load %arg1[%c13, %c0_28, %c0_29] : memref<25x32x256xf32, #tpu.memory_space<vmem>>, vector<1x32x256xf32>
    %75 = vector.shape_cast %74 : vector<1x32x256xf32> to vector<32x256xf32>
    %76 = arith.mulf %73, %75 : vector<32x256xf32>
    %77 = arith.addf %72, %76 : vector<32x256xf32>
    %c254_i32 = arith.constant 254 : i32
    %78 = tpu.dynamic_rotate %9 by %c254_i32 dim 1 : vector<32x256xf32>, i32 -> vector<32x256xf32>
    %c14 = arith.constant 14 : index
    %c0_30 = arith.constant 0 : index
    %c0_31 = arith.constant 0 : index
    %79 = vector.load %arg1[%c14, %c0_30, %c0_31] : memref<25x32x256xf32, #tpu.memory_space<vmem>>, vector<1x32x256xf32>
    %80 = vector.shape_cast %79 : vector<1x32x256xf32> to vector<32x256xf32>
    %81 = arith.mulf %78, %80 : vector<32x256xf32>
    %82 = arith.addf %77, %81 : vector<32x256xf32>
    %c242_i32 = arith.constant 242 : i32
    %83 = tpu.dynamic_rotate %9 by %c242_i32 dim 1 : vector<32x256xf32>, i32 -> vector<32x256xf32>
    %c15 = arith.constant 15 : index
    %c0_32 = arith.constant 0 : index
    %c0_33 = arith.constant 0 : index
    %84 = vector.load %arg1[%c15, %c0_32, %c0_33] : memref<25x32x256xf32, #tpu.memory_space<vmem>>, vector<1x32x256xf32>
    %85 = vector.shape_cast %84 : vector<1x32x256xf32> to vector<32x256xf32>
    %86 = arith.mulf %83, %85 : vector<32x256xf32>
    %87 = arith.addf %82, %86 : vector<32x256xf32>
    %c241_i32 = arith.constant 241 : i32
    %88 = tpu.dynamic_rotate %9 by %c241_i32 dim 1 : vector<32x256xf32>, i32 -> vector<32x256xf32>
    %c16 = arith.constant 16 : index
    %c0_34 = arith.constant 0 : index
    %c0_35 = arith.constant 0 : index
    %89 = vector.load %arg1[%c16, %c0_34, %c0_35] : memref<25x32x256xf32, #tpu.memory_space<vmem>>, vector<1x32x256xf32>
    %90 = vector.shape_cast %89 : vector<1x32x256xf32> to vector<32x256xf32>
    %91 = arith.mulf %88, %90 : vector<32x256xf32>
    %92 = arith.addf %87, %91 : vector<32x256xf32>
    %c240_i32 = arith.constant 240 : i32
    %93 = tpu.dynamic_rotate %9 by %c240_i32 dim 1 : vector<32x256xf32>, i32 -> vector<32x256xf32>
    %c17 = arith.constant 17 : index
    %c0_36 = arith.constant 0 : index
    %c0_37 = arith.constant 0 : index
    %94 = vector.load %arg1[%c17, %c0_36, %c0_37] : memref<25x32x256xf32, #tpu.memory_space<vmem>>, vector<1x32x256xf32>
    %95 = vector.shape_cast %94 : vector<1x32x256xf32> to vector<32x256xf32>
    %96 = arith.mulf %93, %95 : vector<32x256xf32>
    %97 = arith.addf %92, %96 : vector<32x256xf32>
    %c239_i32 = arith.constant 239 : i32
    %98 = tpu.dynamic_rotate %9 by %c239_i32 dim 1 : vector<32x256xf32>, i32 -> vector<32x256xf32>
    %c18 = arith.constant 18 : index
    %c0_38 = arith.constant 0 : index
    %c0_39 = arith.constant 0 : index
    %99 = vector.load %arg1[%c18, %c0_38, %c0_39] : memref<25x32x256xf32, #tpu.memory_space<vmem>>, vector<1x32x256xf32>
    %100 = vector.shape_cast %99 : vector<1x32x256xf32> to vector<32x256xf32>
    %101 = arith.mulf %98, %100 : vector<32x256xf32>
    %102 = arith.addf %97, %101 : vector<32x256xf32>
    %c238_i32 = arith.constant 238 : i32
    %103 = tpu.dynamic_rotate %9 by %c238_i32 dim 1 : vector<32x256xf32>, i32 -> vector<32x256xf32>
    %c19 = arith.constant 19 : index
    %c0_40 = arith.constant 0 : index
    %c0_41 = arith.constant 0 : index
    %104 = vector.load %arg1[%c19, %c0_40, %c0_41] : memref<25x32x256xf32, #tpu.memory_space<vmem>>, vector<1x32x256xf32>
    %105 = vector.shape_cast %104 : vector<1x32x256xf32> to vector<32x256xf32>
    %106 = arith.mulf %103, %105 : vector<32x256xf32>
    %107 = arith.addf %102, %106 : vector<32x256xf32>
    %c226_i32 = arith.constant 226 : i32
    %108 = tpu.dynamic_rotate %9 by %c226_i32 dim 1 : vector<32x256xf32>, i32 -> vector<32x256xf32>
    %c20 = arith.constant 20 : index
    %c0_42 = arith.constant 0 : index
    %c0_43 = arith.constant 0 : index
    %109 = vector.load %arg1[%c20, %c0_42, %c0_43] : memref<25x32x256xf32, #tpu.memory_space<vmem>>, vector<1x32x256xf32>
    %110 = vector.shape_cast %109 : vector<1x32x256xf32> to vector<32x256xf32>
    %111 = arith.mulf %108, %110 : vector<32x256xf32>
    %112 = arith.addf %107, %111 : vector<32x256xf32>
    %c225_i32 = arith.constant 225 : i32
    %113 = tpu.dynamic_rotate %9 by %c225_i32 dim 1 : vector<32x256xf32>, i32 -> vector<32x256xf32>
    %c21 = arith.constant 21 : index
    %c0_44 = arith.constant 0 : index
    %c0_45 = arith.constant 0 : index
    %114 = vector.load %arg1[%c21, %c0_44, %c0_45] : memref<25x32x256xf32, #tpu.memory_space<vmem>>, vector<1x32x256xf32>
    %115 = vector.shape_cast %114 : vector<1x32x256xf32> to vector<32x256xf32>
    %116 = arith.mulf %113, %115 : vector<32x256xf32>
    %117 = arith.addf %112, %116 : vector<32x256xf32>
    %c224_i32 = arith.constant 224 : i32
    %118 = tpu.dynamic_rotate %9 by %c224_i32 dim 1 : vector<32x256xf32>, i32 -> vector<32x256xf32>
    %c22 = arith.constant 22 : index
    %c0_46 = arith.constant 0 : index
    %c0_47 = arith.constant 0 : index
    %119 = vector.load %arg1[%c22, %c0_46, %c0_47] : memref<25x32x256xf32, #tpu.memory_space<vmem>>, vector<1x32x256xf32>
    %120 = vector.shape_cast %119 : vector<1x32x256xf32> to vector<32x256xf32>
    %121 = arith.mulf %118, %120 : vector<32x256xf32>
    %122 = arith.addf %117, %121 : vector<32x256xf32>
    %c223_i32 = arith.constant 223 : i32
    %123 = tpu.dynamic_rotate %9 by %c223_i32 dim 1 : vector<32x256xf32>, i32 -> vector<32x256xf32>
    %c23 = arith.constant 23 : index
    %c0_48 = arith.constant 0 : index
    %c0_49 = arith.constant 0 : index
    %124 = vector.load %arg1[%c23, %c0_48, %c0_49] : memref<25x32x256xf32, #tpu.memory_space<vmem>>, vector<1x32x256xf32>
    %125 = vector.shape_cast %124 : vector<1x32x256xf32> to vector<32x256xf32>
    %126 = arith.mulf %123, %125 : vector<32x256xf32>
    %127 = arith.addf %122, %126 : vector<32x256xf32>
    %c222_i32 = arith.constant 222 : i32
    %128 = tpu.dynamic_rotate %9 by %c222_i32 dim 1 : vector<32x256xf32>, i32 -> vector<32x256xf32>
    %c24 = arith.constant 24 : index
    %c0_50 = arith.constant 0 : index
    %c0_51 = arith.constant 0 : index
    %129 = vector.load %arg1[%c24, %c0_50, %c0_51] : memref<25x32x256xf32, #tpu.memory_space<vmem>>, vector<1x32x256xf32>
    %130 = vector.shape_cast %129 : vector<1x32x256xf32> to vector<32x256xf32>
    %131 = arith.mulf %128, %130 : vector<32x256xf32>
    %132 = arith.addf %127, %131 : vector<32x256xf32>
    %133 = vector.extract_strided_slice %132 {offsets = [0, 0], sizes = [8, 256], strides = [1, 1]} : vector<32x256xf32> to vector<8x256xf32>
    %134 = vector.extract_strided_slice %132 {offsets = [8, 0], sizes = [8, 256], strides = [1, 1]} : vector<32x256xf32> to vector<8x256xf32>
    %135 = arith.addf %133, %134 : vector<8x256xf32>
    %136 = vector.extract_strided_slice %132 {offsets = [16, 0], sizes = [8, 256], strides = [1, 1]} : vector<32x256xf32> to vector<8x256xf32>
    %137 = arith.addf %135, %136 : vector<8x256xf32>
    %138 = vector.extract_strided_slice %132 {offsets = [24, 0], sizes = [8, 256], strides = [1, 1]} : vector<32x256xf32> to vector<8x256xf32>
    %139 = arith.addf %137, %138 : vector<8x256xf32>
    %cst = arith.constant 1.000000e-01 : f32
    %140 = vector.broadcast %cst : f32 to vector<8x256xf32>
    %141 = arith.mulf %140, %139 : vector<8x256xf32>
    %142 = arith.maximumf %139, %141 : vector<8x256xf32>
    %c1_i32_52 = arith.constant 1 : i32
    %143 = vector.extract_strided_slice %142 {offsets = [0, 0], sizes = [2, 256], strides = [1, 1]} : vector<8x256xf32> to vector<2x256xf32>
    %144 = tpu.concatenate %143, %143, %143, %143 in 0 : vector<2x256xf32>, vector<2x256xf32>, vector<2x256xf32>, vector<2x256xf32> -> vector<8x256xf32>
    %145 = vector.extract_strided_slice %142 {offsets = [2, 0], sizes = [2, 256], strides = [1, 1]} : vector<8x256xf32> to vector<2x256xf32>
    %146 = tpu.concatenate %145, %145, %145, %145 in 0 : vector<2x256xf32>, vector<2x256xf32>, vector<2x256xf32>, vector<2x256xf32> -> vector<8x256xf32>
    %147 = vector.extract_strided_slice %142 {offsets = [4, 0], sizes = [2, 256], strides = [1, 1]} : vector<8x256xf32> to vector<2x256xf32>
    %148 = tpu.concatenate %147, %147, %147, %147 in 0 : vector<2x256xf32>, vector<2x256xf32>, vector<2x256xf32>, vector<2x256xf32> -> vector<8x256xf32>
    %149 = vector.extract_strided_slice %142 {offsets = [6, 0], sizes = [2, 256], strides = [1, 1]} : vector<8x256xf32> to vector<2x256xf32>
    %150 = tpu.concatenate %149, %149, %149, %149 in 0 : vector<2x256xf32>, vector<2x256xf32>, vector<2x256xf32>, vector<2x256xf32> -> vector<8x256xf32>
    %151 = tpu.concatenate %144, %146, %148, %150 in 0 : vector<8x256xf32>, vector<8x256xf32>, vector<8x256xf32>, vector<8x256xf32> -> vector<32x256xf32>
    %c34_i32_53 = arith.constant 34 : i32
    %152 = tpu.dynamic_rotate %151 by %c34_i32_53 dim 1 : vector<32x256xf32>, i32 -> vector<32x256xf32>
    %c0_54 = arith.constant 0 : index
    %c0_55 = arith.constant 0 : index
    %c0_56 = arith.constant 0 : index
    %153 = vector.load %arg1[%c0_54, %c0_55, %c0_56] : memref<25x32x256xf32, #tpu.memory_space<vmem>>, vector<1x32x256xf32>
    %154 = vector.shape_cast %153 : vector<1x32x256xf32> to vector<32x256xf32>
    %155 = arith.mulf %152, %154 : vector<32x256xf32>
    %c33_i32_57 = arith.constant 33 : i32
    %156 = tpu.dynamic_rotate %151 by %c33_i32_57 dim 1 : vector<32x256xf32>, i32 -> vector<32x256xf32>
    %c1_58 = arith.constant 1 : index
    %c0_59 = arith.constant 0 : index
    %c0_60 = arith.constant 0 : index
    %157 = vector.load %arg1[%c1_58, %c0_59, %c0_60] : memref<25x32x256xf32, #tpu.memory_space<vmem>>, vector<1x32x256xf32>
    %158 = vector.shape_cast %157 : vector<1x32x256xf32> to vector<32x256xf32>
    %159 = arith.mulf %156, %158 : vector<32x256xf32>
    %160 = arith.addf %155, %159 : vector<32x256xf32>
    %c32_i32_61 = arith.constant 32 : i32
    %161 = tpu.dynamic_rotate %151 by %c32_i32_61 dim 1 : vector<32x256xf32>, i32 -> vector<32x256xf32>
    %c2_62 = arith.constant 2 : index
    %c0_63 = arith.constant 0 : index
    %c0_64 = arith.constant 0 : index
    %162 = vector.load %arg1[%c2_62, %c0_63, %c0_64] : memref<25x32x256xf32, #tpu.memory_space<vmem>>, vector<1x32x256xf32>
    %163 = vector.shape_cast %162 : vector<1x32x256xf32> to vector<32x256xf32>
    %164 = arith.mulf %161, %163 : vector<32x256xf32>
    %165 = arith.addf %160, %164 : vector<32x256xf32>
    %c31_i32_65 = arith.constant 31 : i32
    %166 = tpu.dynamic_rotate %151 by %c31_i32_65 dim 1 : vector<32x256xf32>, i32 -> vector<32x256xf32>
    %c3_66 = arith.constant 3 : index
    %c0_67 = arith.constant 0 : index
    %c0_68 = arith.constant 0 : index
    %167 = vector.load %arg1[%c3_66, %c0_67, %c0_68] : memref<25x32x256xf32, #tpu.memory_space<vmem>>, vector<1x32x256xf32>
    %168 = vector.shape_cast %167 : vector<1x32x256xf32> to vector<32x256xf32>
    %169 = arith.mulf %166, %168 : vector<32x256xf32>
    %170 = arith.addf %165, %169 : vector<32x256xf32>
    %c30_i32_69 = arith.constant 30 : i32
    %171 = tpu.dynamic_rotate %151 by %c30_i32_69 dim 1 : vector<32x256xf32>, i32 -> vector<32x256xf32>
    %c4_70 = arith.constant 4 : index
    %c0_71 = arith.constant 0 : index
    %c0_72 = arith.constant 0 : index
    %172 = vector.load %arg1[%c4_70, %c0_71, %c0_72] : memref<25x32x256xf32, #tpu.memory_space<vmem>>, vector<1x32x256xf32>
    %173 = vector.shape_cast %172 : vector<1x32x256xf32> to vector<32x256xf32>
    %174 = arith.mulf %171, %173 : vector<32x256xf32>
    %175 = arith.addf %170, %174 : vector<32x256xf32>
    %c18_i32_73 = arith.constant 18 : i32
    %176 = tpu.dynamic_rotate %151 by %c18_i32_73 dim 1 : vector<32x256xf32>, i32 -> vector<32x256xf32>
    %c5_74 = arith.constant 5 : index
    %c0_75 = arith.constant 0 : index
    %c0_76 = arith.constant 0 : index
    %177 = vector.load %arg1[%c5_74, %c0_75, %c0_76] : memref<25x32x256xf32, #tpu.memory_space<vmem>>, vector<1x32x256xf32>
    %178 = vector.shape_cast %177 : vector<1x32x256xf32> to vector<32x256xf32>
    %179 = arith.mulf %176, %178 : vector<32x256xf32>
    %180 = arith.addf %175, %179 : vector<32x256xf32>
    %c17_i32_77 = arith.constant 17 : i32
    %181 = tpu.dynamic_rotate %151 by %c17_i32_77 dim 1 : vector<32x256xf32>, i32 -> vector<32x256xf32>
    %c6_78 = arith.constant 6 : index
    %c0_79 = arith.constant 0 : index
    %c0_80 = arith.constant 0 : index
    %182 = vector.load %arg1[%c6_78, %c0_79, %c0_80] : memref<25x32x256xf32, #tpu.memory_space<vmem>>, vector<1x32x256xf32>
    %183 = vector.shape_cast %182 : vector<1x32x256xf32> to vector<32x256xf32>
    %184 = arith.mulf %181, %183 : vector<32x256xf32>
    %185 = arith.addf %180, %184 : vector<32x256xf32>
    %c16_i32_81 = arith.constant 16 : i32
    %186 = tpu.dynamic_rotate %151 by %c16_i32_81 dim 1 : vector<32x256xf32>, i32 -> vector<32x256xf32>
    %c7_82 = arith.constant 7 : index
    %c0_83 = arith.constant 0 : index
    %c0_84 = arith.constant 0 : index
    %187 = vector.load %arg1[%c7_82, %c0_83, %c0_84] : memref<25x32x256xf32, #tpu.memory_space<vmem>>, vector<1x32x256xf32>
    %188 = vector.shape_cast %187 : vector<1x32x256xf32> to vector<32x256xf32>
    %189 = arith.mulf %186, %188 : vector<32x256xf32>
    %190 = arith.addf %185, %189 : vector<32x256xf32>
    %c15_i32_85 = arith.constant 15 : i32
    %191 = tpu.dynamic_rotate %151 by %c15_i32_85 dim 1 : vector<32x256xf32>, i32 -> vector<32x256xf32>
    %c8_86 = arith.constant 8 : index
    %c0_87 = arith.constant 0 : index
    %c0_88 = arith.constant 0 : index
    %192 = vector.load %arg1[%c8_86, %c0_87, %c0_88] : memref<25x32x256xf32, #tpu.memory_space<vmem>>, vector<1x32x256xf32>
    %193 = vector.shape_cast %192 : vector<1x32x256xf32> to vector<32x256xf32>
    %194 = arith.mulf %191, %193 : vector<32x256xf32>
    %195 = arith.addf %190, %194 : vector<32x256xf32>
    %c14_i32_89 = arith.constant 14 : i32
    %196 = tpu.dynamic_rotate %151 by %c14_i32_89 dim 1 : vector<32x256xf32>, i32 -> vector<32x256xf32>
    %c9_90 = arith.constant 9 : index
    %c0_91 = arith.constant 0 : index
    %c0_92 = arith.constant 0 : index
    %197 = vector.load %arg1[%c9_90, %c0_91, %c0_92] : memref<25x32x256xf32, #tpu.memory_space<vmem>>, vector<1x32x256xf32>
    %198 = vector.shape_cast %197 : vector<1x32x256xf32> to vector<32x256xf32>
    %199 = arith.mulf %196, %198 : vector<32x256xf32>
    %200 = arith.addf %195, %199 : vector<32x256xf32>
    %c2_i32_93 = arith.constant 2 : i32
    %201 = tpu.dynamic_rotate %151 by %c2_i32_93 dim 1 : vector<32x256xf32>, i32 -> vector<32x256xf32>
    %c10_94 = arith.constant 10 : index
    %c0_95 = arith.constant 0 : index
    %c0_96 = arith.constant 0 : index
    %202 = vector.load %arg1[%c10_94, %c0_95, %c0_96] : memref<25x32x256xf32, #tpu.memory_space<vmem>>, vector<1x32x256xf32>
    %203 = vector.shape_cast %202 : vector<1x32x256xf32> to vector<32x256xf32>
    %204 = arith.mulf %201, %203 : vector<32x256xf32>
    %205 = arith.addf %200, %204 : vector<32x256xf32>
    %c1_i32_97 = arith.constant 1 : i32
    %206 = tpu.dynamic_rotate %151 by %c1_i32_97 dim 1 : vector<32x256xf32>, i32 -> vector<32x256xf32>
    %c11_98 = arith.constant 11 : index
    %c0_99 = arith.constant 0 : index
    %c0_100 = arith.constant 0 : index
    %207 = vector.load %arg1[%c11_98, %c0_99, %c0_100] : memref<25x32x256xf32, #tpu.memory_space<vmem>>, vector<1x32x256xf32>
    %208 = vector.shape_cast %207 : vector<1x32x256xf32> to vector<32x256xf32>
    %209 = arith.mulf %206, %208 : vector<32x256xf32>
    %210 = arith.addf %205, %209 : vector<32x256xf32>
    %c12_101 = arith.constant 12 : index
    %c0_102 = arith.constant 0 : index
    %c0_103 = arith.constant 0 : index
    %211 = vector.load %arg1[%c12_101, %c0_102, %c0_103] : memref<25x32x256xf32, #tpu.memory_space<vmem>>, vector<1x32x256xf32>
    %212 = vector.shape_cast %211 : vector<1x32x256xf32> to vector<32x256xf32>
    %213 = arith.mulf %151, %212 : vector<32x256xf32>
    %214 = arith.addf %210, %213 : vector<32x256xf32>
    %c255_i32_104 = arith.constant 255 : i32
    %215 = tpu.dynamic_rotate %151 by %c255_i32_104 dim 1 : vector<32x256xf32>, i32 -> vector<32x256xf32>
    %c13_105 = arith.constant 13 : index
    %c0_106 = arith.constant 0 : index
    %c0_107 = arith.constant 0 : index
    %216 = vector.load %arg1[%c13_105, %c0_106, %c0_107] : memref<25x32x256xf32, #tpu.memory_space<vmem>>, vector<1x32x256xf32>
    %217 = vector.shape_cast %216 : vector<1x32x256xf32> to vector<32x256xf32>
    %218 = arith.mulf %215, %217 : vector<32x256xf32>
    %219 = arith.addf %214, %218 : vector<32x256xf32>
    %c254_i32_108 = arith.constant 254 : i32
    %220 = tpu.dynamic_rotate %151 by %c254_i32_108 dim 1 : vector<32x256xf32>, i32 -> vector<32x256xf32>
    %c14_109 = arith.constant 14 : index
    %c0_110 = arith.constant 0 : index
    %c0_111 = arith.constant 0 : index
    %221 = vector.load %arg1[%c14_109, %c0_110, %c0_111] : memref<25x32x256xf32, #tpu.memory_space<vmem>>, vector<1x32x256xf32>
    %222 = vector.shape_cast %221 : vector<1x32x256xf32> to vector<32x256xf32>
    %223 = arith.mulf %220, %222 : vector<32x256xf32>
    %224 = arith.addf %219, %223 : vector<32x256xf32>
    %c242_i32_112 = arith.constant 242 : i32
    %225 = tpu.dynamic_rotate %151 by %c242_i32_112 dim 1 : vector<32x256xf32>, i32 -> vector<32x256xf32>
    %c15_113 = arith.constant 15 : index
    %c0_114 = arith.constant 0 : index
    %c0_115 = arith.constant 0 : index
    %226 = vector.load %arg1[%c15_113, %c0_114, %c0_115] : memref<25x32x256xf32, #tpu.memory_space<vmem>>, vector<1x32x256xf32>
    %227 = vector.shape_cast %226 : vector<1x32x256xf32> to vector<32x256xf32>
    %228 = arith.mulf %225, %227 : vector<32x256xf32>
    %229 = arith.addf %224, %228 : vector<32x256xf32>
    %c241_i32_116 = arith.constant 241 : i32
    %230 = tpu.dynamic_rotate %151 by %c241_i32_116 dim 1 : vector<32x256xf32>, i32 -> vector<32x256xf32>
    %c16_117 = arith.constant 16 : index
    %c0_118 = arith.constant 0 : index
    %c0_119 = arith.constant 0 : index
    %231 = vector.load %arg1[%c16_117, %c0_118, %c0_119] : memref<25x32x256xf32, #tpu.memory_space<vmem>>, vector<1x32x256xf32>
    %232 = vector.shape_cast %231 : vector<1x32x256xf32> to vector<32x256xf32>
    %233 = arith.mulf %230, %232 : vector<32x256xf32>
    %234 = arith.addf %229, %233 : vector<32x256xf32>
    %c240_i32_120 = arith.constant 240 : i32
    %235 = tpu.dynamic_rotate %151 by %c240_i32_120 dim 1 : vector<32x256xf32>, i32 -> vector<32x256xf32>
    %c17_121 = arith.constant 17 : index
    %c0_122 = arith.constant 0 : index
    %c0_123 = arith.constant 0 : index
    %236 = vector.load %arg1[%c17_121, %c0_122, %c0_123] : memref<25x32x256xf32, #tpu.memory_space<vmem>>, vector<1x32x256xf32>
    %237 = vector.shape_cast %236 : vector<1x32x256xf32> to vector<32x256xf32>
    %238 = arith.mulf %235, %237 : vector<32x256xf32>
    %239 = arith.addf %234, %238 : vector<32x256xf32>
    %c239_i32_124 = arith.constant 239 : i32
    %240 = tpu.dynamic_rotate %151 by %c239_i32_124 dim 1 : vector<32x256xf32>, i32 -> vector<32x256xf32>
    %c18_125 = arith.constant 18 : index
    %c0_126 = arith.constant 0 : index
    %c0_127 = arith.constant 0 : index
    %241 = vector.load %arg1[%c18_125, %c0_126, %c0_127] : memref<25x32x256xf32, #tpu.memory_space<vmem>>, vector<1x32x256xf32>
    %242 = vector.shape_cast %241 : vector<1x32x256xf32> to vector<32x256xf32>
    %243 = arith.mulf %240, %242 : vector<32x256xf32>
    %244 = arith.addf %239, %243 : vector<32x256xf32>
    %c238_i32_128 = arith.constant 238 : i32
    %245 = tpu.dynamic_rotate %151 by %c238_i32_128 dim 1 : vector<32x256xf32>, i32 -> vector<32x256xf32>
    %c19_129 = arith.constant 19 : index
    %c0_130 = arith.constant 0 : index
    %c0_131 = arith.constant 0 : index
    %246 = vector.load %arg1[%c19_129, %c0_130, %c0_131] : memref<25x32x256xf32, #tpu.memory_space<vmem>>, vector<1x32x256xf32>
    %247 = vector.shape_cast %246 : vector<1x32x256xf32> to vector<32x256xf32>
    %248 = arith.mulf %245, %247 : vector<32x256xf32>
    %249 = arith.addf %244, %248 : vector<32x256xf32>
    %c226_i32_132 = arith.constant 226 : i32
    %250 = tpu.dynamic_rotate %151 by %c226_i32_132 dim 1 : vector<32x256xf32>, i32 -> vector<32x256xf32>
    %c20_133 = arith.constant 20 : index
    %c0_134 = arith.constant 0 : index
    %c0_135 = arith.constant 0 : index
    %251 = vector.load %arg1[%c20_133, %c0_134, %c0_135] : memref<25x32x256xf32, #tpu.memory_space<vmem>>, vector<1x32x256xf32>
    %252 = vector.shape_cast %251 : vector<1x32x256xf32> to vector<32x256xf32>
    %253 = arith.mulf %250, %252 : vector<32x256xf32>
    %254 = arith.addf %249, %253 : vector<32x256xf32>
    %c225_i32_136 = arith.constant 225 : i32
    %255 = tpu.dynamic_rotate %151 by %c225_i32_136 dim 1 : vector<32x256xf32>, i32 -> vector<32x256xf32>
    %c21_137 = arith.constant 21 : index
    %c0_138 = arith.constant 0 : index
    %c0_139 = arith.constant 0 : index
    %256 = vector.load %arg1[%c21_137, %c0_138, %c0_139] : memref<25x32x256xf32, #tpu.memory_space<vmem>>, vector<1x32x256xf32>
    %257 = vector.shape_cast %256 : vector<1x32x256xf32> to vector<32x256xf32>
    %258 = arith.mulf %255, %257 : vector<32x256xf32>
    %259 = arith.addf %254, %258 : vector<32x256xf32>
    %c224_i32_140 = arith.constant 224 : i32
    %260 = tpu.dynamic_rotate %151 by %c224_i32_140 dim 1 : vector<32x256xf32>, i32 -> vector<32x256xf32>
    %c22_141 = arith.constant 22 : index
    %c0_142 = arith.constant 0 : index
    %c0_143 = arith.constant 0 : index
    %261 = vector.load %arg1[%c22_141, %c0_142, %c0_143] : memref<25x32x256xf32, #tpu.memory_space<vmem>>, vector<1x32x256xf32>
    %262 = vector.shape_cast %261 : vector<1x32x256xf32> to vector<32x256xf32>
    %263 = arith.mulf %260, %262 : vector<32x256xf32>
    %264 = arith.addf %259, %263 : vector<32x256xf32>
    %c223_i32_144 = arith.constant 223 : i32
    %265 = tpu.dynamic_rotate %151 by %c223_i32_144 dim 1 : vector<32x256xf32>, i32 -> vector<32x256xf32>
    %c23_145 = arith.constant 23 : index
    %c0_146 = arith.constant 0 : index
    %c0_147 = arith.constant 0 : index
    %266 = vector.load %arg1[%c23_145, %c0_146, %c0_147] : memref<25x32x256xf32, #tpu.memory_space<vmem>>, vector<1x32x256xf32>
    %267 = vector.shape_cast %266 : vector<1x32x256xf32> to vector<32x256xf32>
    %268 = arith.mulf %265, %267 : vector<32x256xf32>
    %269 = arith.addf %264, %268 : vector<32x256xf32>
    %c222_i32_148 = arith.constant 222 : i32
    %270 = tpu.dynamic_rotate %151 by %c222_i32_148 dim 1 : vector<32x256xf32>, i32 -> vector<32x256xf32>
    %c24_149 = arith.constant 24 : index
    %c0_150 = arith.constant 0 : index
    %c0_151 = arith.constant 0 : index
    %271 = vector.load %arg1[%c24_149, %c0_150, %c0_151] : memref<25x32x256xf32, #tpu.memory_space<vmem>>, vector<1x32x256xf32>
    %272 = vector.shape_cast %271 : vector<1x32x256xf32> to vector<32x256xf32>
    %273 = arith.mulf %270, %272 : vector<32x256xf32>
    %274 = arith.addf %269, %273 : vector<32x256xf32>
    %275 = vector.extract_strided_slice %274 {offsets = [0, 0], sizes = [8, 256], strides = [1, 1]} : vector<32x256xf32> to vector<8x256xf32>
    %276 = vector.extract_strided_slice %274 {offsets = [8, 0], sizes = [8, 256], strides = [1, 1]} : vector<32x256xf32> to vector<8x256xf32>
    %277 = arith.addf %275, %276 : vector<8x256xf32>
    %278 = vector.extract_strided_slice %274 {offsets = [16, 0], sizes = [8, 256], strides = [1, 1]} : vector<32x256xf32> to vector<8x256xf32>
    %279 = arith.addf %277, %278 : vector<8x256xf32>
    %280 = vector.extract_strided_slice %274 {offsets = [24, 0], sizes = [8, 256], strides = [1, 1]} : vector<32x256xf32> to vector<8x256xf32>
    %281 = arith.addf %279, %280 : vector<8x256xf32>
    %cst_152 = arith.constant 1.000000e-01 : f32
    %282 = vector.broadcast %cst_152 : f32 to vector<8x256xf32>
    %283 = arith.mulf %282, %281 : vector<8x256xf32>
    %284 = arith.maximumf %281, %283 : vector<8x256xf32>
    %c2_i32_153 = arith.constant 2 : i32
    %285 = vector.extract_strided_slice %284 {offsets = [0, 0], sizes = [2, 256], strides = [1, 1]} : vector<8x256xf32> to vector<2x256xf32>
    %286 = tpu.concatenate %285, %285, %285, %285 in 0 : vector<2x256xf32>, vector<2x256xf32>, vector<2x256xf32>, vector<2x256xf32> -> vector<8x256xf32>
    %287 = vector.extract_strided_slice %284 {offsets = [2, 0], sizes = [2, 256], strides = [1, 1]} : vector<8x256xf32> to vector<2x256xf32>
    %288 = tpu.concatenate %287, %287, %287, %287 in 0 : vector<2x256xf32>, vector<2x256xf32>, vector<2x256xf32>, vector<2x256xf32> -> vector<8x256xf32>
    %289 = vector.extract_strided_slice %284 {offsets = [4, 0], sizes = [2, 256], strides = [1, 1]} : vector<8x256xf32> to vector<2x256xf32>
    %290 = tpu.concatenate %289, %289, %289, %289 in 0 : vector<2x256xf32>, vector<2x256xf32>, vector<2x256xf32>, vector<2x256xf32> -> vector<8x256xf32>
    %291 = vector.extract_strided_slice %284 {offsets = [6, 0], sizes = [2, 256], strides = [1, 1]} : vector<8x256xf32> to vector<2x256xf32>
    %292 = tpu.concatenate %291, %291, %291, %291 in 0 : vector<2x256xf32>, vector<2x256xf32>, vector<2x256xf32>, vector<2x256xf32> -> vector<8x256xf32>
    %293 = tpu.concatenate %286, %288, %290, %292 in 0 : vector<8x256xf32>, vector<8x256xf32>, vector<8x256xf32>, vector<8x256xf32> -> vector<32x256xf32>
    %c34_i32_154 = arith.constant 34 : i32
    %294 = tpu.dynamic_rotate %293 by %c34_i32_154 dim 1 : vector<32x256xf32>, i32 -> vector<32x256xf32>
    %c0_155 = arith.constant 0 : index
    %c0_156 = arith.constant 0 : index
    %c0_157 = arith.constant 0 : index
    %295 = vector.load %arg1[%c0_155, %c0_156, %c0_157] : memref<25x32x256xf32, #tpu.memory_space<vmem>>, vector<1x32x256xf32>
    %296 = vector.shape_cast %295 : vector<1x32x256xf32> to vector<32x256xf32>
    %297 = arith.mulf %294, %296 : vector<32x256xf32>
    %c33_i32_158 = arith.constant 33 : i32
    %298 = tpu.dynamic_rotate %293 by %c33_i32_158 dim 1 : vector<32x256xf32>, i32 -> vector<32x256xf32>
    %c1_159 = arith.constant 1 : index
    %c0_160 = arith.constant 0 : index
    %c0_161 = arith.constant 0 : index
    %299 = vector.load %arg1[%c1_159, %c0_160, %c0_161] : memref<25x32x256xf32, #tpu.memory_space<vmem>>, vector<1x32x256xf32>
    %300 = vector.shape_cast %299 : vector<1x32x256xf32> to vector<32x256xf32>
    %301 = arith.mulf %298, %300 : vector<32x256xf32>
    %302 = arith.addf %297, %301 : vector<32x256xf32>
    %c32_i32_162 = arith.constant 32 : i32
    %303 = tpu.dynamic_rotate %293 by %c32_i32_162 dim 1 : vector<32x256xf32>, i32 -> vector<32x256xf32>
    %c2_163 = arith.constant 2 : index
    %c0_164 = arith.constant 0 : index
    %c0_165 = arith.constant 0 : index
    %304 = vector.load %arg1[%c2_163, %c0_164, %c0_165] : memref<25x32x256xf32, #tpu.memory_space<vmem>>, vector<1x32x256xf32>
    %305 = vector.shape_cast %304 : vector<1x32x256xf32> to vector<32x256xf32>
    %306 = arith.mulf %303, %305 : vector<32x256xf32>
    %307 = arith.addf %302, %306 : vector<32x256xf32>
    %c31_i32_166 = arith.constant 31 : i32
    %308 = tpu.dynamic_rotate %293 by %c31_i32_166 dim 1 : vector<32x256xf32>, i32 -> vector<32x256xf32>
    %c3_167 = arith.constant 3 : index
    %c0_168 = arith.constant 0 : index
    %c0_169 = arith.constant 0 : index
    %309 = vector.load %arg1[%c3_167, %c0_168, %c0_169] : memref<25x32x256xf32, #tpu.memory_space<vmem>>, vector<1x32x256xf32>
    %310 = vector.shape_cast %309 : vector<1x32x256xf32> to vector<32x256xf32>
    %311 = arith.mulf %308, %310 : vector<32x256xf32>
    %312 = arith.addf %307, %311 : vector<32x256xf32>
    %c30_i32_170 = arith.constant 30 : i32
    %313 = tpu.dynamic_rotate %293 by %c30_i32_170 dim 1 : vector<32x256xf32>, i32 -> vector<32x256xf32>
    %c4_171 = arith.constant 4 : index
    %c0_172 = arith.constant 0 : index
    %c0_173 = arith.constant 0 : index
    %314 = vector.load %arg1[%c4_171, %c0_172, %c0_173] : memref<25x32x256xf32, #tpu.memory_space<vmem>>, vector<1x32x256xf32>
    %315 = vector.shape_cast %314 : vector<1x32x256xf32> to vector<32x256xf32>
    %316 = arith.mulf %313, %315 : vector<32x256xf32>
    %317 = arith.addf %312, %316 : vector<32x256xf32>
    %c18_i32_174 = arith.constant 18 : i32
    %318 = tpu.dynamic_rotate %293 by %c18_i32_174 dim 1 : vector<32x256xf32>, i32 -> vector<32x256xf32>
    %c5_175 = arith.constant 5 : index
    %c0_176 = arith.constant 0 : index
    %c0_177 = arith.constant 0 : index
    %319 = vector.load %arg1[%c5_175, %c0_176, %c0_177] : memref<25x32x256xf32, #tpu.memory_space<vmem>>, vector<1x32x256xf32>
    %320 = vector.shape_cast %319 : vector<1x32x256xf32> to vector<32x256xf32>
    %321 = arith.mulf %318, %320 : vector<32x256xf32>
    %322 = arith.addf %317, %321 : vector<32x256xf32>
    %c17_i32_178 = arith.constant 17 : i32
    %323 = tpu.dynamic_rotate %293 by %c17_i32_178 dim 1 : vector<32x256xf32>, i32 -> vector<32x256xf32>
    %c6_179 = arith.constant 6 : index
    %c0_180 = arith.constant 0 : index
    %c0_181 = arith.constant 0 : index
    %324 = vector.load %arg1[%c6_179, %c0_180, %c0_181] : memref<25x32x256xf32, #tpu.memory_space<vmem>>, vector<1x32x256xf32>
    %325 = vector.shape_cast %324 : vector<1x32x256xf32> to vector<32x256xf32>
    %326 = arith.mulf %323, %325 : vector<32x256xf32>
    %327 = arith.addf %322, %326 : vector<32x256xf32>
    %c16_i32_182 = arith.constant 16 : i32
    %328 = tpu.dynamic_rotate %293 by %c16_i32_182 dim 1 : vector<32x256xf32>, i32 -> vector<32x256xf32>
    %c7_183 = arith.constant 7 : index
    %c0_184 = arith.constant 0 : index
    %c0_185 = arith.constant 0 : index
    %329 = vector.load %arg1[%c7_183, %c0_184, %c0_185] : memref<25x32x256xf32, #tpu.memory_space<vmem>>, vector<1x32x256xf32>
    %330 = vector.shape_cast %329 : vector<1x32x256xf32> to vector<32x256xf32>
    %331 = arith.mulf %328, %330 : vector<32x256xf32>
    %332 = arith.addf %327, %331 : vector<32x256xf32>
    %c15_i32_186 = arith.constant 15 : i32
    %333 = tpu.dynamic_rotate %293 by %c15_i32_186 dim 1 : vector<32x256xf32>, i32 -> vector<32x256xf32>
    %c8_187 = arith.constant 8 : index
    %c0_188 = arith.constant 0 : index
    %c0_189 = arith.constant 0 : index
    %334 = vector.load %arg1[%c8_187, %c0_188, %c0_189] : memref<25x32x256xf32, #tpu.memory_space<vmem>>, vector<1x32x256xf32>
    %335 = vector.shape_cast %334 : vector<1x32x256xf32> to vector<32x256xf32>
    %336 = arith.mulf %333, %335 : vector<32x256xf32>
    %337 = arith.addf %332, %336 : vector<32x256xf32>
    %c14_i32_190 = arith.constant 14 : i32
    %338 = tpu.dynamic_rotate %293 by %c14_i32_190 dim 1 : vector<32x256xf32>, i32 -> vector<32x256xf32>
    %c9_191 = arith.constant 9 : index
    %c0_192 = arith.constant 0 : index
    %c0_193 = arith.constant 0 : index
    %339 = vector.load %arg1[%c9_191, %c0_192, %c0_193] : memref<25x32x256xf32, #tpu.memory_space<vmem>>, vector<1x32x256xf32>
    %340 = vector.shape_cast %339 : vector<1x32x256xf32> to vector<32x256xf32>
    %341 = arith.mulf %338, %340 : vector<32x256xf32>
    %342 = arith.addf %337, %341 : vector<32x256xf32>
    %c2_i32_194 = arith.constant 2 : i32
    %343 = tpu.dynamic_rotate %293 by %c2_i32_194 dim 1 : vector<32x256xf32>, i32 -> vector<32x256xf32>
    %c10_195 = arith.constant 10 : index
    %c0_196 = arith.constant 0 : index
    %c0_197 = arith.constant 0 : index
    %344 = vector.load %arg1[%c10_195, %c0_196, %c0_197] : memref<25x32x256xf32, #tpu.memory_space<vmem>>, vector<1x32x256xf32>
    %345 = vector.shape_cast %344 : vector<1x32x256xf32> to vector<32x256xf32>
    %346 = arith.mulf %343, %345 : vector<32x256xf32>
    %347 = arith.addf %342, %346 : vector<32x256xf32>
    %c1_i32_198 = arith.constant 1 : i32
    %348 = tpu.dynamic_rotate %293 by %c1_i32_198 dim 1 : vector<32x256xf32>, i32 -> vector<32x256xf32>
    %c11_199 = arith.constant 11 : index
    %c0_200 = arith.constant 0 : index
    %c0_201 = arith.constant 0 : index
    %349 = vector.load %arg1[%c11_199, %c0_200, %c0_201] : memref<25x32x256xf32, #tpu.memory_space<vmem>>, vector<1x32x256xf32>
    %350 = vector.shape_cast %349 : vector<1x32x256xf32> to vector<32x256xf32>
    %351 = arith.mulf %348, %350 : vector<32x256xf32>
    %352 = arith.addf %347, %351 : vector<32x256xf32>
    %c12_202 = arith.constant 12 : index
    %c0_203 = arith.constant 0 : index
    %c0_204 = arith.constant 0 : index
    %353 = vector.load %arg1[%c12_202, %c0_203, %c0_204] : memref<25x32x256xf32, #tpu.memory_space<vmem>>, vector<1x32x256xf32>
    %354 = vector.shape_cast %353 : vector<1x32x256xf32> to vector<32x256xf32>
    %355 = arith.mulf %293, %354 : vector<32x256xf32>
    %356 = arith.addf %352, %355 : vector<32x256xf32>
    %c255_i32_205 = arith.constant 255 : i32
    %357 = tpu.dynamic_rotate %293 by %c255_i32_205 dim 1 : vector<32x256xf32>, i32 -> vector<32x256xf32>
    %c13_206 = arith.constant 13 : index
    %c0_207 = arith.constant 0 : index
    %c0_208 = arith.constant 0 : index
    %358 = vector.load %arg1[%c13_206, %c0_207, %c0_208] : memref<25x32x256xf32, #tpu.memory_space<vmem>>, vector<1x32x256xf32>
    %359 = vector.shape_cast %358 : vector<1x32x256xf32> to vector<32x256xf32>
    %360 = arith.mulf %357, %359 : vector<32x256xf32>
    %361 = arith.addf %356, %360 : vector<32x256xf32>
    %c254_i32_209 = arith.constant 254 : i32
    %362 = tpu.dynamic_rotate %293 by %c254_i32_209 dim 1 : vector<32x256xf32>, i32 -> vector<32x256xf32>
    %c14_210 = arith.constant 14 : index
    %c0_211 = arith.constant 0 : index
    %c0_212 = arith.constant 0 : index
    %363 = vector.load %arg1[%c14_210, %c0_211, %c0_212] : memref<25x32x256xf32, #tpu.memory_space<vmem>>, vector<1x32x256xf32>
    %364 = vector.shape_cast %363 : vector<1x32x256xf32> to vector<32x256xf32>
    %365 = arith.mulf %362, %364 : vector<32x256xf32>
    %366 = arith.addf %361, %365 : vector<32x256xf32>
    %c242_i32_213 = arith.constant 242 : i32
    %367 = tpu.dynamic_rotate %293 by %c242_i32_213 dim 1 : vector<32x256xf32>, i32 -> vector<32x256xf32>
    %c15_214 = arith.constant 15 : index
    %c0_215 = arith.constant 0 : index
    %c0_216 = arith.constant 0 : index
    %368 = vector.load %arg1[%c15_214, %c0_215, %c0_216] : memref<25x32x256xf32, #tpu.memory_space<vmem>>, vector<1x32x256xf32>
    %369 = vector.shape_cast %368 : vector<1x32x256xf32> to vector<32x256xf32>
    %370 = arith.mulf %367, %369 : vector<32x256xf32>
    %371 = arith.addf %366, %370 : vector<32x256xf32>
    %c241_i32_217 = arith.constant 241 : i32
    %372 = tpu.dynamic_rotate %293 by %c241_i32_217 dim 1 : vector<32x256xf32>, i32 -> vector<32x256xf32>
    %c16_218 = arith.constant 16 : index
    %c0_219 = arith.constant 0 : index
    %c0_220 = arith.constant 0 : index
    %373 = vector.load %arg1[%c16_218, %c0_219, %c0_220] : memref<25x32x256xf32, #tpu.memory_space<vmem>>, vector<1x32x256xf32>
    %374 = vector.shape_cast %373 : vector<1x32x256xf32> to vector<32x256xf32>
    %375 = arith.mulf %372, %374 : vector<32x256xf32>
    %376 = arith.addf %371, %375 : vector<32x256xf32>
    %c240_i32_221 = arith.constant 240 : i32
    %377 = tpu.dynamic_rotate %293 by %c240_i32_221 dim 1 : vector<32x256xf32>, i32 -> vector<32x256xf32>
    %c17_222 = arith.constant 17 : index
    %c0_223 = arith.constant 0 : index
    %c0_224 = arith.constant 0 : index
    %378 = vector.load %arg1[%c17_222, %c0_223, %c0_224] : memref<25x32x256xf32, #tpu.memory_space<vmem>>, vector<1x32x256xf32>
    %379 = vector.shape_cast %378 : vector<1x32x256xf32> to vector<32x256xf32>
    %380 = arith.mulf %377, %379 : vector<32x256xf32>
    %381 = arith.addf %376, %380 : vector<32x256xf32>
    %c239_i32_225 = arith.constant 239 : i32
    %382 = tpu.dynamic_rotate %293 by %c239_i32_225 dim 1 : vector<32x256xf32>, i32 -> vector<32x256xf32>
    %c18_226 = arith.constant 18 : index
    %c0_227 = arith.constant 0 : index
    %c0_228 = arith.constant 0 : index
    %383 = vector.load %arg1[%c18_226, %c0_227, %c0_228] : memref<25x32x256xf32, #tpu.memory_space<vmem>>, vector<1x32x256xf32>
    %384 = vector.shape_cast %383 : vector<1x32x256xf32> to vector<32x256xf32>
    %385 = arith.mulf %382, %384 : vector<32x256xf32>
    %386 = arith.addf %381, %385 : vector<32x256xf32>
    %c238_i32_229 = arith.constant 238 : i32
    %387 = tpu.dynamic_rotate %293 by %c238_i32_229 dim 1 : vector<32x256xf32>, i32 -> vector<32x256xf32>
    %c19_230 = arith.constant 19 : index
    %c0_231 = arith.constant 0 : index
    %c0_232 = arith.constant 0 : index
    %388 = vector.load %arg1[%c19_230, %c0_231, %c0_232] : memref<25x32x256xf32, #tpu.memory_space<vmem>>, vector<1x32x256xf32>
    %389 = vector.shape_cast %388 : vector<1x32x256xf32> to vector<32x256xf32>
    %390 = arith.mulf %387, %389 : vector<32x256xf32>
    %391 = arith.addf %386, %390 : vector<32x256xf32>
    %c226_i32_233 = arith.constant 226 : i32
    %392 = tpu.dynamic_rotate %293 by %c226_i32_233 dim 1 : vector<32x256xf32>, i32 -> vector<32x256xf32>
    %c20_234 = arith.constant 20 : index
    %c0_235 = arith.constant 0 : index
    %c0_236 = arith.constant 0 : index
    %393 = vector.load %arg1[%c20_234, %c0_235, %c0_236] : memref<25x32x256xf32, #tpu.memory_space<vmem>>, vector<1x32x256xf32>
    %394 = vector.shape_cast %393 : vector<1x32x256xf32> to vector<32x256xf32>
    %395 = arith.mulf %392, %394 : vector<32x256xf32>
    %396 = arith.addf %391, %395 : vector<32x256xf32>
    %c225_i32_237 = arith.constant 225 : i32
    %397 = tpu.dynamic_rotate %293 by %c225_i32_237 dim 1 : vector<32x256xf32>, i32 -> vector<32x256xf32>
    %c21_238 = arith.constant 21 : index
    %c0_239 = arith.constant 0 : index
    %c0_240 = arith.constant 0 : index
    %398 = vector.load %arg1[%c21_238, %c0_239, %c0_240] : memref<25x32x256xf32, #tpu.memory_space<vmem>>, vector<1x32x256xf32>
    %399 = vector.shape_cast %398 : vector<1x32x256xf32> to vector<32x256xf32>
    %400 = arith.mulf %397, %399 : vector<32x256xf32>
    %401 = arith.addf %396, %400 : vector<32x256xf32>
    %c224_i32_241 = arith.constant 224 : i32
    %402 = tpu.dynamic_rotate %293 by %c224_i32_241 dim 1 : vector<32x256xf32>, i32 -> vector<32x256xf32>
    %c22_242 = arith.constant 22 : index
    %c0_243 = arith.constant 0 : index
    %c0_244 = arith.constant 0 : index
    %403 = vector.load %arg1[%c22_242, %c0_243, %c0_244] : memref<25x32x256xf32, #tpu.memory_space<vmem>>, vector<1x32x256xf32>
    %404 = vector.shape_cast %403 : vector<1x32x256xf32> to vector<32x256xf32>
    %405 = arith.mulf %402, %404 : vector<32x256xf32>
    %406 = arith.addf %401, %405 : vector<32x256xf32>
    %c223_i32_245 = arith.constant 223 : i32
    %407 = tpu.dynamic_rotate %293 by %c223_i32_245 dim 1 : vector<32x256xf32>, i32 -> vector<32x256xf32>
    %c23_246 = arith.constant 23 : index
    %c0_247 = arith.constant 0 : index
    %c0_248 = arith.constant 0 : index
    %408 = vector.load %arg1[%c23_246, %c0_247, %c0_248] : memref<25x32x256xf32, #tpu.memory_space<vmem>>, vector<1x32x256xf32>
    %409 = vector.shape_cast %408 : vector<1x32x256xf32> to vector<32x256xf32>
    %410 = arith.mulf %407, %409 : vector<32x256xf32>
    %411 = arith.addf %406, %410 : vector<32x256xf32>
    %c222_i32_249 = arith.constant 222 : i32
    %412 = tpu.dynamic_rotate %293 by %c222_i32_249 dim 1 : vector<32x256xf32>, i32 -> vector<32x256xf32>
    %c24_250 = arith.constant 24 : index
    %c0_251 = arith.constant 0 : index
    %c0_252 = arith.constant 0 : index
    %413 = vector.load %arg1[%c24_250, %c0_251, %c0_252] : memref<25x32x256xf32, #tpu.memory_space<vmem>>, vector<1x32x256xf32>
    %414 = vector.shape_cast %413 : vector<1x32x256xf32> to vector<32x256xf32>
    %415 = arith.mulf %412, %414 : vector<32x256xf32>
    %416 = arith.addf %411, %415 : vector<32x256xf32>
    %417 = vector.extract_strided_slice %416 {offsets = [0, 0], sizes = [8, 256], strides = [1, 1]} : vector<32x256xf32> to vector<8x256xf32>
    %418 = vector.extract_strided_slice %416 {offsets = [8, 0], sizes = [8, 256], strides = [1, 1]} : vector<32x256xf32> to vector<8x256xf32>
    %419 = arith.addf %417, %418 : vector<8x256xf32>
    %420 = vector.extract_strided_slice %416 {offsets = [16, 0], sizes = [8, 256], strides = [1, 1]} : vector<32x256xf32> to vector<8x256xf32>
    %421 = arith.addf %419, %420 : vector<8x256xf32>
    %422 = vector.extract_strided_slice %416 {offsets = [24, 0], sizes = [8, 256], strides = [1, 1]} : vector<32x256xf32> to vector<8x256xf32>
    %423 = arith.addf %421, %422 : vector<8x256xf32>
    %cst_253 = arith.constant 1.000000e-01 : f32
    %424 = vector.broadcast %cst_253 : f32 to vector<8x256xf32>
    %425 = arith.mulf %424, %423 : vector<8x256xf32>
    %426 = arith.maximumf %423, %425 : vector<8x256xf32>
    %427 = vector.extract_strided_slice %426 {offsets = [0, 0], sizes = [2, 256], strides = [1, 1]} : vector<8x256xf32> to vector<2x256xf32>
    %428 = vector.extract_strided_slice %426 {offsets = [2, 0], sizes = [2, 256], strides = [1, 1]} : vector<8x256xf32> to vector<2x256xf32>
    %429 = arith.addf %427, %428 : vector<2x256xf32>
    %430 = vector.extract_strided_slice %426 {offsets = [4, 0], sizes = [2, 256], strides = [1, 1]} : vector<8x256xf32> to vector<2x256xf32>
    %431 = arith.addf %429, %430 : vector<2x256xf32>
    %432 = vector.extract_strided_slice %426 {offsets = [6, 0], sizes = [2, 256], strides = [1, 1]} : vector<8x256xf32> to vector<2x256xf32>
    %433 = arith.addf %431, %432 : vector<2x256xf32>
    %cst_254 = arith.constant 2.500000e-01 : f32
    %434 = vector.broadcast %cst_254 : f32 to vector<2x256xf32>
    %435 = arith.mulf %433, %434 : vector<2x256xf32>
    %c0_255 = arith.constant 0 : index
    %c0_256 = arith.constant 0 : index
    %436 = vector.load %arg2[%c0_255, %c0_256] : memref<2x256xf32, #tpu.memory_space<vmem>>, vector<2x256xf32>
    tpu.vector_store %arg2[%c0_255, %c0_256], %435 {strides = array<i32>} : memref<2x256xf32, #tpu.memory_space<vmem>>, vector<2x256xf32>,
    return
  }
}

</mosaic_0001>

<llo_original>
// kernel: reservoir_forward.1
$region0: #{reservoir_forward.1}
  #allocation0 [shape = 'u32[]', space=smem, size = 0x4, offset = 0x4, fixed_abs, tag = 'smem constant byte address 0x4 - core index']
  #allocation1 [shape = 'u32[144,128]{1,0:T(1,128)}', space=vmem, size = 0x12000, scoped, tag = 'internal scratch']
  %s0 = inlined_call_operand.vmem [shape: f32[8,256], index: 0, kind: input, shape index: {}]
  %s1 = inlined_call_operand.vmem [shape: f32[25,32,256], index: 1, kind: input, shape index: {}]
  %s2 = inlined_call_operand.hbm [shape: f32[2,256], index: 2, kind: output, shape index: {}]
  %s3 = sld [smem:[#allocation0]]
  $region18: #{reservoir_forward.1} parent=0
    _
  %s5 = ssub.s32 1, %s3
  %s6 = scalar_select 0, %s5, %s3
  $region1: #{reservoir_forward.1} parent=0
    #allocation2 [shape = 'u8[2048]{0}', space=vmem, size = 0x800, scoped, tag = 'output window, operand 0, single buffered']
    #allocation3 [shape = 's32[1]{0}', space=sflag, size = 0x4, scoped, tag = 'scoped memory for reservoir_forward.1']
    %7 = vsyncpa [#allocation3], 0
    // Predicated region
    $region2: #{reservoir_forward.1} parent=1 // pred_check
      _
    $region3: #{reservoir_forward.1} parent=1 // pred_check_branch
      %9 = sbr.rel (0) target = $region5
    $region4: #{reservoir_forward.1} parent=1 // pred_region
      _
    $region5: #{reservoir_forward.1} parent=1 // pred_fallthru
      _
    // Predicated region
    $region6: #{reservoir_forward.1} parent=1 // pred_check
      _
    $region7: #{reservoir_forward.1} parent=1 // pred_check_branch
      %11 = sbr.rel (0) target = $region9
    $region8: #{reservoir_forward.1} parent=1 // pred_region
      _
    $region9: #{reservoir_forward.1} parent=1 // pred_fallthru
      _
    %v12 = vld [vmem:[%s0] sm:$0xff]
    %v13 = vld [vmem:[%s0 + $0x8] sm:$0xff]
    %v16 = vrot.slane %v12, 6
    %v17 = vrot.slane %v13, 6
    %v20 = vrot.slane %v12, 4
    %v21 = vrot.slane %v13, 4
    %v24 = vrot.slane %v12, 2
    %v25 = vrot.slane %v13, 2
    %vm28 = vcmask 1041408
    %v29 = vsel %vm28, %v12, %v16
    %v30 = vsel %vm28, %v13, %v17
    %vm31 = vcmask 1043456
    %v32 = vsel %vm31, %v29, %v20
    %v33 = vsel %vm31, %v30, %v21
    %vm34 = vcmask 1045504
    %v35 = vsel %vm34, %v32, %v24
    %v36 = vsel %vm34, %v33, %v25
    %v37 = vsel %vm28, %v24, %v12
    %v38 = vsel %vm28, %v25, %v13
    %v39 = vsel %vm31, %v37, %v16
    %v40 = vsel %vm31, %v38, %v17
    %v41 = vsel %vm34, %v39, %v20
    %v42 = vsel %vm34, %v40, %v21
    %v43 = vsel %vm28, %v20, %v24
    %v44 = vsel %vm28, %v21, %v25
    %v45 = vsel %vm31, %v43, %v12
    %v46 = vsel %vm31, %v44, %v13
    %v47 = vsel %vm34, %v45, %v16
    %v48 = vsel %vm34, %v46, %v17
    %v49 = vsel %vm28, %v16, %v20
    %v50 = vsel %vm28, %v17, %v21
    %v51 = vsel %vm31, %v49, %v24
    %v52 = vsel %vm31, %v50, %v25
    %v53 = vsel %vm34, %v51, %v12
    %v54 = vsel %vm34, %v52, %v13
    %55 = vrot.lane.b32.xlu0 %v35, 34
    %v56 = vpop.permute.xlu0 %55
    %57 = vrot.lane.b32.xlu0 %v41, 34
    %v58 = vpop.permute.xlu0 %57
    %59 = vrot.lane.b32.xlu0 %v47, 34
    %v60 = vpop.permute.xlu0 %59
    %61 = vrot.lane.b32.xlu0 %v53, 34
    %v62 = vpop.permute.xlu0 %61
    %63 = vrot.lane.b32.xlu0 %v36, 34
    %v64 = vpop.permute.xlu0 %63
    %65 = vrot.lane.b32.xlu0 %v42, 34
    %v66 = vpop.permute.xlu0 %65
    %67 = vrot.lane.b32.xlu0 %v48, 34
    %v68 = vpop.permute.xlu0 %67
    %69 = vrot.lane.b32.xlu0 %v54, 34
    %v70 = vpop.permute.xlu0 %69
    %v71 = vlaneseq
    %v72 = vand.u32 %v71, 127
    %vm73 = vcmp.lt.s32.totalorder %v72, 34
    %v74 = vsel %vm73, %v56, %v64
    %v75 = vsel %vm73, %v58, %v66
    %v76 = vsel %vm73, %v60, %v68
    %v77 = vsel %vm73, %v62, %v70
    %v78 = vsel %vm73, %v64, %v56
    %v79 = vsel %vm73, %v66, %v58
    %v80 = vsel %vm73, %v68, %v60
    %v81 = vsel %vm73, %v70, %v62
    %v82 = vld [vmem:[%s1] sm:$0xff]
    %v83 = vld [vmem:[%s1 + $0x8] sm:$0xff]
    %v84 = vld [vmem:[%s1 + $0x10] sm:$0xff]
    %v85 = vld [vmem:[%s1 + $0x18] sm:$0xff]
    %v86 = vld [vmem:[%s1 + $0x20] sm:$0xff]
    %v87 = vld [vmem:[%s1 + $0x28] sm:$0xff]
    %v88 = vld [vmem:[%s1 + $0x30] sm:$0xff]
    %v89 = vld [vmem:[%s1 + $0x38] sm:$0xff]
    %v90 = vmul.f32 %v78, %v82
    %v91 = vmul.f32 %v74, %v83
    %v92 = vmul.f32 %v79, %v84
    %v93 = vmul.f32 %v75, %v85
    %v94 = vmul.f32 %v80, %v86
    %v95 = vmul.f32 %v76, %v87
    %v96 = vmul.f32 %v81, %v88
    %v97 = vmul.f32 %v77, %v89
    %98 = vrot.lane.b32.xlu0 %v35, 33
    %v99 = vpop.permute.xlu0 %98
    %100 = vrot.lane.b32.xlu0 %v41, 33
    %v101 = vpop.permute.xlu0 %100
    %102 = vrot.lane.b32.xlu0 %v47, 33
    %v103 = vpop.permute.xlu0 %102
    %104 = vrot.lane.b32.xlu0 %v53, 33
    %v105 = vpop.permute.xlu0 %104
    %106 = vrot.lane.b32.xlu0 %v36, 33
    %v107 = vpop.permute.xlu0 %106
    %108 = vrot.lane.b32.xlu0 %v42, 33
    %v109 = vpop.permute.xlu0 %108
    %110 = vrot.lane.b32.xlu0 %v48, 33
    %v111 = vpop.permute.xlu0 %110
    %112 = vrot.lane.b32.xlu0 %v54, 33
    %v113 = vpop.permute.xlu0 %112
    %vm114 = vcmp.lt.s32.totalorder %v72, 33
    %v115 = vsel %vm114, %v99, %v107
    %v116 = vsel %vm114, %v101, %v109
    %v117 = vsel %vm114, %v103, %v111
    %v118 = vsel %vm114, %v105, %v113
    %v119 = vsel %vm114, %v107, %v99
    %v120 = vsel %vm114, %v109, %v101
    %v121 = vsel %vm114, %v111, %v103
    %v122 = vsel %vm114, %v113, %v105
    %s123 = scalar_lea.vmem %s1, 64
    %v124 = vld [vmem:[%s123] sm:$0xff]
    %v125 = vld [vmem:[%s123 + $0x8] sm:$0xff]
    %v126 = vld [vmem:[%s123 + $0x10] sm:$0xff]
    %v127 = vld [vmem:[%s123 + $0x18] sm:$0xff]
    %v128 = vld [vmem:[%s123 + $0x20] sm:$0xff]
    %v129 = vld [vmem:[%s123 + $0x28] sm:$0xff]
    %v130 = vld [vmem:[%s123 + $0x30] sm:$0xff]
    %v131 = vld [vmem:[%s123 + $0x38] sm:$0xff]
    %v132 = vmul.f32 %v119, %v124
    %v133 = vmul.f32 %v115, %v125
    %v134 = vmul.f32 %v120, %v126
    %v135 = vmul.f32 %v116, %v127
    %v136 = vmul.f32 %v121, %v128
    %v137 = vmul.f32 %v117, %v129
    %v138 = vmul.f32 %v122, %v130
    %v139 = vmul.f32 %v118, %v131
    %v140 = vadd.f32 %v90, %v132
    %v141 = vadd.f32 %v91, %v133
    %v142 = vadd.f32 %v92, %v134
    %v143 = vadd.f32 %v93, %v135
    %v144 = vadd.f32 %v94, %v136
    %v145 = vadd.f32 %v95, %v137
    %v146 = vadd.f32 %v96, %v138
    %v147 = vadd.f32 %v97, %v139
    %148 = vrot.lane.b32.xlu0 %v35, 32
    %v149 = vpop.permute.xlu0 %148
    %150 = vrot.lane.b32.xlu0 %v41, 32
    %v151 = vpop.permute.xlu0 %150
    %152 = vrot.lane.b32.xlu0 %v47, 32
    %v153 = vpop.permute.xlu0 %152
    %154 = vrot.lane.b32.xlu0 %v53, 32
    %v155 = vpop.permute.xlu0 %154
    %156 = vrot.lane.b32.xlu0 %v36, 32
    %v157 = vpop.permute.xlu0 %156
    %158 = vrot.lane.b32.xlu0 %v42, 32
    %v159 = vpop.permute.xlu0 %158
    %160 = vrot.lane.b32.xlu0 %v48, 32
    %v161 = vpop.permute.xlu0 %160
    %162 = vrot.lane.b32.xlu0 %v54, 32
    %v163 = vpop.permute.xlu0 %162
    %vm164 = vcmp.lt.s32.totalorder %v72, 32
    %v165 = vsel %vm164, %v149, %v157
    %v166 = vsel %vm164, %v151, %v159
    %v167 = vsel %vm164, %v153, %v161
    %v168 = vsel %vm164, %v155, %v163
    %v169 = vsel %vm164, %v157, %v149
    %v170 = vsel %vm164, %v159, %v151
    %v171 = vsel %vm164, %v161, %v153
    %v172 = vsel %vm164, %v163, %v155
    %s173 = scalar_lea.vmem %s1, 128
    %v174 = vld [vmem:[%s173] sm:$0xff]
    %v175 = vld [vmem:[%s173 + $0x8] sm:$0xff]
    %v176 = vld [vmem:[%s173 + $0x10] sm:$0xff]
    %v177 = vld [vmem:[%s173 + $0x18] sm:$0xff]
    %v178 = vld [vmem:[%s173 + $0x20] sm:$0xff]
    %v179 = vld [vmem:[%s173 + $0x28] sm:$0xff]
    %v180 = vld [vmem:[%s173 + $0x30] sm:$0xff]
    %v181 = vld [vmem:[%s173 + $0x38] sm:$0xff]
    %v182 = vmul.f32 %v169, %v174
    %v183 = vmul.f32 %v165, %v175
    %v184 = vmul.f32 %v170, %v176
    %v185 = vmul.f32 %v166, %v177
    %v186 = vmul.f32 %v171, %v178
    %v187 = vmul.f32 %v167, %v179
    %v188 = vmul.f32 %v172, %v180
    %v189 = vmul.f32 %v168, %v181
    %v190 = vadd.f32 %v140, %v182
    %v191 = vadd.f32 %v141, %v183
    %v192 = vadd.f32 %v142, %v184
    %v193 = vadd.f32 %v143, %v185
    %v194 = vadd.f32 %v144, %v186
    %v195 = vadd.f32 %v145, %v187
    %v196 = vadd.f32 %v146, %v188
    %v197 = vadd.f32 %v147, %v189
    %198 = vrot.lane.b32.xlu0 %v35, 31
    %v199 = vpop.permute.xlu0 %198
    %200 = vrot.lane.b32.xlu0 %v41, 31
    %v201 = vpop.permute.xlu0 %200
    %202 = vrot.lane.b32.xlu0 %v47, 31
    %v203 = vpop.permute.xlu0 %202
    %204 = vrot.lane.b32.xlu0 %v53, 31
    %v205 = vpop.permute.xlu0 %204
    %206 = vrot.lane.b32.xlu0 %v36, 31
    %v207 = vpop.permute.xlu0 %206
    %208 = vrot.lane.b32.xlu0 %v42, 31
    %v209 = vpop.permute.xlu0 %208
    %210 = vrot.lane.b32.xlu0 %v48, 31
    %v211 = vpop.permute.xlu0 %210
    %212 = vrot.lane.b32.xlu0 %v54, 31
    %v213 = vpop.permute.xlu0 %212
    %vm214 = vcmp.lt.s32.totalorder %v72, 31
    %v215 = vsel %vm214, %v199, %v207
    %v216 = vsel %vm214, %v201, %v209
    %v217 = vsel %vm214, %v203, %v211
    %v218 = vsel %vm214, %v205, %v213
    %v219 = vsel %vm214, %v207, %v199
    %v220 = vsel %vm214, %v209, %v201
    %v221 = vsel %vm214, %v211, %v203
    %v222 = vsel %vm214, %v213, %v205
    %s223 = scalar_lea.vmem %s1, 192
    %v224 = vld [vmem:[%s223] sm:$0xff]
    %v225 = vld [vmem:[%s223 + $0x8] sm:$0xff]
    %v226 = vld [vmem:[%s223 + $0x10] sm:$0xff]
    %v227 = vld [vmem:[%s223 + $0x18] sm:$0xff]
    %v228 = vld [vmem:[%s223 + $0x20] sm:$0xff]
    %v229 = vld [vmem:[%s223 + $0x28] sm:$0xff]
    %v230 = vld [vmem:[%s223 + $0x30] sm:$0xff]
    %v231 = vld [vmem:[%s223 + $0x38] sm:$0xff]
    %v232 = vmul.f32 %v219, %v224
    %v233 = vmul.f32 %v215, %v225
    %v234 = vmul.f32 %v220, %v226
    %v235 = vmul.f32 %v216, %v227
    %v236 = vmul.f32 %v221, %v228
    %v237 = vmul.f32 %v217, %v229
    %v238 = vmul.f32 %v222, %v230
    %v239 = vmul.f32 %v218, %v231
    %v240 = vadd.f32 %v190, %v232
    %v241 = vadd.f32 %v191, %v233
    %v242 = vadd.f32 %v192, %v234
    %v243 = vadd.f32 %v193, %v235
    %v244 = vadd.f32 %v194, %v236
    %v245 = vadd.f32 %v195, %v237
    %v246 = vadd.f32 %v196, %v238
    %v247 = vadd.f32 %v197, %v239
    %248 = vrot.lane.b32.xlu0 %v35, 30
    %v249 = vpop.permute.xlu0 %248
    %250 = vrot.lane.b32.xlu0 %v41, 30
    %v251 = vpop.permute.xlu0 %250
    %252 = vrot.lane.b32.xlu0 %v47, 30
    %v253 = vpop.permute.xlu0 %252
    %254 = vrot.lane.b32.xlu0 %v53, 30
    %v255 = vpop.permute.xlu0 %254
    %256 = vrot.lane.b32.xlu0 %v36, 30
    %v257 = vpop.permute.xlu0 %256
    %258 = vrot.lane.b32.xlu0 %v42, 30
    %v259 = vpop.permute.xlu0 %258
    %260 = vrot.lane.b32.xlu0 %v48, 30
    %v261 = vpop.permute.xlu0 %260
    %262 = vrot.lane.b32.xlu0 %v54, 30
    %v263 = vpop.permute.xlu0 %262
    %vm264 = vcmp.lt.s32.totalorder %v72, 30
    %v265 = vsel %vm264, %v249, %v257
    %v266 = vsel %vm264, %v251, %v259
    %v267 = vsel %vm264, %v253, %v261
    %v268 = vsel %vm264, %v255, %v263
    %v269 = vsel %vm264, %v257, %v249
    %v270 = vsel %vm264, %v259, %v251
    %v271 = vsel %vm264, %v261, %v253
    %v272 = vsel %vm264, %v263, %v255
    %s273 = scalar_lea.vmem %s1, 256
    %v274 = vld [vmem:[%s273] sm:$0xff]
    %v275 = vld [vmem:[%s273 + $0x8] sm:$0xff]
    %v276 = vld [vmem:[%s273 + $0x10] sm:$0xff]
    %v277 = vld [vmem:[%s273 + $0x18] sm:$0xff]
    %v278 = vld [vmem:[%s273 + $0x20] sm:$0xff]
    %v279 = vld [vmem:[%s273 + $0x28] sm:$0xff]
    %v280 = vld [vmem:[%s273 + $0x30] sm:$0xff]
    %v281 = vld [vmem:[%s273 + $0x38] sm:$0xff]
    %v282 = vmul.f32 %v269, %v274
    %v283 = vmul.f32 %v265, %v275
    %v284 = vmul.f32 %v270, %v276
    %v285 = vmul.f32 %v266, %v277
    %v286 = vmul.f32 %v271, %v278
    %v287 = vmul.f32 %v267, %v279
    %v288 = vmul.f32 %v272, %v280
    %v289 = vmul.f32 %v268, %v281
    %v290 = vadd.f32 %v240, %v282
    %v291 = vadd.f32 %v241, %v283
    %v292 = vadd.f32 %v242, %v284
    %v293 = vadd.f32 %v243, %v285
    %v294 = vadd.f32 %v244, %v286
    %v295 = vadd.f32 %v245, %v287
    %v296 = vadd.f32 %v246, %v288
    %v297 = vadd.f32 %v247, %v289
    %298 = vrot.lane.b32.xlu0 %v35, 18
    %v299 = vpop.permute.xlu0 %298
    %300 = vrot.lane.b32.xlu0 %v41, 18
    %v301 = vpop.permute.xlu0 %300
    %302 = vrot.lane.b32.xlu0 %v47, 18
    %v303 = vpop.permute.xlu0 %302
    %304 = vrot.lane.b32.xlu0 %v53, 18
    %v305 = vpop.permute.xlu0 %304
    %306 = vrot.lane.b32.xlu0 %v36, 18
    %v307 = vpop.permute.xlu0 %306
    %308 = vrot.lane.b32.xlu0 %v42, 18
    %v309 = vpop.permute.xlu0 %308
    %310 = vrot.lane.b32.xlu0 %v48, 18
    %v311 = vpop.permute.xlu0 %310
    %312 = vrot.lane.b32.xlu0 %v54, 18
    %v313 = vpop.permute.xlu0 %312
    %vm314 = vcmp.lt.s32.totalorder %v72, 18
    %v315 = vsel %vm314, %v299, %v307
    %v316 = vsel %vm314, %v301, %v309
    %v317 = vsel %vm314, %v303, %v311
    %v318 = vsel %vm314, %v305, %v313
    %v319 = vsel %vm314, %v307, %v299
    %v320 = vsel %vm314, %v309, %v301
    %v321 = vsel %vm314, %v311, %v303
    %v322 = vsel %vm314, %v313, %v305
    %s323 = scalar_lea.vmem %s1, 320
    %v324 = vld [vmem:[%s323] sm:$0xff]
    %v325 = vld [vmem:[%s323 + $0x8] sm:$0xff]
    %v326 = vld [vmem:[%s323 + $0x10] sm:$0xff]
    %v327 = vld [vmem:[%s323 + $0x18] sm:$0xff]
    %v328 = vld [vmem:[%s323 + $0x20] sm:$0xff]
    %v329 = vld [vmem:[%s323 + $0x28] sm:$0xff]
    %v330 = vld [vmem:[%s323 + $0x30] sm:$0xff]
    %v331 = vld [vmem:[%s323 + $0x38] sm:$0xff]
    %v332 = vmul.f32 %v319, %v324
    %v333 = vmul.f32 %v315, %v325
    %v334 = vmul.f32 %v320, %v326
    %v335 = vmul.f32 %v316, %v327
    %v336 = vmul.f32 %v321, %v328
    %v337 = vmul.f32 %v317, %v329
    %v338 = vmul.f32 %v322, %v330
    %v339 = vmul.f32 %v318, %v331
    %v340 = vadd.f32 %v290, %v332
    %v341 = vadd.f32 %v291, %v333
    %v342 = vadd.f32 %v292, %v334
    %v343 = vadd.f32 %v293, %v335
    %v344 = vadd.f32 %v294, %v336
    %v345 = vadd.f32 %v295, %v337
    %v346 = vadd.f32 %v296, %v338
    %v347 = vadd.f32 %v297, %v339
    %348 = vrot.lane.b32.xlu0 %v35, 17
    %v349 = vpop.permute.xlu0 %348
    %350 = vrot.lane.b32.xlu0 %v41, 17
    %v351 = vpop.permute.xlu0 %350
    %352 = vrot.lane.b32.xlu0 %v47, 17
    %v353 = vpop.permute.xlu0 %352
    %354 = vrot.lane.b32.xlu0 %v53, 17
    %v355 = vpop.permute.xlu0 %354
    %356 = vrot.lane.b32.xlu0 %v36, 17
    %v357 = vpop.permute.xlu0 %356
    %358 = vrot.lane.b32.xlu0 %v42, 17
    %v359 = vpop.permute.xlu0 %358
    %360 = vrot.lane.b32.xlu0 %v48, 17
    %v361 = vpop.permute.xlu0 %360
    %362 = vrot.lane.b32.xlu0 %v54, 17
    %v363 = vpop.permute.xlu0 %362
    %vm364 = vcmp.lt.s32.totalorder %v72, 17
    %v365 = vsel %vm364, %v349, %v357
    %v366 = vsel %vm364, %v351, %v359
    %v367 = vsel %vm364, %v353, %v361
    %v368 = vsel %vm364, %v355, %v363
    %v369 = vsel %vm364, %v357, %v349
    %v370 = vsel %vm364, %v359, %v351
    %v371 = vsel %vm364, %v361, %v353
    %v372 = vsel %vm364, %v363, %v355
    %s373 = scalar_lea.vmem %s1, 384
    %v374 = vld [vmem:[%s373] sm:$0xff]
    %v375 = vld [vmem:[%s373 + $0x8] sm:$0xff]
    %v376 = vld [vmem:[%s373 + $0x10] sm:$0xff]
    %v377 = vld [vmem:[%s373 + $0x18] sm:$0xff]
    %v378 = vld [vmem:[%s373 + $0x20] sm:$0xff]
    %v379 = vld [vmem:[%s373 + $0x28] sm:$0xff]
    %v380 = vld [vmem:[%s373 + $0x30] sm:$0xff]
    %v381 = vld [vmem:[%s373 + $0x38] sm:$0xff]
    %v382 = vmul.f32 %v369, %v374
    %v383 = vmul.f32 %v365, %v375
    %v384 = vmul.f32 %v370, %v376
    %v385 = vmul.f32 %v366, %v377
    %v386 = vmul.f32 %v371, %v378
    %v387 = vmul.f32 %v367, %v379
    %v388 = vmul.f32 %v372, %v380
    %v389 = vmul.f32 %v368, %v381
    %v390 = vadd.f32 %v340, %v382
    %v391 = vadd.f32 %v341, %v383
    %v392 = vadd.f32 %v342, %v384
    %v393 = vadd.f32 %v343, %v385
    %v394 = vadd.f32 %v344, %v386
    %v395 = vadd.f32 %v345, %v387
    %v396 = vadd.f32 %v346, %v388
    %v397 = vadd.f32 %v347, %v389
    %398 = vrot.lane.b32.xlu0 %v35, 16
    %v399 = vpop.permute.xlu0 %398
    %400 = vrot.lane.b32.xlu0 %v41, 16
    %v401 = vpop.permute.xlu0 %400
    %402 = vrot.lane.b32.xlu0 %v47, 16
    %v403 = vpop.permute.xlu0 %402
    %404 = vrot.lane.b32.xlu0 %v53, 16
    %v405 = vpop.permute.xlu0 %404
    %406 = vrot.lane.b32.xlu0 %v36, 16
    %v407 = vpop.permute.xlu0 %406
    %408 = vrot.lane.b32.xlu0 %v42, 16
    %v409 = vpop.permute.xlu0 %408
    %410 = vrot.lane.b32.xlu0 %v48, 16
    %v411 = vpop.permute.xlu0 %410
    %412 = vrot.lane.b32.xlu0 %v54, 16
    %v413 = vpop.permute.xlu0 %412
    %vm414 = vcmp.lt.s32.totalorder %v72, 16
    %v415 = vsel %vm414, %v399, %v407
    %v416 = vsel %vm414, %v401, %v409
    %v417 = vsel %vm414, %v403, %v411
    %v418 = vsel %vm414, %v405, %v413
    %v419 = vsel %vm414, %v407, %v399
    %v420 = vsel %vm414, %v409, %v401
    %v421 = vsel %vm414, %v411, %v403
    %v422 = vsel %vm414, %v413, %v405
    %s423 = scalar_lea.vmem %s1, 448
    %v424 = vld [vmem:[%s423] sm:$0xff]
    %v425 = vld [vmem:[%s423 + $0x8] sm:$0xff]
    %v426 = vld [vmem:[%s423 + $0x10] sm:$0xff]
    %v427 = vld [vmem:[%s423 + $0x18] sm:$0xff]
    %v428 = vld [vmem:[%s423 + $0x20] sm:$0xff]
    %v429 = vld [vmem:[%s423 + $0x28] sm:$0xff]
    %v430 = vld [vmem:[%s423 + $0x30] sm:$0xff]
    %v431 = vld [vmem:[%s423 + $0x38] sm:$0xff]
    %v432 = vmul.f32 %v419, %v424
    %v433 = vmul.f32 %v415, %v425
    %v434 = vmul.f32 %v420, %v426
    %v435 = vmul.f32 %v416, %v427
    %v436 = vmul.f32 %v421, %v428
    %v437 = vmul.f32 %v417, %v429
    %v438 = vmul.f32 %v422, %v430
    %v439 = vmul.f32 %v418, %v431
    %v440 = vadd.f32 %v390, %v432
    %v441 = vadd.f32 %v391, %v433
    %v442 = vadd.f32 %v392, %v434
    %v443 = vadd.f32 %v393, %v435
    %v444 = vadd.f32 %v394, %v436
    %v445 = vadd.f32 %v395, %v437
    %v446 = vadd.f32 %v396, %v438
    %v447 = vadd.f32 %v397, %v439
    %448 = vrot.lane.b32.xlu0 %v35, 15
    %v449 = vpop.permute.xlu0 %448
    %450 = vrot.lane.b32.xlu0 %v41, 15
    %v451 = vpop.permute.xlu0 %450
    %452 = vrot.lane.b32.xlu0 %v47, 15
    %v453 = vpop.permute.xlu0 %452
    %454 = vrot.lane.b32.xlu0 %v53, 15
    %v455 = vpop.permute.xlu0 %454
    %456 = vrot.lane.b32.xlu0 %v36, 15
    %v457 = vpop.permute.xlu0 %456
    %458 = vrot.lane.b32.xlu0 %v42, 15
    %v459 = vpop.permute.xlu0 %458
    %460 = vrot.lane.b32.xlu0 %v48, 15
    %v461 = vpop.permute.xlu0 %460
    %462 = vrot.lane.b32.xlu0 %v54, 15
    %v463 = vpop.permute.xlu0 %462
    %vm464 = vcmp.lt.s32.totalorder %v72, 15
    %v465 = vsel %vm464, %v449, %v457
    %v466 = vsel %vm464, %v451, %v459
    %v467 = vsel %vm464, %v453, %v461
    %v468 = vsel %vm464, %v455, %v463
    %v469 = vsel %vm464, %v457, %v449
    %v470 = vsel %vm464, %v459, %v451
    %v471 = vsel %vm464, %v461, %v453
    %v472 = vsel %vm464, %v463, %v455
    %s473 = scalar_lea.vmem %s1, 512
    %v474 = vld [vmem:[%s473] sm:$0xff]
    %v475 = vld [vmem:[%s473 + $0x8] sm:$0xff]
    %v476 = vld [vmem:[%s473 + $0x10] sm:$0xff]
    %v477 = vld [vmem:[%s473 + $0x18] sm:$0xff]
    %v478 = vld [vmem:[%s473 + $0x20] sm:$0xff]
    %v479 = vld [vmem:[%s473 + $0x28] sm:$0xff]
    %v480 = vld [vmem:[%s473 + $0x30] sm:$0xff]
    %v481 = vld [vmem:[%s473 + $0x38] sm:$0xff]
    %v482 = vmul.f32 %v469, %v474
    %v483 = vmul.f32 %v465, %v475
    %v484 = vmul.f32 %v470, %v476
    %v485 = vmul.f32 %v466, %v477
    %v486 = vmul.f32 %v471, %v478
    %v487 = vmul.f32 %v467, %v479
    %v488 = vmul.f32 %v472, %v480
    %v489 = vmul.f32 %v468, %v481
    %v490 = vadd.f32 %v440, %v482
    %v491 = vadd.f32 %v441, %v483
    %v492 = vadd.f32 %v442, %v484
    %v493 = vadd.f32 %v443, %v485
    %v494 = vadd.f32 %v444, %v486
    %v495 = vadd.f32 %v445, %v487
    %v496 = vadd.f32 %v446, %v488
    %v497 = vadd.f32 %v447, %v489
    %498 = vrot.lane.b32.xlu0 %v35, 14
    %v499 = vpop.permute.xlu0 %498
    %500 = vrot.lane.b32.xlu0 %v41, 14
    %v501 = vpop.permute.xlu0 %500
    %502 = vrot.lane.b32.xlu0 %v47, 14
    %v503 = vpop.permute.xlu0 %502
    %504 = vrot.lane.b32.xlu0 %v53, 14
    %v505 = vpop.permute.xlu0 %504
    %506 = vrot.lane.b32.xlu0 %v36, 14
    %v507 = vpop.permute.xlu0 %506
    %508 = vrot.lane.b32.xlu0 %v42, 14
    %v509 = vpop.permute.xlu0 %508
    %510 = vrot.lane.b32.xlu0 %v48, 14
    %v511 = vpop.permute.xlu0 %510
    %512 = vrot.lane.b32.xlu0 %v54, 14
    %v513 = vpop.permute.xlu0 %512
    %vm514 = vcmp.lt.s32.totalorder %v72, 14
    %v515 = vsel %vm514, %v499, %v507
    %v516 = vsel %vm514, %v501, %v509
    %v517 = vsel %vm514, %v503, %v511
    %v518 = vsel %vm514, %v505, %v513
    %v519 = vsel %vm514, %v507, %v499
    %v520 = vsel %vm514, %v509, %v501
    %v521 = vsel %vm514, %v511, %v503
    %v522 = vsel %vm514, %v513, %v505
    %s523 = scalar_lea.vmem %s1, 576
    %v524 = vld [vmem:[%s523] sm:$0xff]
    %v525 = vld [vmem:[%s523 + $0x8] sm:$0xff]
    %v526 = vld [vmem:[%s523 + $0x10] sm:$0xff]
    %v527 = vld [vmem:[%s523 + $0x18] sm:$0xff]
    %v528 = vld [vmem:[%s523 + $0x20] sm:$0xff]
    %v529 = vld [vmem:[%s523 + $0x28] sm:$0xff]
    %v530 = vld [vmem:[%s523 + $0x30] sm:$0xff]
    %v531 = vld [vmem:[%s523 + $0x38] sm:$0xff]
    %v532 = vmul.f32 %v519, %v524
    %v533 = vmul.f32 %v515, %v525
    %v534 = vmul.f32 %v520, %v526
    %v535 = vmul.f32 %v516, %v527
    %v536 = vmul.f32 %v521, %v528
    %v537 = vmul.f32 %v517, %v529
    %v538 = vmul.f32 %v522, %v530
    %v539 = vmul.f32 %v518, %v531
    %v540 = vadd.f32 %v490, %v532
    %v541 = vadd.f32 %v491, %v533
    %v542 = vadd.f32 %v492, %v534
    %v543 = vadd.f32 %v493, %v535
    %v544 = vadd.f32 %v494, %v536
    %v545 = vadd.f32 %v495, %v537
    %v546 = vadd.f32 %v496, %v538
    %v547 = vadd.f32 %v497, %v539
    %548 = vrot.lane.b32.xlu0 %v35, 2
    %v549 = vpop.permute.xlu0 %548
    %550 = vrot.lane.b32.xlu0 %v41, 2
    %v551 = vpop.permute.xlu0 %550
    %552 = vrot.lane.b32.xlu0 %v47, 2
    %v553 = vpop.permute.xlu0 %552
    %554 = vrot.lane.b32.xlu0 %v53, 2
    %v555 = vpop.permute.xlu0 %554
    %556 = vrot.lane.b32.xlu0 %v36, 2
    %v557 = vpop.permute.xlu0 %556
    %558 = vrot.lane.b32.xlu0 %v42, 2
    %v559 = vpop.permute.xlu0 %558
    %560 = vrot.lane.b32.xlu0 %v48, 2
    %v561 = vpop.permute.xlu0 %560
    %562 = vrot.lane.b32.xlu0 %v54, 2
    %v563 = vpop.permute.xlu0 %562
    %vm564 = vcmp.lt.s32.totalorder %v72, 2
    %v565 = vsel %vm564, %v549, %v557
    %v566 = vsel %vm564, %v551, %v559
    %v567 = vsel %vm564, %v553, %v561
    %v568 = vsel %vm564, %v555, %v563
    %v569 = vsel %vm564, %v557, %v549
    %v570 = vsel %vm564, %v559, %v551
    %v571 = vsel %vm564, %v561, %v553
    %v572 = vsel %vm564, %v563, %v555
    %s573 = scalar_lea.vmem %s1, 640
    %v574 = vld [vmem:[%s573] sm:$0xff]
    %v575 = vld [vmem:[%s573 + $0x8] sm:$0xff]
    %v576 = vld [vmem:[%s573 + $0x10] sm:$0xff]
    %v577 = vld [vmem:[%s573 + $0x18] sm:$0xff]
    %v578 = vld [vmem:[%s573 + $0x20] sm:$0xff]
    %v579 = vld [vmem:[%s573 + $0x28] sm:$0xff]
    %v580 = vld [vmem:[%s573 + $0x30] sm:$0xff]
    %v581 = vld [vmem:[%s573 + $0x38] sm:$0xff]
    %v582 = vmul.f32 %v569, %v574
    %v583 = vmul.f32 %v565, %v575
    %v584 = vmul.f32 %v570, %v576
    %v585 = vmul.f32 %v566, %v577
    %v586 = vmul.f32 %v571, %v578
    %v587 = vmul.f32 %v567, %v579
    %v588 = vmul.f32 %v572, %v580
    %v589 = vmul.f32 %v568, %v581
    %v590 = vadd.f32 %v540, %v582
    %v591 = vadd.f32 %v541, %v583
    %v592 = vadd.f32 %v542, %v584
    %v593 = vadd.f32 %v543, %v585
    %v594 = vadd.f32 %v544, %v586
    %v595 = vadd.f32 %v545, %v587
    %v596 = vadd.f32 %v546, %v588
    %v597 = vadd.f32 %v547, %v589
    %598 = vrot.lane.b32.xlu0 %v35, 1
    %v599 = vpop.permute.xlu0 %598
    %600 = vrot.lane.b32.xlu0 %v41, 1
    %v601 = vpop.permute.xlu0 %600
    %602 = vrot.lane.b32.xlu0 %v47, 1
    %v603 = vpop.permute.xlu0 %602
    %604 = vrot.lane.b32.xlu0 %v53, 1
    %v605 = vpop.permute.xlu0 %604
    %606 = vrot.lane.b32.xlu0 %v36, 1
    %v607 = vpop.permute.xlu0 %606
    %608 = vrot.lane.b32.xlu0 %v42, 1
    %v609 = vpop.permute.xlu0 %608
    %610 = vrot.lane.b32.xlu0 %v48, 1
    %v611 = vpop.permute.xlu0 %610
    %612 = vrot.lane.b32.xlu0 %v54, 1
    %v613 = vpop.permute.xlu0 %612
    %vm614 = vcmp.lt.s32.totalorder %v72, 1
    %v615 = vsel %vm614, %v599, %v607
    %v616 = vsel %vm614, %v601, %v609
    %v617 = vsel %vm614, %v603, %v611
    %v618 = vsel %vm614, %v605, %v613
    %v619 = vsel %vm614, %v607, %v599
    %v620 = vsel %vm614, %v609, %v601
    %v621 = vsel %vm614, %v611, %v603
    %v622 = vsel %vm614, %v613, %v605
    %s623 = scalar_lea.vmem %s1, 704
    %v624 = vld [vmem:[%s623] sm:$0xff]
    %v625 = vld [vmem:[%s623 + $0x8] sm:$0xff]
    %v626 = vld [vmem:[%s623 + $0x10] sm:$0xff]
    %v627 = vld [vmem:[%s623 + $0x18] sm:$0xff]
    %v628 = vld [vmem:[%s623 + $0x20] sm:$0xff]
    %v629 = vld [vmem:[%s623 + $0x28] sm:$0xff]
    %v630 = vld [vmem:[%s623 + $0x30] sm:$0xff]
    %v631 = vld [vmem:[%s623 + $0x38] sm:$0xff]
    %v632 = vmul.f32 %v619, %v624
    %v633 = vmul.f32 %v615, %v625
    %v634 = vmul.f32 %v620, %v626
    %v635 = vmul.f32 %v616, %v627
    %v636 = vmul.f32 %v621, %v628
    %v637 = vmul.f32 %v617, %v629
    %v638 = vmul.f32 %v622, %v630
    %v639 = vmul.f32 %v618, %v631
    %v640 = vadd.f32 %v590, %v632
    %v641 = vadd.f32 %v591, %v633
    %v642 = vadd.f32 %v592, %v634
    %v643 = vadd.f32 %v593, %v635
    %v644 = vadd.f32 %v594, %v636
    %v645 = vadd.f32 %v595, %v637
    %v646 = vadd.f32 %v596, %v638
    %v647 = vadd.f32 %v597, %v639
    %s648 = scalar_lea.vmem %s1, 768
    %v649 = vld [vmem:[%s648] sm:$0xff]
    %v650 = vld [vmem:[%s648 + $0x8] sm:$0xff]
    %v651 = vld [vmem:[%s648 + $0x10] sm:$0xff]
    %v652 = vld [vmem:[%s648 + $0x18] sm:$0xff]
    %v653 = vld [vmem:[%s648 + $0x20] sm:$0xff]
    %v654 = vld [vmem:[%s648 + $0x28] sm:$0xff]
    %v655 = vld [vmem:[%s648 + $0x30] sm:$0xff]
    %v656 = vld [vmem:[%s648 + $0x38] sm:$0xff]
    %v657 = vmul.f32 %v35, %v649
    %v658 = vmul.f32 %v36, %v650
    %v659 = vmul.f32 %v41, %v651
    %v660 = vmul.f32 %v42, %v652
    %v661 = vmul.f32 %v47, %v653
    %v662 = vmul.f32 %v48, %v654
    %v663 = vmul.f32 %v53, %v655
    %v664 = vmul.f32 %v54, %v656
    %v665 = vadd.f32 %v640, %v657
    %v666 = vadd.f32 %v641, %v658
    %v667 = vadd.f32 %v642, %v659
    %v668 = vadd.f32 %v643, %v660
    %v669 = vadd.f32 %v644, %v661
    %v670 = vadd.f32 %v645, %v662
    %v671 = vadd.f32 %v646, %v663
    %v672 = vadd.f32 %v647, %v664
    %673 = vrot.lane.b32.xlu0 %v35, 127
    %v674 = vpop.permute.xlu0 %673
    %675 = vrot.lane.b32.xlu0 %v41, 127
    %v676 = vpop.permute.xlu0 %675
    %677 = vrot.lane.b32.xlu0 %v47, 127
    %v678 = vpop.permute.xlu0 %677
    %679 = vrot.lane.b32.xlu0 %v53, 127
    %v680 = vpop.permute.xlu0 %679
    %681 = vrot.lane.b32.xlu0 %v36, 127
    %v682 = vpop.permute.xlu0 %681
    %683 = vrot.lane.b32.xlu0 %v42, 127
    %v684 = vpop.permute.xlu0 %683
    %685 = vrot.lane.b32.xlu0 %v48, 127
    %v686 = vpop.permute.xlu0 %685
    %687 = vrot.lane.b32.xlu0 %v54, 127
    %v688 = vpop.permute.xlu0 %687
    %vm689 = vcmp.lt.s32.totalorder %v72, 127
    %v690 = vsel %vm689, %v674, %v682
    %v691 = vsel %vm689, %v676, %v684
    %v692 = vsel %vm689, %v678, %v686
    %v693 = vsel %vm689, %v680, %v688
    %v694 = vsel %vm689, %v682, %v674
    %v695 = vsel %vm689, %v684, %v676
    %v696 = vsel %vm689, %v686, %v678
    %v697 = vsel %vm689, %v688, %v680
    %s698 = scalar_lea.vmem %s1, 832
    %v699 = vld [vmem:[%s698] sm:$0xff]
    %v700 = vld [vmem:[%s698 + $0x8] sm:$0xff]
    %v701 = vld [vmem:[%s698 + $0x10] sm:$0xff]
    %v702 = vld [vmem:[%s698 + $0x18] sm:$0xff]
    %v703 = vld [vmem:[%s698 + $0x20] sm:$0xff]
    %v704 = vld [vmem:[%s698 + $0x28] sm:$0xff]
    %v705 = vld [vmem:[%s698 + $0x30] sm:$0xff]
    %v706 = vld [vmem:[%s698 + $0x38] sm:$0xff]
    %v707 = vmul.f32 %v690, %v699
    %v708 = vmul.f32 %v694, %v700
    %v709 = vmul.f32 %v691, %v701
    %v710 = vmul.f32 %v695, %v702
    %v711 = vmul.f32 %v692, %v703
    %v712 = vmul.f32 %v696, %v704
    %v713 = vmul.f32 %v693, %v705
    %v714 = vmul.f32 %v697, %v706
    %v715 = vadd.f32 %v665, %v707
    %v716 = vadd.f32 %v666, %v708
    %v717 = vadd.f32 %v667, %v709
    %v718 = vadd.f32 %v668, %v710
    %v719 = vadd.f32 %v669, %v711
    %v720 = vadd.f32 %v670, %v712
    %v721 = vadd.f32 %v671, %v713
    %v722 = vadd.f32 %v672, %v714
    %723 = vrot.lane.b32.xlu0 %v35, 126
    %v724 = vpop.permute.xlu0 %723
    %725 = vrot.lane.b32.xlu0 %v41, 126
    %v726 = vpop.permute.xlu0 %725
    %727 = vrot.lane.b32.xlu0 %v47, 126
    %v728 = vpop.permute.xlu0 %727
    %729 = vrot.lane.b32.xlu0 %v53, 126
    %v730 = vpop.permute.xlu0 %729
    %731 = vrot.lane.b32.xlu0 %v36, 126
    %v732 = vpop.permute.xlu0 %731
    %733 = vrot.lane.b32.xlu0 %v42, 126
    %v734 = vpop.permute.xlu0 %733
    %735 = vrot.lane.b32.xlu0 %v48, 126
    %v736 = vpop.permute.xlu0 %735
    %737 = vrot.lane.b32.xlu0 %v54, 126
    %v738 = vpop.permute.xlu0 %737
    %vm739 = vcmp.lt.s32.totalorder %v72, 126
    %v740 = vsel %vm739, %v724, %v732
    %v741 = vsel %vm739, %v726, %v734
    %v742 = vsel %vm739, %v728, %v736
    %v743 = vsel %vm739, %v730, %v738
    %v744 = vsel %vm739, %v732, %v724
    %v745 = vsel %vm739, %v734, %v726
    %v746 = vsel %vm739, %v736, %v728
    %v747 = vsel %vm739, %v738, %v730
    %s748 = scalar_lea.vmem %s1, 896
    %v749 = vld [vmem:[%s748] sm:$0xff]
    %v750 = vld [vmem:[%s748 + $0x8] sm:$0xff]
    %v751 = vld [vmem:[%s748 + $0x10] sm:$0xff]
    %v752 = vld [vmem:[%s748 + $0x18] sm:$0xff]
    %v753 = vld [vmem:[%s748 + $0x20] sm:$0xff]
    %v754 = vld [vmem:[%s748 + $0x28] sm:$0xff]
    %v755 = vld [vmem:[%s748 + $0x30] sm:$0xff]
    %v756 = vld [vmem:[%s748 + $0x38] sm:$0xff]
    %v757 = vmul.f32 %v740, %v749
    %v758 = vmul.f32 %v744, %v750
    %v759 = vmul.f32 %v741, %v751
    %v760 = vmul.f32 %v745, %v752
    %v761 = vmul.f32 %v742, %v753
    %v762 = vmul.f32 %v746, %v754
    %v763 = vmul.f32 %v743, %v755
    %v764 = vmul.f32 %v747, %v756
    %v765 = vadd.f32 %v715, %v757
    %v766 = vadd.f32 %v716, %v758
    %v767 = vadd.f32 %v717, %v759
    %v768 = vadd.f32 %v718, %v760
    %v769 = vadd.f32 %v719, %v761
    %v770 = vadd.f32 %v720, %v762
    %v771 = vadd.f32 %v721, %v763
    %v772 = vadd.f32 %v722, %v764
    %773 = vrot.lane.b32.xlu0 %v35, 114
    %v774 = vpop.permute.xlu0 %773
    %775 = vrot.lane.b32.xlu0 %v41, 114
    %v776 = vpop.permute.xlu0 %775
    %777 = vrot.lane.b32.xlu0 %v47, 114
    %v778 = vpop.permute.xlu0 %777
    %779 = vrot.lane.b32.xlu0 %v53, 114
    %v780 = vpop.permute.xlu0 %779
    %781 = vrot.lane.b32.xlu0 %v36, 114
    %v782 = vpop.permute.xlu0 %781
    %783 = vrot.lane.b32.xlu0 %v42, 114
    %v784 = vpop.permute.xlu0 %783
    %785 = vrot.lane.b32.xlu0 %v48, 114
    %v786 = vpop.permute.xlu0 %785
    %787 = vrot.lane.b32.xlu0 %v54, 114
    %v788 = vpop.permute.xlu0 %787
    %vm789 = vcmp.lt.s32.totalorder %v72, 114
    %v790 = vsel %vm789, %v774, %v782
    %v791 = vsel %vm789, %v776, %v784
    %v792 = vsel %vm789, %v778, %v786
    %v793 = vsel %vm789, %v780, %v788
    %v794 = vsel %vm789, %v782, %v774
    %v795 = vsel %vm789, %v784, %v776
    %v796 = vsel %vm789, %v786, %v778
    %v797 = vsel %vm789, %v788, %v780
    %s798 = scalar_lea.vmem %s1, 960
    %v799 = vld [vmem:[%s798] sm:$0xff]
    %v800 = vld [vmem:[%s798 + $0x8] sm:$0xff]
    %v801 = vld [vmem:[%s798 + $0x10] sm:$0xff]
    %v802 = vld [vmem:[%s798 + $0x18] sm:$0xff]
    %v803 = vld [vmem:[%s798 + $0x20] sm:$0xff]
    %v804 = vld [vmem:[%s798 + $0x28] sm:$0xff]
    %v805 = vld [vmem:[%s798 + $0x30] sm:$0xff]
    %v806 = vld [vmem:[%s798 + $0x38] sm:$0xff]
    %v807 = vmul.f32 %v790, %v799
    %v808 = vmul.f32 %v794, %v800
    %v809 = vmul.f32 %v791, %v801
    %v810 = vmul.f32 %v795, %v802
    %v811 = vmul.f32 %v792, %v803
    %v812 = vmul.f32 %v796, %v804
    %v813 = vmul.f32 %v793, %v805
    %v814 = vmul.f32 %v797, %v806
    %v815 = vadd.f32 %v765, %v807
    %v816 = vadd.f32 %v766, %v808
    %v817 = vadd.f32 %v767, %v809
    %v818 = vadd.f32 %v768, %v810
    %v819 = vadd.f32 %v769, %v811
    %v820 = vadd.f32 %v770, %v812
    %v821 = vadd.f32 %v771, %v813
    %v822 = vadd.f32 %v772, %v814
    %823 = vrot.lane.b32.xlu0 %v35, 113
    %v824 = vpop.permute.xlu0 %823
    %825 = vrot.lane.b32.xlu0 %v41, 113
    %v826 = vpop.permute.xlu0 %825
    %827 = vrot.lane.b32.xlu0 %v47, 113
    %v828 = vpop.permute.xlu0 %827
    %829 = vrot.lane.b32.xlu0 %v53, 113
    %v830 = vpop.permute.xlu0 %829
    %831 = vrot.lane.b32.xlu0 %v36, 113
    %v832 = vpop.permute.xlu0 %831
    %833 = vrot.lane.b32.xlu0 %v42, 113
    %v834 = vpop.permute.xlu0 %833
    %835 = vrot.lane.b32.xlu0 %v48, 113
    %v836 = vpop.permute.xlu0 %835
    %837 = vrot.lane.b32.xlu0 %v54, 113
    %v838 = vpop.permute.xlu0 %837
    %vm839 = vcmp.lt.s32.totalorder %v72, 113
    %v840 = vsel %vm839, %v824, %v832
    %v841 = vsel %vm839, %v826, %v834
    %v842 = vsel %vm839, %v828, %v836
    %v843 = vsel %vm839, %v830, %v838
    %v844 = vsel %vm839, %v832, %v824
    %v845 = vsel %vm839, %v834, %v826
    %v846 = vsel %vm839, %v836, %v828
    %v847 = vsel %vm839, %v838, %v830
    %s848 = scalar_lea.vmem %s1, 1024
    %v849 = vld [vmem:[%s848] sm:$0xff]
    %v850 = vld [vmem:[%s848 + $0x8] sm:$0xff]
    %v851 = vld [vmem:[%s848 + $0x10] sm:$0xff]
    %v852 = vld [vmem:[%s848 + $0x18] sm:$0xff]
    %v853 = vld [vmem:[%s848 + $0x20] sm:$0xff]
    %v854 = vld [vmem:[%s848 + $0x28] sm:$0xff]
    %v855 = vld [vmem:[%s848 + $0x30] sm:$0xff]
    %v856 = vld [vmem:[%s848 + $0x38] sm:$0xff]
    %v857 = vmul.f32 %v840, %v849
    %v858 = vmul.f32 %v844, %v850
    %v859 = vmul.f32 %v841, %v851
    %v860 = vmul.f32 %v845, %v852
    %v861 = vmul.f32 %v842, %v853
    %v862 = vmul.f32 %v846, %v854
    %v863 = vmul.f32 %v843, %v855
    %v864 = vmul.f32 %v847, %v856
    %v865 = vadd.f32 %v815, %v857
    %v866 = vadd.f32 %v816, %v858
    %v867 = vadd.f32 %v817, %v859
    %v868 = vadd.f32 %v818, %v860
    %v869 = vadd.f32 %v819, %v861
    %v870 = vadd.f32 %v820, %v862
    %v871 = vadd.f32 %v821, %v863
    %v872 = vadd.f32 %v822, %v864
    %873 = vrot.lane.b32.xlu0 %v35, 112
    %v874 = vpop.permute.xlu0 %873
    %875 = vrot.lane.b32.xlu0 %v41, 112
    %v876 = vpop.permute.xlu0 %875
    %877 = vrot.lane.b32.xlu0 %v47, 112
    %v878 = vpop.permute.xlu0 %877
    %879 = vrot.lane.b32.xlu0 %v53, 112
    %v880 = vpop.permute.xlu0 %879
    %881 = vrot.lane.b32.xlu0 %v36, 112
    %v882 = vpop.permute.xlu0 %881
    %883 = vrot.lane.b32.xlu0 %v42, 112
    %v884 = vpop.permute.xlu0 %883
    %885 = vrot.lane.b32.xlu0 %v48, 112
    %v886 = vpop.permute.xlu0 %885
    %887 = vrot.lane.b32.xlu0 %v54, 112
    %v888 = vpop.permute.xlu0 %887
    %vm889 = vcmp.lt.s32.totalorder %v72, 112
    %v890 = vsel %vm889, %v874, %v882
    %v891 = vsel %vm889, %v876, %v884
    %v892 = vsel %vm889, %v878, %v886
    %v893 = vsel %vm889, %v880, %v888
    %v894 = vsel %vm889, %v882, %v874
    %v895 = vsel %vm889, %v884, %v876
    %v896 = vsel %vm889, %v886, %v878
    %v897 = vsel %vm889, %v888, %v880
    %s898 = scalar_lea.vmem %s1, 1088
    %v899 = vld [vmem:[%s898] sm:$0xff]
    %v900 = vld [vmem:[%s898 + $0x8] sm:$0xff]
    %v901 = vld [vmem:[%s898 + $0x10] sm:$0xff]
    %v902 = vld [vmem:[%s898 + $0x18] sm:$0xff]
    %v903 = vld [vmem:[%s898 + $0x20] sm:$0xff]
    %v904 = vld [vmem:[%s898 + $0x28] sm:$0xff]
    %v905 = vld [vmem:[%s898 + $0x30] sm:$0xff]
    %v906 = vld [vmem:[%s898 + $0x38] sm:$0xff]
    %v907 = vmul.f32 %v890, %v899
    %v908 = vmul.f32 %v894, %v900
    %v909 = vmul.f32 %v891, %v901
    %v910 = vmul.f32 %v895, %v902
    %v911 = vmul.f32 %v892, %v903
    %v912 = vmul.f32 %v896, %v904
    %v913 = vmul.f32 %v893, %v905
    %v914 = vmul.f32 %v897, %v906
    %v915 = vadd.f32 %v865, %v907
    %v916 = vadd.f32 %v866, %v908
    %v917 = vadd.f32 %v867, %v909
    %v918 = vadd.f32 %v868, %v910
    %v919 = vadd.f32 %v869, %v911
    %v920 = vadd.f32 %v870, %v912
    %v921 = vadd.f32 %v871, %v913
    %v922 = vadd.f32 %v872, %v914
    %923 = vrot.lane.b32.xlu0 %v35, 111
    %v924 = vpop.permute.xlu0 %923
    %925 = vrot.lane.b32.xlu0 %v41, 111
    %v926 = vpop.permute.xlu0 %925
    %927 = vrot.lane.b32.xlu0 %v47, 111
    %v928 = vpop.permute.xlu0 %927
    %929 = vrot.lane.b32.xlu0 %v53, 111
    %v930 = vpop.permute.xlu0 %929
    %931 = vrot.lane.b32.xlu0 %v36, 111
    %v932 = vpop.permute.xlu0 %931
    %933 = vrot.lane.b32.xlu0 %v42, 111
    %v934 = vpop.permute.xlu0 %933
    %935 = vrot.lane.b32.xlu0 %v48, 111
    %v936 = vpop.permute.xlu0 %935
    %937 = vrot.lane.b32.xlu0 %v54, 111
    %v938 = vpop.permute.xlu0 %937
    %vm939 = vcmp.lt.s32.totalorder %v72, 111
    %v940 = vsel %vm939, %v924, %v932
    %v941 = vsel %vm939, %v926, %v934
    %v942 = vsel %vm939, %v928, %v936
    %v943 = vsel %vm939, %v930, %v938
    %v944 = vsel %vm939, %v932, %v924
    %v945 = vsel %vm939, %v934, %v926
    %v946 = vsel %vm939, %v936, %v928
    %v947 = vsel %vm939, %v938, %v930
    %s948 = scalar_lea.vmem %s1, 1152
    %v949 = vld [vmem:[%s948] sm:$0xff]
    %v950 = vld [vmem:[%s948 + $0x8] sm:$0xff]
    %v951 = vld [vmem:[%s948 + $0x10] sm:$0xff]
    %v952 = vld [vmem:[%s948 + $0x18] sm:$0xff]
    %v953 = vld [vmem:[%s948 + $0x20] sm:$0xff]
    %v954 = vld [vmem:[%s948 + $0x28] sm:$0xff]
    %v955 = vld [vmem:[%s948 + $0x30] sm:$0xff]
    %v956 = vld [vmem:[%s948 + $0x38] sm:$0xff]
    %v957 = vmul.f32 %v940, %v949
    %v958 = vmul.f32 %v944, %v950
    %v959 = vmul.f32 %v941, %v951
    %v960 = vmul.f32 %v945, %v952
    %v961 = vmul.f32 %v942, %v953
    %v962 = vmul.f32 %v946, %v954
    %v963 = vmul.f32 %v943, %v955
    %v964 = vmul.f32 %v947, %v956
    %v965 = vadd.f32 %v915, %v957
    %v966 = vadd.f32 %v916, %v958
    %v967 = vadd.f32 %v917, %v959
    %v968 = vadd.f32 %v918, %v960
    %v969 = vadd.f32 %v919, %v961
    %v970 = vadd.f32 %v920, %v962
    %v971 = vadd.f32 %v921, %v963
    %v972 = vadd.f32 %v922, %v964
    %973 = vrot.lane.b32.xlu0 %v35, 110
    %v974 = vpop.permute.xlu0 %973
    %975 = vrot.lane.b32.xlu0 %v41, 110
    %v976 = vpop.permute.xlu0 %975
    %977 = vrot.lane.b32.xlu0 %v47, 110
    %v978 = vpop.permute.xlu0 %977
    %979 = vrot.lane.b32.xlu0 %v53, 110
    %v980 = vpop.permute.xlu0 %979
    %981 = vrot.lane.b32.xlu0 %v36, 110
    %v982 = vpop.permute.xlu0 %981
    %983 = vrot.lane.b32.xlu0 %v42, 110
    %v984 = vpop.permute.xlu0 %983
    %985 = vrot.lane.b32.xlu0 %v48, 110
    %v986 = vpop.permute.xlu0 %985
    %987 = vrot.lane.b32.xlu0 %v54, 110
    %v988 = vpop.permute.xlu0 %987
    %vm989 = vcmp.lt.s32.totalorder %v72, 110
    %v990 = vsel %vm989, %v974, %v982
    %v991 = vsel %vm989, %v976, %v984
    %v992 = vsel %vm989, %v978, %v986
    %v993 = vsel %vm989, %v980, %v988
    %v994 = vsel %vm989, %v982, %v974
    %v995 = vsel %vm989, %v984, %v976
    %v996 = vsel %vm989, %v986, %v978
    %v997 = vsel %vm989, %v988, %v980
    %s998 = scalar_lea.vmem %s1, 1216
    %v999 = vld [vmem:[%s998] sm:$0xff]
    %v1000 = vld [vmem:[%s998 + $0x8] sm:$0xff]
    %v1001 = vld [vmem:[%s998 + $0x10] sm:$0xff]
    %v1002 = vld [vmem:[%s998 + $0x18] sm:$0xff]
    %v1003 = vld [vmem:[%s998 + $0x20] sm:$0xff]
    %v1004 = vld [vmem:[%s998 + $0x28] sm:$0xff]
    %v1005 = vld [vmem:[%s998 + $0x30] sm:$0xff]
    %v1006 = vld [vmem:[%s998 + $0x38] sm:$0xff]
    %v1007 = vmul.f32 %v990, %v999
    %v1008 = vmul.f32 %v994, %v1000
    %v1009 = vmul.f32 %v991, %v1001
    %v1010 = vmul.f32 %v995, %v1002
    %v1011 = vmul.f32 %v992, %v1003
    %v1012 = vmul.f32 %v996, %v1004
    %v1013 = vmul.f32 %v993, %v1005
    %v1014 = vmul.f32 %v997, %v1006
    %v1015 = vadd.f32 %v965, %v1007
    %v1016 = vadd.f32 %v966, %v1008
    %v1017 = vadd.f32 %v967, %v1009
    %v1018 = vadd.f32 %v968, %v1010
    %v1019 = vadd.f32 %v969, %v1011
    %v1020 = vadd.f32 %v970, %v1012
    %v1021 = vadd.f32 %v971, %v1013
    %v1022 = vadd.f32 %v972, %v1014
    %1023 = vrot.lane.b32.xlu0 %v35, 98
    %v1024 = vpop.permute.xlu0 %1023
    %1025 = vrot.lane.b32.xlu0 %v41, 98
    %v1026 = vpop.permute.xlu0 %1025
    %1027 = vrot.lane.b32.xlu0 %v47, 98
    %v1028 = vpop.permute.xlu0 %1027
    %1029 = vrot.lane.b32.xlu0 %v53, 98
    %v1030 = vpop.permute.xlu0 %1029
    %1031 = vrot.lane.b32.xlu0 %v36, 98
    %v1032 = vpop.permute.xlu0 %1031
    %1033 = vrot.lane.b32.xlu0 %v42, 98
    %v1034 = vpop.permute.xlu0 %1033
    %1035 = vrot.lane.b32.xlu0 %v48, 98
    %v1036 = vpop.permute.xlu0 %1035
    %1037 = vrot.lane.b32.xlu0 %v54, 98
    %v1038 = vpop.permute.xlu0 %1037
    %vm1039 = vcmp.lt.s32.totalorder %v72, 98
    %v1040 = vsel %vm1039, %v1024, %v1032
    %v1041 = vsel %vm1039, %v1026, %v1034
    %v1042 = vsel %vm1039, %v1028, %v1036
    %v1043 = vsel %vm1039, %v1030, %v1038
    %v1044 = vsel %vm1039, %v1032, %v1024
    %v1045 = vsel %vm1039, %v1034, %v1026
    %v1046 = vsel %vm1039, %v1036, %v1028
    %v1047 = vsel %vm1039, %v1038, %v1030
    %s1048 = scalar_lea.vmem %s1, 1280
    %v1049 = vld [vmem:[%s1048] sm:$0xff]
    %v1050 = vld [vmem:[%s1048 + $0x8] sm:$0xff]
    %v1051 = vld [vmem:[%s1048 + $0x10] sm:$0xff]
    %v1052 = vld [vmem:[%s1048 + $0x18] sm:$0xff]
    %v1053 = vld [vmem:[%s1048 + $0x20] sm:$0xff]
    %v1054 = vld [vmem:[%s1048 + $0x28] sm:$0xff]
    %v1055 = vld [vmem:[%s1048 + $0x30] sm:$0xff]
    %v1056 = vld [vmem:[%s1048 + $0x38] sm:$0xff]
    %v1057 = vmul.f32 %v1040, %v1049
    %v1058 = vmul.f32 %v1044, %v1050
    %v1059 = vmul.f32 %v1041, %v1051
    %v1060 = vmul.f32 %v1045, %v1052
    %v1061 = vmul.f32 %v1042, %v1053
    %v1062 = vmul.f32 %v1046, %v1054
    %v1063 = vmul.f32 %v1043, %v1055
    %v1064 = vmul.f32 %v1047, %v1056
    %v1065 = vadd.f32 %v1015, %v1057
    %v1066 = vadd.f32 %v1016, %v1058
    %v1067 = vadd.f32 %v1017, %v1059
    %v1068 = vadd.f32 %v1018, %v1060
    %v1069 = vadd.f32 %v1019, %v1061
    %v1070 = vadd.f32 %v1020, %v1062
    %v1071 = vadd.f32 %v1021, %v1063
    %v1072 = vadd.f32 %v1022, %v1064
    %1073 = vrot.lane.b32.xlu0 %v35, 97
    %v1074 = vpop.permute.xlu0 %1073
    %1075 = vrot.lane.b32.xlu0 %v41, 97
    %v1076 = vpop.permute.xlu0 %1075
    %1077 = vrot.lane.b32.xlu0 %v47, 97
    %v1078 = vpop.permute.xlu0 %1077
    %1079 = vrot.lane.b32.xlu0 %v53, 97
    %v1080 = vpop.permute.xlu0 %1079
    %1081 = vrot.lane.b32.xlu0 %v36, 97
    %v1082 = vpop.permute.xlu0 %1081
    %1083 = vrot.lane.b32.xlu0 %v42, 97
    %v1084 = vpop.permute.xlu0 %1083
    %1085 = vrot.lane.b32.xlu0 %v48, 97
    %v1086 = vpop.permute.xlu0 %1085
    %1087 = vrot.lane.b32.xlu0 %v54, 97
    %v1088 = vpop.permute.xlu0 %1087
    %vm1089 = vcmp.lt.s32.totalorder %v72, 97
    %v1090 = vsel %vm1089, %v1074, %v1082
    %v1091 = vsel %vm1089, %v1076, %v1084
    %v1092 = vsel %vm1089, %v1078, %v1086
    %v1093 = vsel %vm1089, %v1080, %v1088
    %v1094 = vsel %vm1089, %v1082, %v1074
    %v1095 = vsel %vm1089, %v1084, %v1076
    %v1096 = vsel %vm1089, %v1086, %v1078
    %v1097 = vsel %vm1089, %v1088, %v1080
    %s1098 = scalar_lea.vmem %s1, 1344
    %v1099 = vld [vmem:[%s1098] sm:$0xff]
    %v1100 = vld [vmem:[%s1098 + $0x8] sm:$0xff]
    %v1101 = vld [vmem:[%s1098 + $0x10] sm:$0xff]
    %v1102 = vld [vmem:[%s1098 + $0x18] sm:$0xff]
    %v1103 = vld [vmem:[%s1098 + $0x20] sm:$0xff]
    %v1104 = vld [vmem:[%s1098 + $0x28] sm:$0xff]
    %v1105 = vld [vmem:[%s1098 + $0x30] sm:$0xff]
    %v1106 = vld [vmem:[%s1098 + $0x38] sm:$0xff]
    %v1107 = vmul.f32 %v1090, %v1099
    %v1108 = vmul.f32 %v1094, %v1100
    %v1109 = vmul.f32 %v1091, %v1101
    %v1110 = vmul.f32 %v1095, %v1102
    %v1111 = vmul.f32 %v1092, %v1103
    %v1112 = vmul.f32 %v1096, %v1104
    %v1113 = vmul.f32 %v1093, %v1105
    %v1114 = vmul.f32 %v1097, %v1106
    %v1115 = vadd.f32 %v1065, %v1107
    %v1116 = vadd.f32 %v1066, %v1108
    %v1117 = vadd.f32 %v1067, %v1109
    %v1118 = vadd.f32 %v1068, %v1110
    %v1119 = vadd.f32 %v1069, %v1111
    %v1120 = vadd.f32 %v1070, %v1112
    %v1121 = vadd.f32 %v1071, %v1113
    %v1122 = vadd.f32 %v1072, %v1114
    %1123 = vrot.lane.b32.xlu0 %v35, 96
    %v1124 = vpop.permute.xlu0 %1123
    %1125 = vrot.lane.b32.xlu0 %v41, 96
    %v1126 = vpop.permute.xlu0 %1125
    %1127 = vrot.lane.b32.xlu0 %v47, 96
    %v1128 = vpop.permute.xlu0 %1127
    %1129 = vrot.lane.b32.xlu0 %v53, 96
    %v1130 = vpop.permute.xlu0 %1129
    %1131 = vrot.lane.b32.xlu0 %v36, 96
    %v1132 = vpop.permute.xlu0 %1131
    %1133 = vrot.lane.b32.xlu0 %v42, 96
    %v1134 = vpop.permute.xlu0 %1133
    %1135 = vrot.lane.b32.xlu0 %v48, 96
    %v1136 = vpop.permute.xlu0 %1135
    %1137 = vrot.lane.b32.xlu0 %v54, 96
    %v1138 = vpop.permute.xlu0 %1137
    %vm1139 = vcmp.lt.s32.totalorder %v72, 96
    %v1140 = vsel %vm1139, %v1124, %v1132
    %v1141 = vsel %vm1139, %v1126, %v1134
    %v1142 = vsel %vm1139, %v1128, %v1136
    %v1143 = vsel %vm1139, %v1130, %v1138
    %v1144 = vsel %vm1139, %v1132, %v1124
    %v1145 = vsel %vm1139, %v1134, %v1126
    %v1146 = vsel %vm1139, %v1136, %v1128
    %v1147 = vsel %vm1139, %v1138, %v1130
    %s1148 = scalar_lea.vmem %s1, 1408
    %v1149 = vld [vmem:[%s1148] sm:$0xff]
    %v1150 = vld [vmem:[%s1148 + $0x8] sm:$0xff]
    %v1151 = vld [vmem:[%s1148 + $0x10] sm:$0xff]
    %v1152 = vld [vmem:[%s1148 + $0x18] sm:$0xff]
    %v1153 = vld [vmem:[%s1148 + $0x20] sm:$0xff]
    %v1154 = vld [vmem:[%s1148 + $0x28] sm:$0xff]
    %v1155 = vld [vmem:[%s1148 + $0x30] sm:$0xff]
    %v1156 = vld [vmem:[%s1148 + $0x38] sm:$0xff]
    %v1157 = vmul.f32 %v1140, %v1149
    %v1158 = vmul.f32 %v1144, %v1150
    %v1159 = vmul.f32 %v1141, %v1151
    %v1160 = vmul.f32 %v1145, %v1152
    %v1161 = vmul.f32 %v1142, %v1153
    %v1162 = vmul.f32 %v1146, %v1154
    %v1163 = vmul.f32 %v1143, %v1155
    %v1164 = vmul.f32 %v1147, %v1156
    %v1165 = vadd.f32 %v1115, %v1157
    %v1166 = vadd.f32 %v1116, %v1158
    %v1167 = vadd.f32 %v1117, %v1159
    %v1168 = vadd.f32 %v1118, %v1160
    %v1169 = vadd.f32 %v1119, %v1161
    %v1170 = vadd.f32 %v1120, %v1162
    %v1171 = vadd.f32 %v1121, %v1163
    %v1172 = vadd.f32 %v1122, %v1164
    %1173 = vrot.lane.b32.xlu0 %v35, 95
    %v1174 = vpop.permute.xlu0 %1173
    %1175 = vrot.lane.b32.xlu0 %v41, 95
    %v1176 = vpop.permute.xlu0 %1175
    %1177 = vrot.lane.b32.xlu0 %v47, 95
    %v1178 = vpop.permute.xlu0 %1177
    %1179 = vrot.lane.b32.xlu0 %v53, 95
    %v1180 = vpop.permute.xlu0 %1179
    %1181 = vrot.lane.b32.xlu0 %v36, 95
    %v1182 = vpop.permute.xlu0 %1181
    %1183 = vrot.lane.b32.xlu0 %v42, 95
    %v1184 = vpop.permute.xlu0 %1183
    %1185 = vrot.lane.b32.xlu0 %v48, 95
    %v1186 = vpop.permute.xlu0 %1185
    %1187 = vrot.lane.b32.xlu0 %v54, 95
    %v1188 = vpop.permute.xlu0 %1187
    %vm1189 = vcmp.lt.s32.totalorder %v72, 95
    %v1190 = vsel %vm1189, %v1174, %v1182
    %v1191 = vsel %vm1189, %v1176, %v1184
    %v1192 = vsel %vm1189, %v1178, %v1186
    %v1193 = vsel %vm1189, %v1180, %v1188
    %v1194 = vsel %vm1189, %v1182, %v1174
    %v1195 = vsel %vm1189, %v1184, %v1176
    %v1196 = vsel %vm1189, %v1186, %v1178
    %v1197 = vsel %vm1189, %v1188, %v1180
    %s1198 = scalar_lea.vmem %s1, 1472
    %v1199 = vld [vmem:[%s1198] sm:$0xff]
    %v1200 = vld [vmem:[%s1198 + $0x8] sm:$0xff]
    %v1201 = vld [vmem:[%s1198 + $0x10] sm:$0xff]
    %v1202 = vld [vmem:[%s1198 + $0x18] sm:$0xff]
    %v1203 = vld [vmem:[%s1198 + $0x20] sm:$0xff]
    %v1204 = vld [vmem:[%s1198 + $0x28] sm:$0xff]
    %v1205 = vld [vmem:[%s1198 + $0x30] sm:$0xff]
    %v1206 = vld [vmem:[%s1198 + $0x38] sm:$0xff]
    %v1207 = vmul.f32 %v1190, %v1199
    %v1208 = vmul.f32 %v1194, %v1200
    %v1209 = vmul.f32 %v1191, %v1201
    %v1210 = vmul.f32 %v1195, %v1202
    %v1211 = vmul.f32 %v1192, %v1203
    %v1212 = vmul.f32 %v1196, %v1204
    %v1213 = vmul.f32 %v1193, %v1205
    %v1214 = vmul.f32 %v1197, %v1206
    %v1215 = vadd.f32 %v1165, %v1207
    %v1216 = vadd.f32 %v1166, %v1208
    %v1217 = vadd.f32 %v1167, %v1209
    %v1218 = vadd.f32 %v1168, %v1210
    %v1219 = vadd.f32 %v1169, %v1211
    %v1220 = vadd.f32 %v1170, %v1212
    %v1221 = vadd.f32 %v1171, %v1213
    %v1222 = vadd.f32 %v1172, %v1214
    %1223 = vrot.lane.b32.xlu0 %v35, 94
    %v1224 = vpop.permute.xlu0 %1223
    %1225 = vrot.lane.b32.xlu0 %v41, 94
    %v1226 = vpop.permute.xlu0 %1225
    %1227 = vrot.lane.b32.xlu0 %v47, 94
    %v1228 = vpop.permute.xlu0 %1227
    %1229 = vrot.lane.b32.xlu0 %v53, 94
    %v1230 = vpop.permute.xlu0 %1229
    %1231 = vrot.lane.b32.xlu0 %v36, 94
    %v1232 = vpop.permute.xlu0 %1231
    %1233 = vrot.lane.b32.xlu0 %v42, 94
    %v1234 = vpop.permute.xlu0 %1233
    %1235 = vrot.lane.b32.xlu0 %v48, 94
    %v1236 = vpop.permute.xlu0 %1235
    %1237 = vrot.lane.b32.xlu0 %v54, 94
    %v1238 = vpop.permute.xlu0 %1237
    %vm1239 = vcmp.lt.s32.totalorder %v72, 94
    %v1240 = vsel %vm1239, %v1224, %v1232
    %v1241 = vsel %vm1239, %v1226, %v1234
    %v1242 = vsel %vm1239, %v1228, %v1236
    %v1243 = vsel %vm1239, %v1230, %v1238
    %v1244 = vsel %vm1239, %v1232, %v1224
    %v1245 = vsel %vm1239, %v1234, %v1226
    %v1246 = vsel %vm1239, %v1236, %v1228
    %v1247 = vsel %vm1239, %v1238, %v1230
    %s1248 = scalar_lea.vmem %s1, 1536
    %v1249 = vld [vmem:[%s1248] sm:$0xff]
    %v1250 = vld [vmem:[%s1248 + $0x8] sm:$0xff]
    %v1251 = vld [vmem:[%s1248 + $0x10] sm:$0xff]
    %v1252 = vld [vmem:[%s1248 + $0x18] sm:$0xff]
    %v1253 = vld [vmem:[%s1248 + $0x20] sm:$0xff]
    %v1254 = vld [vmem:[%s1248 + $0x28] sm:$0xff]
    %v1255 = vld [vmem:[%s1248 + $0x30] sm:$0xff]
    %v1256 = vld [vmem:[%s1248 + $0x38] sm:$0xff]
    %v1257 = vmul.f32 %v1240, %v1249
    %v1258 = vmul.f32 %v1244, %v1250
    %v1259 = vmul.f32 %v1241, %v1251
    %v1260 = vmul.f32 %v1245, %v1252
    %v1261 = vmul.f32 %v1242, %v1253
    %v1262 = vmul.f32 %v1246, %v1254
    %v1263 = vmul.f32 %v1243, %v1255
    %v1264 = vmul.f32 %v1247, %v1256
    %v1265 = vadd.f32 %v1215, %v1257
    %v1266 = vadd.f32 %v1216, %v1258
    %v1267 = vadd.f32 %v1217, %v1259
    %v1268 = vadd.f32 %v1218, %v1260
    %v1269 = vadd.f32 %v1219, %v1261
    %v1270 = vadd.f32 %v1220, %v1262
    %v1271 = vadd.f32 %v1221, %v1263
    %v1272 = vadd.f32 %v1222, %v1264
    %v1273 = vadd.f32 %v1265, %v1267
    %v1274 = vadd.f32 %v1266, %v1268
    %v1275 = vadd.f32 %v1273, %v1269
    %v1276 = vadd.f32 %v1274, %v1270
    %v1277 = vadd.f32 %v1275, %v1271
    %v1278 = vadd.f32 %v1276, %v1272
    %v1279 = vmul.f32 %v1277, 0.1
    %v1280 = vmul.f32 %v1278, 0.1
    %v1281 = vmax.f32 %v1277, %v1279
    %v1282 = vmax.f32 %v1278, %v1280
    %v1285 = vrot.slane %v1281, 6
    %v1286 = vrot.slane %v1282, 6
    %v1289 = vrot.slane %v1281, 4
    %v1290 = vrot.slane %v1282, 4
    %v1293 = vrot.slane %v1281, 2
    %v1294 = vrot.slane %v1282, 2
    %v1297 = vsel %vm28, %v1281, %v1285
    %v1298 = vsel %vm28, %v1282, %v1286
    %v1299 = vsel %vm31, %v1297, %v1289
    %v1300 = vsel %vm31, %v1298, %v1290
    %v1301 = vsel %vm34, %v1299, %v1293
    %v1302 = vsel %vm34, %v1300, %v1294
    %v1303 = vsel %vm28, %v1293, %v1281
    %v1304 = vsel %vm28, %v1294, %v1282
    %v1305 = vsel %vm31, %v1303, %v1285
    %v1306 = vsel %vm31, %v1304, %v1286
    %v1307 = vsel %vm34, %v1305, %v1289
    %v1308 = vsel %vm34, %v1306, %v1290
    %v1309 = vsel %vm28, %v1289, %v1293
    %v1310 = vsel %vm28, %v1290, %v1294
    %v1311 = vsel %vm31, %v1309, %v1281
    %v1312 = vsel %vm31, %v1310, %v1282
    %v1313 = vsel %vm34, %v1311, %v1285
    %v1314 = vsel %vm34, %v1312, %v1286
    %v1315 = vsel %vm28, %v1285, %v1289
    %v1316 = vsel %vm28, %v1286, %v1290
    %v1317 = vsel %vm31, %v1315, %v1293
    %v1318 = vsel %vm31, %v1316, %v1294
    %v1319 = vsel %vm34, %v1317, %v1281
    %v1320 = vsel %vm34, %v1318, %v1282
    %1321 = vrot.lane.b32.xlu0 %v1301, 34
    %v1322 = vpop.permute.xlu0 %1321
    %1323 = vrot.lane.b32.xlu0 %v1307, 34
    %v1324 = vpop.permute.xlu0 %1323
    %1325 = vrot.lane.b32.xlu0 %v1313, 34
    %v1326 = vpop.permute.xlu0 %1325
    %1327 = vrot.lane.b32.xlu0 %v1319, 34
    %v1328 = vpop.permute.xlu0 %1327
    %1329 = vrot.lane.b32.xlu0 %v1302, 34
    %v1330 = vpop.permute.xlu0 %1329
    %1331 = vrot.lane.b32.xlu0 %v1308, 34
    %v1332 = vpop.permute.xlu0 %1331
    %1333 = vrot.lane.b32.xlu0 %v1314, 34
    %v1334 = vpop.permute.xlu0 %1333
    %1335 = vrot.lane.b32.xlu0 %v1320, 34
    %v1336 = vpop.permute.xlu0 %1335
    %v1337 = vsel %vm73, %v1322, %v1330
    %v1338 = vsel %vm73, %v1324, %v1332
    %v1339 = vsel %vm73, %v1326, %v1334
    %v1340 = vsel %vm73, %v1328, %v1336
    %v1341 = vsel %vm73, %v1330, %v1322
    %v1342 = vsel %vm73, %v1332, %v1324
    %v1343 = vsel %vm73, %v1334, %v1326
    %v1344 = vsel %vm73, %v1336, %v1328
    %v1345 = vmul.f32 %v1341, %v82
    %v1346 = vmul.f32 %v1337, %v83
    %v1347 = vmul.f32 %v1342, %v84
    %v1348 = vmul.f32 %v1338, %v85
    %v1349 = vmul.f32 %v1343, %v86
    %v1350 = vmul.f32 %v1339, %v87
    %v1351 = vmul.f32 %v1344, %v88
    %v1352 = vmul.f32 %v1340, %v89
    %1353 = vrot.lane.b32.xlu0 %v1301, 33
    %v1354 = vpop.permute.xlu0 %1353
    %1355 = vrot.lane.b32.xlu0 %v1307, 33
    %v1356 = vpop.permute.xlu0 %1355
    %1357 = vrot.lane.b32.xlu0 %v1313, 33
    %v1358 = vpop.permute.xlu0 %1357
    %1359 = vrot.lane.b32.xlu0 %v1319, 33
    %v1360 = vpop.permute.xlu0 %1359
    %1361 = vrot.lane.b32.xlu0 %v1302, 33
    %v1362 = vpop.permute.xlu0 %1361
    %1363 = vrot.lane.b32.xlu0 %v1308, 33
    %v1364 = vpop.permute.xlu0 %1363
    %1365 = vrot.lane.b32.xlu0 %v1314, 33
    %v1366 = vpop.permute.xlu0 %1365
    %1367 = vrot.lane.b32.xlu0 %v1320, 33
    %v1368 = vpop.permute.xlu0 %1367
    %v1369 = vsel %vm114, %v1354, %v1362
    %v1370 = vsel %vm114, %v1356, %v1364
    %v1371 = vsel %vm114, %v1358, %v1366
    %v1372 = vsel %vm114, %v1360, %v1368
    %v1373 = vsel %vm114, %v1362, %v1354
    %v1374 = vsel %vm114, %v1364, %v1356
    %v1375 = vsel %vm114, %v1366, %v1358
    %v1376 = vsel %vm114, %v1368, %v1360
    %v1377 = vmul.f32 %v1373, %v124
    %v1378 = vmul.f32 %v1369, %v125
    %v1379 = vmul.f32 %v1374, %v126
    %v1380 = vmul.f32 %v1370, %v127
    %v1381 = vmul.f32 %v1375, %v128
    %v1382 = vmul.f32 %v1371, %v129
    %v1383 = vmul.f32 %v1376, %v130
    %v1384 = vmul.f32 %v1372, %v131
    %v1385 = vadd.f32 %v1345, %v1377
    %v1386 = vadd.f32 %v1346, %v1378
    %v1387 = vadd.f32 %v1347, %v1379
    %v1388 = vadd.f32 %v1348, %v1380
    %v1389 = vadd.f32 %v1349, %v1381
    %v1390 = vadd.f32 %v1350, %v1382
    %v1391 = vadd.f32 %v1351, %v1383
    %v1392 = vadd.f32 %v1352, %v1384
    %1393 = vrot.lane.b32.xlu0 %v1301, 32
    %v1394 = vpop.permute.xlu0 %1393
    %1395 = vrot.lane.b32.xlu0 %v1307, 32
    %v1396 = vpop.permute.xlu0 %1395
    %1397 = vrot.lane.b32.xlu0 %v1313, 32
    %v1398 = vpop.permute.xlu0 %1397
    %1399 = vrot.lane.b32.xlu0 %v1319, 32
    %v1400 = vpop.permute.xlu0 %1399
    %1401 = vrot.lane.b32.xlu0 %v1302, 32
    %v1402 = vpop.permute.xlu0 %1401
    %1403 = vrot.lane.b32.xlu0 %v1308, 32
    %v1404 = vpop.permute.xlu0 %1403
    %1405 = vrot.lane.b32.xlu0 %v1314, 32
    %v1406 = vpop.permute.xlu0 %1405
    %1407 = vrot.lane.b32.xlu0 %v1320, 32
    %v1408 = vpop.permute.xlu0 %1407
    %v1409 = vsel %vm164, %v1394, %v1402
    %v1410 = vsel %vm164, %v1396, %v1404
    %v1411 = vsel %vm164, %v1398, %v1406
    %v1412 = vsel %vm164, %v1400, %v1408
    %v1413 = vsel %vm164, %v1402, %v1394
    %v1414 = vsel %vm164, %v1404, %v1396
    %v1415 = vsel %vm164, %v1406, %v1398
    %v1416 = vsel %vm164, %v1408, %v1400
    %v1417 = vmul.f32 %v1413, %v174
    %v1418 = vmul.f32 %v1409, %v175
    %v1419 = vmul.f32 %v1414, %v176
    %v1420 = vmul.f32 %v1410, %v177
    %v1421 = vmul.f32 %v1415, %v178
    %v1422 = vmul.f32 %v1411, %v179
    %v1423 = vmul.f32 %v1416, %v180
    %v1424 = vmul.f32 %v1412, %v181
    %v1425 = vadd.f32 %v1385, %v1417
    %v1426 = vadd.f32 %v1386, %v1418
    %v1427 = vadd.f32 %v1387, %v1419
    %v1428 = vadd.f32 %v1388, %v1420
    %v1429 = vadd.f32 %v1389, %v1421
    %v1430 = vadd.f32 %v1390, %v1422
    %v1431 = vadd.f32 %v1391, %v1423
    %v1432 = vadd.f32 %v1392, %v1424
    %1433 = vrot.lane.b32.xlu0 %v1301, 31
    %v1434 = vpop.permute.xlu0 %1433
    %1435 = vrot.lane.b32.xlu0 %v1307, 31
    %v1436 = vpop.permute.xlu0 %1435
    %1437 = vrot.lane.b32.xlu0 %v1313, 31
    %v1438 = vpop.permute.xlu0 %1437
    %1439 = vrot.lane.b32.xlu0 %v1319, 31
    %v1440 = vpop.permute.xlu0 %1439
    %1441 = vrot.lane.b32.xlu0 %v1302, 31
    %v1442 = vpop.permute.xlu0 %1441
    %1443 = vrot.lane.b32.xlu0 %v1308, 31
    %v1444 = vpop.permute.xlu0 %1443
    %1445 = vrot.lane.b32.xlu0 %v1314, 31
    %v1446 = vpop.permute.xlu0 %1445
    %1447 = vrot.lane.b32.xlu0 %v1320, 31
    %v1448 = vpop.permute.xlu0 %1447
    %v1449 = vsel %vm214, %v1434, %v1442
    %v1450 = vsel %vm214, %v1436, %v1444
    %v1451 = vsel %vm214, %v1438, %v1446
    %v1452 = vsel %vm214, %v1440, %v1448
    %v1453 = vsel %vm214, %v1442, %v1434
    %v1454 = vsel %vm214, %v1444, %v1436
    %v1455 = vsel %vm214, %v1446, %v1438
    %v1456 = vsel %vm214, %v1448, %v1440
    %v1457 = vmul.f32 %v1453, %v224
    %v1458 = vmul.f32 %v1449, %v225
    %v1459 = vmul.f32 %v1454, %v226
    %v1460 = vmul.f32 %v1450, %v227
    %v1461 = vmul.f32 %v1455, %v228
    %v1462 = vmul.f32 %v1451, %v229
    %v1463 = vmul.f32 %v1456, %v230
    %v1464 = vmul.f32 %v1452, %v231
    %v1465 = vadd.f32 %v1425, %v1457
    %v1466 = vadd.f32 %v1426, %v1458
    %v1467 = vadd.f32 %v1427, %v1459
    %v1468 = vadd.f32 %v1428, %v1460
    %v1469 = vadd.f32 %v1429, %v1461
    %v1470 = vadd.f32 %v1430, %v1462
    %v1471 = vadd.f32 %v1431, %v1463
    %v1472 = vadd.f32 %v1432, %v1464
    %1473 = vrot.lane.b32.xlu0 %v1301, 30
    %v1474 = vpop.permute.xlu0 %1473
    %1475 = vrot.lane.b32.xlu0 %v1307, 30
    %v1476 = vpop.permute.xlu0 %1475
    %1477 = vrot.lane.b32.xlu0 %v1313, 30
    %v1478 = vpop.permute.xlu0 %1477
    %1479 = vrot.lane.b32.xlu0 %v1319, 30
    %v1480 = vpop.permute.xlu0 %1479
    %1481 = vrot.lane.b32.xlu0 %v1302, 30
    %v1482 = vpop.permute.xlu0 %1481
    %1483 = vrot.lane.b32.xlu0 %v1308, 30
    %v1484 = vpop.permute.xlu0 %1483
    %1485 = vrot.lane.b32.xlu0 %v1314, 30
    %v1486 = vpop.permute.xlu0 %1485
    %1487 = vrot.lane.b32.xlu0 %v1320, 30
    %v1488 = vpop.permute.xlu0 %1487
    %v1489 = vsel %vm264, %v1474, %v1482
    %v1490 = vsel %vm264, %v1476, %v1484
    %v1491 = vsel %vm264, %v1478, %v1486
    %v1492 = vsel %vm264, %v1480, %v1488
    %v1493 = vsel %vm264, %v1482, %v1474
    %v1494 = vsel %vm264, %v1484, %v1476
    %v1495 = vsel %vm264, %v1486, %v1478
    %v1496 = vsel %vm264, %v1488, %v1480
    %v1497 = vmul.f32 %v1493, %v274
    %v1498 = vmul.f32 %v1489, %v275
    %v1499 = vmul.f32 %v1494, %v276
    %v1500 = vmul.f32 %v1490, %v277
    %v1501 = vmul.f32 %v1495, %v278
    %v1502 = vmul.f32 %v1491, %v279
    %v1503 = vmul.f32 %v1496, %v280
    %v1504 = vmul.f32 %v1492, %v281
    %v1505 = vadd.f32 %v1465, %v1497
    %v1506 = vadd.f32 %v1466, %v1498
    %v1507 = vadd.f32 %v1467, %v1499
    %v1508 = vadd.f32 %v1468, %v1500
    %v1509 = vadd.f32 %v1469, %v1501
    %v1510 = vadd.f32 %v1470, %v1502
    %v1511 = vadd.f32 %v1471, %v1503
    %v1512 = vadd.f32 %v1472, %v1504
    %1513 = vrot.lane.b32.xlu0 %v1301, 18
    %v1514 = vpop.permute.xlu0 %1513
    %1515 = vrot.lane.b32.xlu0 %v1307, 18
    %v1516 = vpop.permute.xlu0 %1515
    %1517 = vrot.lane.b32.xlu0 %v1313, 18
    %v1518 = vpop.permute.xlu0 %1517
    %1519 = vrot.lane.b32.xlu0 %v1319, 18
    %v1520 = vpop.permute.xlu0 %1519
    %1521 = vrot.lane.b32.xlu0 %v1302, 18
    %v1522 = vpop.permute.xlu0 %1521
    %1523 = vrot.lane.b32.xlu0 %v1308, 18
    %v1524 = vpop.permute.xlu0 %1523
    %1525 = vrot.lane.b32.xlu0 %v1314, 18
    %v1526 = vpop.permute.xlu0 %1525
    %1527 = vrot.lane.b32.xlu0 %v1320, 18
    %v1528 = vpop.permute.xlu0 %1527
    %v1529 = vsel %vm314, %v1514, %v1522
    %v1530 = vsel %vm314, %v1516, %v1524
    %v1531 = vsel %vm314, %v1518, %v1526
    %v1532 = vsel %vm314, %v1520, %v1528
    %v1533 = vsel %vm314, %v1522, %v1514
    %v1534 = vsel %vm314, %v1524, %v1516
    %v1535 = vsel %vm314, %v1526, %v1518
    %v1536 = vsel %vm314, %v1528, %v1520
    %v1537 = vmul.f32 %v1533, %v324
    %v1538 = vmul.f32 %v1529, %v325
    %v1539 = vmul.f32 %v1534, %v326
    %v1540 = vmul.f32 %v1530, %v327
    %v1541 = vmul.f32 %v1535, %v328
    %v1542 = vmul.f32 %v1531, %v329
    %v1543 = vmul.f32 %v1536, %v330
    %v1544 = vmul.f32 %v1532, %v331
    %v1545 = vadd.f32 %v1505, %v1537
    %v1546 = vadd.f32 %v1506, %v1538
    %v1547 = vadd.f32 %v1507, %v1539
    %v1548 = vadd.f32 %v1508, %v1540
    %v1549 = vadd.f32 %v1509, %v1541
    %v1550 = vadd.f32 %v1510, %v1542
    %v1551 = vadd.f32 %v1511, %v1543
    %v1552 = vadd.f32 %v1512, %v1544
    %1553 = vrot.lane.b32.xlu0 %v1301, 17
    %v1554 = vpop.permute.xlu0 %1553
    %1555 = vrot.lane.b32.xlu0 %v1307, 17
    %v1556 = vpop.permute.xlu0 %1555
    %1557 = vrot.lane.b32.xlu0 %v1313, 17
    %v1558 = vpop.permute.xlu0 %1557
    %1559 = vrot.lane.b32.xlu0 %v1319, 17
    %v1560 = vpop.permute.xlu0 %1559
    %1561 = vrot.lane.b32.xlu0 %v1302, 17
    %v1562 = vpop.permute.xlu0 %1561
    %1563 = vrot.lane.b32.xlu0 %v1308, 17
    %v1564 = vpop.permute.xlu0 %1563
    %1565 = vrot.lane.b32.xlu0 %v1314, 17
    %v1566 = vpop.permute.xlu0 %1565
    %1567 = vrot.lane.b32.xlu0 %v1320, 17
    %v1568 = vpop.permute.xlu0 %1567
    %v1569 = vsel %vm364, %v1554, %v1562
    %v1570 = vsel %vm364, %v1556, %v1564
    %v1571 = vsel %vm364, %v1558, %v1566
    %v1572 = vsel %vm364, %v1560, %v1568
    %v1573 = vsel %vm364, %v1562, %v1554
    %v1574 = vsel %vm364, %v1564, %v1556
    %v1575 = vsel %vm364, %v1566, %v1558
    %v1576 = vsel %vm364, %v1568, %v1560
    %v1577 = vmul.f32 %v1573, %v374
    %v1578 = vmul.f32 %v1569, %v375
    %v1579 = vmul.f32 %v1574, %v376
    %v1580 = vmul.f32 %v1570, %v377
    %v1581 = vmul.f32 %v1575, %v378
    %v1582 = vmul.f32 %v1571, %v379
    %v1583 = vmul.f32 %v1576, %v380
    %v1584 = vmul.f32 %v1572, %v381
    %v1585 = vadd.f32 %v1545, %v1577
    %v1586 = vadd.f32 %v1546, %v1578
    %v1587 = vadd.f32 %v1547, %v1579
    %v1588 = vadd.f32 %v1548, %v1580
    %v1589 = vadd.f32 %v1549, %v1581
    %v1590 = vadd.f32 %v1550, %v1582
    %v1591 = vadd.f32 %v1551, %v1583
    %v1592 = vadd.f32 %v1552, %v1584
    %1593 = vrot.lane.b32.xlu0 %v1301, 16
    %v1594 = vpop.permute.xlu0 %1593
    %1595 = vrot.lane.b32.xlu0 %v1307, 16
    %v1596 = vpop.permute.xlu0 %1595
    %1597 = vrot.lane.b32.xlu0 %v1313, 16
    %v1598 = vpop.permute.xlu0 %1597
    %1599 = vrot.lane.b32.xlu0 %v1319, 16
    %v1600 = vpop.permute.xlu0 %1599
    %1601 = vrot.lane.b32.xlu0 %v1302, 16
    %v1602 = vpop.permute.xlu0 %1601
    %1603 = vrot.lane.b32.xlu0 %v1308, 16
    %v1604 = vpop.permute.xlu0 %1603
    %1605 = vrot.lane.b32.xlu0 %v1314, 16
    %v1606 = vpop.permute.xlu0 %1605
    %1607 = vrot.lane.b32.xlu0 %v1320, 16
    %v1608 = vpop.permute.xlu0 %1607
    %v1609 = vsel %vm414, %v1594, %v1602
    %v1610 = vsel %vm414, %v1596, %v1604
    %v1611 = vsel %vm414, %v1598, %v1606
    %v1612 = vsel %vm414, %v1600, %v1608
    %v1613 = vsel %vm414, %v1602, %v1594
    %v1614 = vsel %vm414, %v1604, %v1596
    %v1615 = vsel %vm414, %v1606, %v1598
    %v1616 = vsel %vm414, %v1608, %v1600
    %v1617 = vmul.f32 %v1613, %v424
    %v1618 = vmul.f32 %v1609, %v425
    %v1619 = vmul.f32 %v1614, %v426
    %v1620 = vmul.f32 %v1610, %v427
    %v1621 = vmul.f32 %v1615, %v428
    %v1622 = vmul.f32 %v1611, %v429
    %v1623 = vmul.f32 %v1616, %v430
    %v1624 = vmul.f32 %v1612, %v431
    %v1625 = vadd.f32 %v1585, %v1617
    %v1626 = vadd.f32 %v1586, %v1618
    %v1627 = vadd.f32 %v1587, %v1619
    %v1628 = vadd.f32 %v1588, %v1620
    %v1629 = vadd.f32 %v1589, %v1621
    %v1630 = vadd.f32 %v1590, %v1622
    %v1631 = vadd.f32 %v1591, %v1623
    %v1632 = vadd.f32 %v1592, %v1624
    %1633 = vrot.lane.b32.xlu0 %v1301, 15
    %v1634 = vpop.permute.xlu0 %1633
    %1635 = vrot.lane.b32.xlu0 %v1307, 15
    %v1636 = vpop.permute.xlu0 %1635
    %1637 = vrot.lane.b32.xlu0 %v1313, 15
    %v1638 = vpop.permute.xlu0 %1637
    %1639 = vrot.lane.b32.xlu0 %v1319, 15
    %v1640 = vpop.permute.xlu0 %1639
    %1641 = vrot.lane.b32.xlu0 %v1302, 15
    %v1642 = vpop.permute.xlu0 %1641
    %1643 = vrot.lane.b32.xlu0 %v1308, 15
    %v1644 = vpop.permute.xlu0 %1643
    %1645 = vrot.lane.b32.xlu0 %v1314, 15
    %v1646 = vpop.permute.xlu0 %1645
    %1647 = vrot.lane.b32.xlu0 %v1320, 15
    %v1648 = vpop.permute.xlu0 %1647
    %v1649 = vsel %vm464, %v1634, %v1642
    %v1650 = vsel %vm464, %v1636, %v1644
    %v1651 = vsel %vm464, %v1638, %v1646
    %v1652 = vsel %vm464, %v1640, %v1648
    %v1653 = vsel %vm464, %v1642, %v1634
    %v1654 = vsel %vm464, %v1644, %v1636
    %v1655 = vsel %vm464, %v1646, %v1638
    %v1656 = vsel %vm464, %v1648, %v1640
    %v1657 = vmul.f32 %v1653, %v474
    %v1658 = vmul.f32 %v1649, %v475
    %v1659 = vmul.f32 %v1654, %v476
    %v1660 = vmul.f32 %v1650, %v477
    %v1661 = vmul.f32 %v1655, %v478
    %v1662 = vmul.f32 %v1651, %v479
    %v1663 = vmul.f32 %v1656, %v480
    %v1664 = vmul.f32 %v1652, %v481
    %v1665 = vadd.f32 %v1625, %v1657
    %v1666 = vadd.f32 %v1626, %v1658
    %v1667 = vadd.f32 %v1627, %v1659
    %v1668 = vadd.f32 %v1628, %v1660
    %v1669 = vadd.f32 %v1629, %v1661
    %v1670 = vadd.f32 %v1630, %v1662
    %v1671 = vadd.f32 %v1631, %v1663
    %v1672 = vadd.f32 %v1632, %v1664
    %1673 = vrot.lane.b32.xlu0 %v1301, 14
    %v1674 = vpop.permute.xlu0 %1673
    %1675 = vrot.lane.b32.xlu0 %v1307, 14
    %v1676 = vpop.permute.xlu0 %1675
    %1677 = vrot.lane.b32.xlu0 %v1313, 14
    %v1678 = vpop.permute.xlu0 %1677
    %1679 = vrot.lane.b32.xlu0 %v1319, 14
    %v1680 = vpop.permute.xlu0 %1679
    %1681 = vrot.lane.b32.xlu0 %v1302, 14
    %v1682 = vpop.permute.xlu0 %1681
    %1683 = vrot.lane.b32.xlu0 %v1308, 14
    %v1684 = vpop.permute.xlu0 %1683
    %1685 = vrot.lane.b32.xlu0 %v1314, 14
    %v1686 = vpop.permute.xlu0 %1685
    %1687 = vrot.lane.b32.xlu0 %v1320, 14
    %v1688 = vpop.permute.xlu0 %1687
    %v1689 = vsel %vm514, %v1674, %v1682
    %v1690 = vsel %vm514, %v1676, %v1684
    %v1691 = vsel %vm514, %v1678, %v1686
    %v1692 = vsel %vm514, %v1680, %v1688
    %v1693 = vsel %vm514, %v1682, %v1674
    %v1694 = vsel %vm514, %v1684, %v1676
    %v1695 = vsel %vm514, %v1686, %v1678
    %v1696 = vsel %vm514, %v1688, %v1680
    %v1697 = vmul.f32 %v1693, %v524
    %v1698 = vmul.f32 %v1689, %v525
    %v1699 = vmul.f32 %v1694, %v526
    %v1700 = vmul.f32 %v1690, %v527
    %v1701 = vmul.f32 %v1695, %v528
    %v1702 = vmul.f32 %v1691, %v529
    %v1703 = vmul.f32 %v1696, %v530
    %v1704 = vmul.f32 %v1692, %v531
    %v1705 = vadd.f32 %v1665, %v1697
    %v1706 = vadd.f32 %v1666, %v1698
    %v1707 = vadd.f32 %v1667, %v1699
    %v1708 = vadd.f32 %v1668, %v1700
    %v1709 = vadd.f32 %v1669, %v1701
    %v1710 = vadd.f32 %v1670, %v1702
    %v1711 = vadd.f32 %v1671, %v1703
    %v1712 = vadd.f32 %v1672, %v1704
    %1713 = vrot.lane.b32.xlu0 %v1301, 2
    %v1714 = vpop.permute.xlu0 %1713
    %1715 = vrot.lane.b32.xlu0 %v1307, 2
    %v1716 = vpop.permute.xlu0 %1715
    %1717 = vrot.lane.b32.xlu0 %v1313, 2
    %v1718 = vpop.permute.xlu0 %1717
    %1719 = vrot.lane.b32.xlu0 %v1319, 2
    %v1720 = vpop.permute.xlu0 %1719
    %1721 = vrot.lane.b32.xlu0 %v1302, 2
    %v1722 = vpop.permute.xlu0 %1721
    %1723 = vrot.lane.b32.xlu0 %v1308, 2
    %v1724 = vpop.permute.xlu0 %1723
    %1725 = vrot.lane.b32.xlu0 %v1314, 2
    %v1726 = vpop.permute.xlu0 %1725
    %1727 = vrot.lane.b32.xlu0 %v1320, 2
    %v1728 = vpop.permute.xlu0 %1727
    %v1729 = vsel %vm564, %v1714, %v1722
    %v1730 = vsel %vm564, %v1716, %v1724
    %v1731 = vsel %vm564, %v1718, %v1726
    %v1732 = vsel %vm564, %v1720, %v1728
    %v1733 = vsel %vm564, %v1722, %v1714
    %v1734 = vsel %vm564, %v1724, %v1716
    %v1735 = vsel %vm564, %v1726, %v1718
    %v1736 = vsel %vm564, %v1728, %v1720
    %v1737 = vmul.f32 %v1733, %v574
    %v1738 = vmul.f32 %v1729, %v575
    %v1739 = vmul.f32 %v1734, %v576
    %v1740 = vmul.f32 %v1730, %v577
    %v1741 = vmul.f32 %v1735, %v578
    %v1742 = vmul.f32 %v1731, %v579
    %v1743 = vmul.f32 %v1736, %v580
    %v1744 = vmul.f32 %v1732, %v581
    %v1745 = vadd.f32 %v1705, %v1737
    %v1746 = vadd.f32 %v1706, %v1738
    %v1747 = vadd.f32 %v1707, %v1739
    %v1748 = vadd.f32 %v1708, %v1740
    %v1749 = vadd.f32 %v1709, %v1741
    %v1750 = vadd.f32 %v1710, %v1742
    %v1751 = vadd.f32 %v1711, %v1743
    %v1752 = vadd.f32 %v1712, %v1744
    %1753 = vrot.lane.b32.xlu0 %v1301, 1
    %v1754 = vpop.permute.xlu0 %1753
    %1755 = vrot.lane.b32.xlu0 %v1307, 1
    %v1756 = vpop.permute.xlu0 %1755
    %1757 = vrot.lane.b32.xlu0 %v1313, 1
    %v1758 = vpop.permute.xlu0 %1757
    %1759 = vrot.lane.b32.xlu0 %v1319, 1
    %v1760 = vpop.permute.xlu0 %1759
    %1761 = vrot.lane.b32.xlu0 %v1302, 1
    %v1762 = vpop.permute.xlu0 %1761
    %1763 = vrot.lane.b32.xlu0 %v1308, 1
    %v1764 = vpop.permute.xlu0 %1763
    %1765 = vrot.lane.b32.xlu0 %v1314, 1
    %v1766 = vpop.permute.xlu0 %1765
    %1767 = vrot.lane.b32.xlu0 %v1320, 1
    %v1768 = vpop.permute.xlu0 %1767
    %v1769 = vsel %vm614, %v1754, %v1762
    %v1770 = vsel %vm614, %v1756, %v1764
    %v1771 = vsel %vm614, %v1758, %v1766
    %v1772 = vsel %vm614, %v1760, %v1768
    %v1773 = vsel %vm614, %v1762, %v1754
    %v1774 = vsel %vm614, %v1764, %v1756
    %v1775 = vsel %vm614, %v1766, %v1758
    %v1776 = vsel %vm614, %v1768, %v1760
    %v1777 = vmul.f32 %v1773, %v624
    %v1778 = vmul.f32 %v1769, %v625
    %v1779 = vmul.f32 %v1774, %v626
    %v1780 = vmul.f32 %v1770, %v627
    %v1781 = vmul.f32 %v1775, %v628
    %v1782 = vmul.f32 %v1771, %v629
    %v1783 = vmul.f32 %v1776, %v630
    %v1784 = vmul.f32 %v1772, %v631
    %v1785 = vadd.f32 %v1745, %v1777
    %v1786 = vadd.f32 %v1746, %v1778
    %v1787 = vadd.f32 %v1747, %v1779
    %v1788 = vadd.f32 %v1748, %v1780
    %v1789 = vadd.f32 %v1749, %v1781
    %v1790 = vadd.f32 %v1750, %v1782
    %v1791 = vadd.f32 %v1751, %v1783
    %v1792 = vadd.f32 %v1752, %v1784
    %v1793 = vmul.f32 %v1301, %v649
    %v1794 = vmul.f32 %v1302, %v650
    %v1795 = vmul.f32 %v1307, %v651
    %v1796 = vmul.f32 %v1308, %v652
    %v1797 = vmul.f32 %v1313, %v653
    %v1798 = vmul.f32 %v1314, %v654
    %v1799 = vmul.f32 %v1319, %v655
    %v1800 = vmul.f32 %v1320, %v656
    %v1801 = vadd.f32 %v1785, %v1793
    %v1802 = vadd.f32 %v1786, %v1794
    %v1803 = vadd.f32 %v1787, %v1795
    %v1804 = vadd.f32 %v1788, %v1796
    %v1805 = vadd.f32 %v1789, %v1797
    %v1806 = vadd.f32 %v1790, %v1798
    %v1807 = vadd.f32 %v1791, %v1799
    %v1808 = vadd.f32 %v1792, %v1800
    %1809 = vrot.lane.b32.xlu0 %v1301, 127
    %v1810 = vpop.permute.xlu0 %1809
    %1811 = vrot.lane.b32.xlu0 %v1307, 127
    %v1812 = vpop.permute.xlu0 %1811
    %1813 = vrot.lane.b32.xlu0 %v1313, 127
    %v1814 = vpop.permute.xlu0 %1813
    %1815 = vrot.lane.b32.xlu0 %v1319, 127
    %v1816 = vpop.permute.xlu0 %1815
    %1817 = vrot.lane.b32.xlu0 %v1302, 127
    %v1818 = vpop.permute.xlu0 %1817
    %1819 = vrot.lane.b32.xlu0 %v1308, 127
    %v1820 = vpop.permute.xlu0 %1819
    %1821 = vrot.lane.b32.xlu0 %v1314, 127
    %v1822 = vpop.permute.xlu0 %1821
    %1823 = vrot.lane.b32.xlu0 %v1320, 127
    %v1824 = vpop.permute.xlu0 %1823
    %v1825 = vsel %vm689, %v1810, %v1818
    %v1826 = vsel %vm689, %v1812, %v1820
    %v1827 = vsel %vm689, %v1814, %v1822
    %v1828 = vsel %vm689, %v1816, %v1824
    %v1829 = vsel %vm689, %v1818, %v1810
    %v1830 = vsel %vm689, %v1820, %v1812
    %v1831 = vsel %vm689, %v1822, %v1814
    %v1832 = vsel %vm689, %v1824, %v1816
    %v1833 = vmul.f32 %v1825, %v699
    %v1834 = vmul.f32 %v1829, %v700
    %v1835 = vmul.f32 %v1826, %v701
    %v1836 = vmul.f32 %v1830, %v702
    %v1837 = vmul.f32 %v1827, %v703
    %v1838 = vmul.f32 %v1831, %v704
    %v1839 = vmul.f32 %v1828, %v705
    %v1840 = vmul.f32 %v1832, %v706
    %v1841 = vadd.f32 %v1801, %v1833
    %v1842 = vadd.f32 %v1802, %v1834
    %v1843 = vadd.f32 %v1803, %v1835
    %v1844 = vadd.f32 %v1804, %v1836
    %v1845 = vadd.f32 %v1805, %v1837
    %v1846 = vadd.f32 %v1806, %v1838
    %v1847 = vadd.f32 %v1807, %v1839
    %v1848 = vadd.f32 %v1808, %v1840
    %1849 = vrot.lane.b32.xlu0 %v1301, 126
    %v1850 = vpop.permute.xlu0 %1849
    %1851 = vrot.lane.b32.xlu0 %v1307, 126
    %v1852 = vpop.permute.xlu0 %1851
    %1853 = vrot.lane.b32.xlu0 %v1313, 126
    %v1854 = vpop.permute.xlu0 %1853
    %1855 = vrot.lane.b32.xlu0 %v1319, 126
    %v1856 = vpop.permute.xlu0 %1855
    %1857 = vrot.lane.b32.xlu0 %v1302, 126
    %v1858 = vpop.permute.xlu0 %1857
    %1859 = vrot.lane.b32.xlu0 %v1308, 126
    %v1860 = vpop.permute.xlu0 %1859
    %1861 = vrot.lane.b32.xlu0 %v1314, 126
    %v1862 = vpop.permute.xlu0 %1861
    %1863 = vrot.lane.b32.xlu0 %v1320, 126
    %v1864 = vpop.permute.xlu0 %1863
    %v1865 = vsel %vm739, %v1850, %v1858
    %v1866 = vsel %vm739, %v1852, %v1860
    %v1867 = vsel %vm739, %v1854, %v1862
    %v1868 = vsel %vm739, %v1856, %v1864
    %v1869 = vsel %vm739, %v1858, %v1850
    %v1870 = vsel %vm739, %v1860, %v1852
    %v1871 = vsel %vm739, %v1862, %v1854
    %v1872 = vsel %vm739, %v1864, %v1856
    %v1873 = vmul.f32 %v1865, %v749
    %v1874 = vmul.f32 %v1869, %v750
    %v1875 = vmul.f32 %v1866, %v751
    %v1876 = vmul.f32 %v1870, %v752
    %v1877 = vmul.f32 %v1867, %v753
    %v1878 = vmul.f32 %v1871, %v754
    %v1879 = vmul.f32 %v1868, %v755
    %v1880 = vmul.f32 %v1872, %v756
    %v1881 = vadd.f32 %v1841, %v1873
    %v1882 = vadd.f32 %v1842, %v1874
    %v1883 = vadd.f32 %v1843, %v1875
    %v1884 = vadd.f32 %v1844, %v1876
    %v1885 = vadd.f32 %v1845, %v1877
    %v1886 = vadd.f32 %v1846, %v1878
    %v1887 = vadd.f32 %v1847, %v1879
    %v1888 = vadd.f32 %v1848, %v1880
    %1889 = vrot.lane.b32.xlu0 %v1301, 114
    %v1890 = vpop.permute.xlu0 %1889
    %1891 = vrot.lane.b32.xlu0 %v1307, 114
    %v1892 = vpop.permute.xlu0 %1891
    %1893 = vrot.lane.b32.xlu0 %v1313, 114
    %v1894 = vpop.permute.xlu0 %1893
    %1895 = vrot.lane.b32.xlu0 %v1319, 114
    %v1896 = vpop.permute.xlu0 %1895
    %1897 = vrot.lane.b32.xlu0 %v1302, 114
    %v1898 = vpop.permute.xlu0 %1897
    %1899 = vrot.lane.b32.xlu0 %v1308, 114
    %v1900 = vpop.permute.xlu0 %1899
    %1901 = vrot.lane.b32.xlu0 %v1314, 114
    %v1902 = vpop.permute.xlu0 %1901
    %1903 = vrot.lane.b32.xlu0 %v1320, 114
    %v1904 = vpop.permute.xlu0 %1903
    %v1905 = vsel %vm789, %v1890, %v1898
    %v1906 = vsel %vm789, %v1892, %v1900
    %v1907 = vsel %vm789, %v1894, %v1902
    %v1908 = vsel %vm789, %v1896, %v1904
    %v1909 = vsel %vm789, %v1898, %v1890
    %v1910 = vsel %vm789, %v1900, %v1892
    %v1911 = vsel %vm789, %v1902, %v1894
    %v1912 = vsel %vm789, %v1904, %v1896
    %v1913 = vmul.f32 %v1905, %v799
    %v1914 = vmul.f32 %v1909, %v800
    %v1915 = vmul.f32 %v1906, %v801
    %v1916 = vmul.f32 %v1910, %v802
    %v1917 = vmul.f32 %v1907, %v803
    %v1918 = vmul.f32 %v1911, %v804
    %v1919 = vmul.f32 %v1908, %v805
    %v1920 = vmul.f32 %v1912, %v806
    %v1921 = vadd.f32 %v1881, %v1913
    %v1922 = vadd.f32 %v1882, %v1914
    %v1923 = vadd.f32 %v1883, %v1915
    %v1924 = vadd.f32 %v1884, %v1916
    %v1925 = vadd.f32 %v1885, %v1917
    %v1926 = vadd.f32 %v1886, %v1918
    %v1927 = vadd.f32 %v1887, %v1919
    %v1928 = vadd.f32 %v1888, %v1920
    %1929 = vrot.lane.b32.xlu0 %v1301, 113
    %v1930 = vpop.permute.xlu0 %1929
    %1931 = vrot.lane.b32.xlu0 %v1307, 113
    %v1932 = vpop.permute.xlu0 %1931
    %1933 = vrot.lane.b32.xlu0 %v1313, 113
    %v1934 = vpop.permute.xlu0 %1933
    %1935 = vrot.lane.b32.xlu0 %v1319, 113
    %v1936 = vpop.permute.xlu0 %1935
    %1937 = vrot.lane.b32.xlu0 %v1302, 113
    %v1938 = vpop.permute.xlu0 %1937
    %1939 = vrot.lane.b32.xlu0 %v1308, 113
    %v1940 = vpop.permute.xlu0 %1939
    %1941 = vrot.lane.b32.xlu0 %v1314, 113
    %v1942 = vpop.permute.xlu0 %1941
    %1943 = vrot.lane.b32.xlu0 %v1320, 113
    %v1944 = vpop.permute.xlu0 %1943
    %v1945 = vsel %vm839, %v1930, %v1938
    %v1946 = vsel %vm839, %v1932, %v1940
    %v1947 = vsel %vm839, %v1934, %v1942
    %v1948 = vsel %vm839, %v1936, %v1944
    %v1949 = vsel %vm839, %v1938, %v1930
    %v1950 = vsel %vm839, %v1940, %v1932
    %v1951 = vsel %vm839, %v1942, %v1934
    %v1952 = vsel %vm839, %v1944, %v1936
    %v1953 = vmul.f32 %v1945, %v849
    %v1954 = vmul.f32 %v1949, %v850
    %v1955 = vmul.f32 %v1946, %v851
    %v1956 = vmul.f32 %v1950, %v852
    %v1957 = vmul.f32 %v1947, %v853
    %v1958 = vmul.f32 %v1951, %v854
    %v1959 = vmul.f32 %v1948, %v855
    %v1960 = vmul.f32 %v1952, %v856
    %v1961 = vadd.f32 %v1921, %v1953
    %v1962 = vadd.f32 %v1922, %v1954
    %v1963 = vadd.f32 %v1923, %v1955
    %v1964 = vadd.f32 %v1924, %v1956
    %v1965 = vadd.f32 %v1925, %v1957
    %v1966 = vadd.f32 %v1926, %v1958
    %v1967 = vadd.f32 %v1927, %v1959
    %v1968 = vadd.f32 %v1928, %v1960
    %1969 = vrot.lane.b32.xlu0 %v1301, 112
    %v1970 = vpop.permute.xlu0 %1969
    %1971 = vrot.lane.b32.xlu0 %v1307, 112
    %v1972 = vpop.permute.xlu0 %1971
    %1973 = vrot.lane.b32.xlu0 %v1313, 112
    %v1974 = vpop.permute.xlu0 %1973
    %1975 = vrot.lane.b32.xlu0 %v1319, 112
    %v1976 = vpop.permute.xlu0 %1975
    %1977 = vrot.lane.b32.xlu0 %v1302, 112
    %v1978 = vpop.permute.xlu0 %1977
    %1979 = vrot.lane.b32.xlu0 %v1308, 112
    %v1980 = vpop.permute.xlu0 %1979
    %1981 = vrot.lane.b32.xlu0 %v1314, 112
    %v1982 = vpop.permute.xlu0 %1981
    %1983 = vrot.lane.b32.xlu0 %v1320, 112
    %v1984 = vpop.permute.xlu0 %1983
    %v1985 = vsel %vm889, %v1970, %v1978
    %v1986 = vsel %vm889, %v1972, %v1980
    %v1987 = vsel %vm889, %v1974, %v1982
    %v1988 = vsel %vm889, %v1976, %v1984
    %v1989 = vsel %vm889, %v1978, %v1970
    %v1990 = vsel %vm889, %v1980, %v1972
    %v1991 = vsel %vm889, %v1982, %v1974
    %v1992 = vsel %vm889, %v1984, %v1976
    %v1993 = vmul.f32 %v1985, %v899
    %v1994 = vmul.f32 %v1989, %v900
    %v1995 = vmul.f32 %v1986, %v901
    %v1996 = vmul.f32 %v1990, %v902
    %v1997 = vmul.f32 %v1987, %v903
    %v1998 = vmul.f32 %v1991, %v904
    %v1999 = vmul.f32 %v1988, %v905
    %v2000 = vmul.f32 %v1992, %v906
    %v2001 = vadd.f32 %v1961, %v1993
    %v2002 = vadd.f32 %v1962, %v1994
    %v2003 = vadd.f32 %v1963, %v1995
    %v2004 = vadd.f32 %v1964, %v1996
    %v2005 = vadd.f32 %v1965, %v1997
    %v2006 = vadd.f32 %v1966, %v1998
    %v2007 = vadd.f32 %v1967, %v1999
    %v2008 = vadd.f32 %v1968, %v2000
    %2009 = vrot.lane.b32.xlu0 %v1301, 111
    %v2010 = vpop.permute.xlu0 %2009
    %2011 = vrot.lane.b32.xlu0 %v1307, 111
    %v2012 = vpop.permute.xlu0 %2011
    %2013 = vrot.lane.b32.xlu0 %v1313, 111
    %v2014 = vpop.permute.xlu0 %2013
    %2015 = vrot.lane.b32.xlu0 %v1319, 111
    %v2016 = vpop.permute.xlu0 %2015
    %2017 = vrot.lane.b32.xlu0 %v1302, 111
    %v2018 = vpop.permute.xlu0 %2017
    %2019 = vrot.lane.b32.xlu0 %v1308, 111
    %v2020 = vpop.permute.xlu0 %2019
    %2021 = vrot.lane.b32.xlu0 %v1314, 111
    %v2022 = vpop.permute.xlu0 %2021
    %2023 = vrot.lane.b32.xlu0 %v1320, 111
    %v2024 = vpop.permute.xlu0 %2023
    %v2025 = vsel %vm939, %v2010, %v2018
    %v2026 = vsel %vm939, %v2012, %v2020
    %v2027 = vsel %vm939, %v2014, %v2022
    %v2028 = vsel %vm939, %v2016, %v2024
    %v2029 = vsel %vm939, %v2018, %v2010
    %v2030 = vsel %vm939, %v2020, %v2012
    %v2031 = vsel %vm939, %v2022, %v2014
    %v2032 = vsel %vm939, %v2024, %v2016
    %v2033 = vmul.f32 %v2025, %v949
    %v2034 = vmul.f32 %v2029, %v950
    %v2035 = vmul.f32 %v2026, %v951
    %v2036 = vmul.f32 %v2030, %v952
    %v2037 = vmul.f32 %v2027, %v953
    %v2038 = vmul.f32 %v2031, %v954
    %v2039 = vmul.f32 %v2028, %v955
    %v2040 = vmul.f32 %v2032, %v956
    %v2041 = vadd.f32 %v2001, %v2033
    %v2042 = vadd.f32 %v2002, %v2034
    %v2043 = vadd.f32 %v2003, %v2035
    %v2044 = vadd.f32 %v2004, %v2036
    %v2045 = vadd.f32 %v2005, %v2037
    %v2046 = vadd.f32 %v2006, %v2038
    %v2047 = vadd.f32 %v2007, %v2039
    %v2048 = vadd.f32 %v2008, %v2040
    %2049 = vrot.lane.b32.xlu0 %v1301, 110
    %v2050 = vpop.permute.xlu0 %2049
    %2051 = vrot.lane.b32.xlu0 %v1307, 110
    %v2052 = vpop.permute.xlu0 %2051
    %2053 = vrot.lane.b32.xlu0 %v1313, 110
    %v2054 = vpop.permute.xlu0 %2053
    %2055 = vrot.lane.b32.xlu0 %v1319, 110
    %v2056 = vpop.permute.xlu0 %2055
    %2057 = vrot.lane.b32.xlu0 %v1302, 110
    %v2058 = vpop.permute.xlu0 %2057
    %2059 = vrot.lane.b32.xlu0 %v1308, 110
    %v2060 = vpop.permute.xlu0 %2059
    %2061 = vrot.lane.b32.xlu0 %v1314, 110
    %v2062 = vpop.permute.xlu0 %2061
    %2063 = vrot.lane.b32.xlu0 %v1320, 110
    %v2064 = vpop.permute.xlu0 %2063
    %v2065 = vsel %vm989, %v2050, %v2058
    %v2066 = vsel %vm989, %v2052, %v2060
    %v2067 = vsel %vm989, %v2054, %v2062
    %v2068 = vsel %vm989, %v2056, %v2064
    %v2069 = vsel %vm989, %v2058, %v2050
    %v2070 = vsel %vm989, %v2060, %v2052
    %v2071 = vsel %vm989, %v2062, %v2054
    %v2072 = vsel %vm989, %v2064, %v2056
    %v2073 = vmul.f32 %v2065, %v999
    %v2074 = vmul.f32 %v2069, %v1000
    %v2075 = vmul.f32 %v2066, %v1001
    %v2076 = vmul.f32 %v2070, %v1002
    %v2077 = vmul.f32 %v2067, %v1003
    %v2078 = vmul.f32 %v2071, %v1004
    %v2079 = vmul.f32 %v2068, %v1005
    %v2080 = vmul.f32 %v2072, %v1006
    %v2081 = vadd.f32 %v2041, %v2073
    %v2082 = vadd.f32 %v2042, %v2074
    %v2083 = vadd.f32 %v2043, %v2075
    %v2084 = vadd.f32 %v2044, %v2076
    %v2085 = vadd.f32 %v2045, %v2077
    %v2086 = vadd.f32 %v2046, %v2078
    %v2087 = vadd.f32 %v2047, %v2079
    %v2088 = vadd.f32 %v2048, %v2080
    %2089 = vrot.lane.b32.xlu0 %v1301, 98
    %v2090 = vpop.permute.xlu0 %2089
    %2091 = vrot.lane.b32.xlu0 %v1307, 98
    %v2092 = vpop.permute.xlu0 %2091
    %2093 = vrot.lane.b32.xlu0 %v1313, 98
    %v2094 = vpop.permute.xlu0 %2093
    %2095 = vrot.lane.b32.xlu0 %v1319, 98
    %v2096 = vpop.permute.xlu0 %2095
    %2097 = vrot.lane.b32.xlu0 %v1302, 98
    %v2098 = vpop.permute.xlu0 %2097
    %2099 = vrot.lane.b32.xlu0 %v1308, 98
    %v2100 = vpop.permute.xlu0 %2099
    %2101 = vrot.lane.b32.xlu0 %v1314, 98
    %v2102 = vpop.permute.xlu0 %2101
    %2103 = vrot.lane.b32.xlu0 %v1320, 98
    %v2104 = vpop.permute.xlu0 %2103
    %v2105 = vsel %vm1039, %v2090, %v2098
    %v2106 = vsel %vm1039, %v2092, %v2100
    %v2107 = vsel %vm1039, %v2094, %v2102
    %v2108 = vsel %vm1039, %v2096, %v2104
    %v2109 = vsel %vm1039, %v2098, %v2090
    %v2110 = vsel %vm1039, %v2100, %v2092
    %v2111 = vsel %vm1039, %v2102, %v2094
    %v2112 = vsel %vm1039, %v2104, %v2096
    %v2113 = vmul.f32 %v2105, %v1049
    %v2114 = vmul.f32 %v2109, %v1050
    %v2115 = vmul.f32 %v2106, %v1051
    %v2116 = vmul.f32 %v2110, %v1052
    %v2117 = vmul.f32 %v2107, %v1053
    %v2118 = vmul.f32 %v2111, %v1054
    %v2119 = vmul.f32 %v2108, %v1055
    %v2120 = vmul.f32 %v2112, %v1056
    %v2121 = vadd.f32 %v2081, %v2113
    %v2122 = vadd.f32 %v2082, %v2114
    %v2123 = vadd.f32 %v2083, %v2115
    %v2124 = vadd.f32 %v2084, %v2116
    %v2125 = vadd.f32 %v2085, %v2117
    %v2126 = vadd.f32 %v2086, %v2118
    %v2127 = vadd.f32 %v2087, %v2119
    %v2128 = vadd.f32 %v2088, %v2120
    %2129 = vrot.lane.b32.xlu0 %v1301, 97
    %v2130 = vpop.permute.xlu0 %2129
    %2131 = vrot.lane.b32.xlu0 %v1307, 97
    %v2132 = vpop.permute.xlu0 %2131
    %2133 = vrot.lane.b32.xlu0 %v1313, 97
    %v2134 = vpop.permute.xlu0 %2133
    %2135 = vrot.lane.b32.xlu0 %v1319, 97
    %v2136 = vpop.permute.xlu0 %2135
    %2137 = vrot.lane.b32.xlu0 %v1302, 97
    %v2138 = vpop.permute.xlu0 %2137
    %2139 = vrot.lane.b32.xlu0 %v1308, 97
    %v2140 = vpop.permute.xlu0 %2139
    %2141 = vrot.lane.b32.xlu0 %v1314, 97
    %v2142 = vpop.permute.xlu0 %2141
    %2143 = vrot.lane.b32.xlu0 %v1320, 97
    %v2144 = vpop.permute.xlu0 %2143
    %v2145 = vsel %vm1089, %v2130, %v2138
    %v2146 = vsel %vm1089, %v2132, %v2140
    %v2147 = vsel %vm1089, %v2134, %v2142
    %v2148 = vsel %vm1089, %v2136, %v2144
    %v2149 = vsel %vm1089, %v2138, %v2130
    %v2150 = vsel %vm1089, %v2140, %v2132
    %v2151 = vsel %vm1089, %v2142, %v2134
    %v2152 = vsel %vm1089, %v2144, %v2136
    %v2153 = vmul.f32 %v2145, %v1099
    %v2154 = vmul.f32 %v2149, %v1100
    %v2155 = vmul.f32 %v2146, %v1101
    %v2156 = vmul.f32 %v2150, %v1102
    %v2157 = vmul.f32 %v2147, %v1103
    %v2158 = vmul.f32 %v2151, %v1104
    %v2159 = vmul.f32 %v2148, %v1105
    %v2160 = vmul.f32 %v2152, %v1106
    %v2161 = vadd.f32 %v2121, %v2153
    %v2162 = vadd.f32 %v2122, %v2154
    %v2163 = vadd.f32 %v2123, %v2155
    %v2164 = vadd.f32 %v2124, %v2156
    %v2165 = vadd.f32 %v2125, %v2157
    %v2166 = vadd.f32 %v2126, %v2158
    %v2167 = vadd.f32 %v2127, %v2159
    %v2168 = vadd.f32 %v2128, %v2160
    %2169 = vrot.lane.b32.xlu0 %v1301, 96
    %v2170 = vpop.permute.xlu0 %2169
    %2171 = vrot.lane.b32.xlu0 %v1307, 96
    %v2172 = vpop.permute.xlu0 %2171
    %2173 = vrot.lane.b32.xlu0 %v1313, 96
    %v2174 = vpop.permute.xlu0 %2173
    %2175 = vrot.lane.b32.xlu0 %v1319, 96
    %v2176 = vpop.permute.xlu0 %2175
    %2177 = vrot.lane.b32.xlu0 %v1302, 96
    %v2178 = vpop.permute.xlu0 %2177
    %2179 = vrot.lane.b32.xlu0 %v1308, 96
    %v2180 = vpop.permute.xlu0 %2179
    %2181 = vrot.lane.b32.xlu0 %v1314, 96
    %v2182 = vpop.permute.xlu0 %2181
    %2183 = vrot.lane.b32.xlu0 %v1320, 96
    %v2184 = vpop.permute.xlu0 %2183
    %v2185 = vsel %vm1139, %v2170, %v2178
    %v2186 = vsel %vm1139, %v2172, %v2180
    %v2187 = vsel %vm1139, %v2174, %v2182
    %v2188 = vsel %vm1139, %v2176, %v2184
    %v2189 = vsel %vm1139, %v2178, %v2170
    %v2190 = vsel %vm1139, %v2180, %v2172
    %v2191 = vsel %vm1139, %v2182, %v2174
    %v2192 = vsel %vm1139, %v2184, %v2176
    %v2193 = vmul.f32 %v2185, %v1149
    %v2194 = vmul.f32 %v2189, %v1150
    %v2195 = vmul.f32 %v2186, %v1151
    %v2196 = vmul.f32 %v2190, %v1152
    %v2197 = vmul.f32 %v2187, %v1153
    %v2198 = vmul.f32 %v2191, %v1154
    %v2199 = vmul.f32 %v2188, %v1155
    %v2200 = vmul.f32 %v2192, %v1156
    %v2201 = vadd.f32 %v2161, %v2193
    %v2202 = vadd.f32 %v2162, %v2194
    %v2203 = vadd.f32 %v2163, %v2195
    %v2204 = vadd.f32 %v2164, %v2196
    %v2205 = vadd.f32 %v2165, %v2197
    %v2206 = vadd.f32 %v2166, %v2198
    %v2207 = vadd.f32 %v2167, %v2199
    %v2208 = vadd.f32 %v2168, %v2200
    %2209 = vrot.lane.b32.xlu0 %v1301, 95
    %v2210 = vpop.permute.xlu0 %2209
    %2211 = vrot.lane.b32.xlu0 %v1307, 95
    %v2212 = vpop.permute.xlu0 %2211
    %2213 = vrot.lane.b32.xlu0 %v1313, 95
    %v2214 = vpop.permute.xlu0 %2213
    %2215 = vrot.lane.b32.xlu0 %v1319, 95
    %v2216 = vpop.permute.xlu0 %2215
    %2217 = vrot.lane.b32.xlu0 %v1302, 95
    %v2218 = vpop.permute.xlu0 %2217
    %2219 = vrot.lane.b32.xlu0 %v1308, 95
    %v2220 = vpop.permute.xlu0 %2219
    %2221 = vrot.lane.b32.xlu0 %v1314, 95
    %v2222 = vpop.permute.xlu0 %2221
    %2223 = vrot.lane.b32.xlu0 %v1320, 95
    %v2224 = vpop.permute.xlu0 %2223
    %v2225 = vsel %vm1189, %v2210, %v2218
    %v2226 = vsel %vm1189, %v2212, %v2220
    %v2227 = vsel %vm1189, %v2214, %v2222
    %v2228 = vsel %vm1189, %v2216, %v2224
    %v2229 = vsel %vm1189, %v2218, %v2210
    %v2230 = vsel %vm1189, %v2220, %v2212
    %v2231 = vsel %vm1189, %v2222, %v2214
    %v2232 = vsel %vm1189, %v2224, %v2216
    %v2233 = vmul.f32 %v2225, %v1199
    %v2234 = vmul.f32 %v2229, %v1200
    %v2235 = vmul.f32 %v2226, %v1201
    %v2236 = vmul.f32 %v2230, %v1202
    %v2237 = vmul.f32 %v2227, %v1203
    %v2238 = vmul.f32 %v2231, %v1204
    %v2239 = vmul.f32 %v2228, %v1205
    %v2240 = vmul.f32 %v2232, %v1206
    %v2241 = vadd.f32 %v2201, %v2233
    %v2242 = vadd.f32 %v2202, %v2234
    %v2243 = vadd.f32 %v2203, %v2235
    %v2244 = vadd.f32 %v2204, %v2236
    %v2245 = vadd.f32 %v2205, %v2237
    %v2246 = vadd.f32 %v2206, %v2238
    %v2247 = vadd.f32 %v2207, %v2239
    %v2248 = vadd.f32 %v2208, %v2240
    %2249 = vrot.lane.b32.xlu0 %v1301, 94
    %v2250 = vpop.permute.xlu0 %2249
    %2251 = vrot.lane.b32.xlu0 %v1307, 94
    %v2252 = vpop.permute.xlu0 %2251
    %2253 = vrot.lane.b32.xlu0 %v1313, 94
    %v2254 = vpop.permute.xlu0 %2253
    %2255 = vrot.lane.b32.xlu0 %v1319, 94
    %v2256 = vpop.permute.xlu0 %2255
    %2257 = vrot.lane.b32.xlu0 %v1302, 94
    %v2258 = vpop.permute.xlu0 %2257
    %2259 = vrot.lane.b32.xlu0 %v1308, 94
    %v2260 = vpop.permute.xlu0 %2259
    %2261 = vrot.lane.b32.xlu0 %v1314, 94
    %v2262 = vpop.permute.xlu0 %2261
    %2263 = vrot.lane.b32.xlu0 %v1320, 94
    %v2264 = vpop.permute.xlu0 %2263
    %v2265 = vsel %vm1239, %v2250, %v2258
    %v2266 = vsel %vm1239, %v2252, %v2260
    %v2267 = vsel %vm1239, %v2254, %v2262
    %v2268 = vsel %vm1239, %v2256, %v2264
    %v2269 = vsel %vm1239, %v2258, %v2250
    %v2270 = vsel %vm1239, %v2260, %v2252
    %v2271 = vsel %vm1239, %v2262, %v2254
    %v2272 = vsel %vm1239, %v2264, %v2256
    %v2273 = vmul.f32 %v2265, %v1249
    %v2274 = vmul.f32 %v2269, %v1250
    %v2275 = vmul.f32 %v2266, %v1251
    %v2276 = vmul.f32 %v2270, %v1252
    %v2277 = vmul.f32 %v2267, %v1253
    %v2278 = vmul.f32 %v2271, %v1254
    %v2279 = vmul.f32 %v2268, %v1255
    %v2280 = vmul.f32 %v2272, %v1256
    %v2281 = vadd.f32 %v2241, %v2273
    %v2282 = vadd.f32 %v2242, %v2274
    %v2283 = vadd.f32 %v2243, %v2275
    %v2284 = vadd.f32 %v2244, %v2276
    %v2285 = vadd.f32 %v2245, %v2277
    %v2286 = vadd.f32 %v2246, %v2278
    %v2287 = vadd.f32 %v2247, %v2279
    %v2288 = vadd.f32 %v2248, %v2280
    %v2289 = vadd.f32 %v2281, %v2283
    %v2290 = vadd.f32 %v2282, %v2284
    %v2291 = vadd.f32 %v2289, %v2285
    %v2292 = vadd.f32 %v2290, %v2286
    %v2293 = vadd.f32 %v2291, %v2287
    %v2294 = vadd.f32 %v2292, %v2288
    %v2295 = vmul.f32 %v2293, 0.1
    %v2296 = vmul.f32 %v2294, 0.1
    %v2297 = vmax.f32 %v2293, %v2295
    %v2298 = vmax.f32 %v2294, %v2296
    %v2301 = vrot.slane %v2297, 6
    %v2302 = vrot.slane %v2298, 6
    %v2305 = vrot.slane %v2297, 4
    %v2306 = vrot.slane %v2298, 4
    %v2309 = vrot.slane %v2297, 2
    %v2310 = vrot.slane %v2298, 2
    %v2313 = vsel %vm28, %v2297, %v2301
    %v2314 = vsel %vm28, %v2298, %v2302
    %v2315 = vsel %vm31, %v2313, %v2305
    %v2316 = vsel %vm31, %v2314, %v2306
    %v2317 = vsel %vm34, %v2315, %v2309
    %v2318 = vsel %vm34, %v2316, %v2310
    %v2319 = vsel %vm28, %v2309, %v2297
    %v2320 = vsel %vm28, %v2310, %v2298
    %v2321 = vsel %vm31, %v2319, %v2301
    %v2322 = vsel %vm31, %v2320, %v2302
    %v2323 = vsel %vm34, %v2321, %v2305
    %v2324 = vsel %vm34, %v2322, %v2306
    %v2325 = vsel %vm28, %v2305, %v2309
    %v2326 = vsel %vm28, %v2306, %v2310
    %v2327 = vsel %vm31, %v2325, %v2297
    %v2328 = vsel %vm31, %v2326, %v2298
    %v2329 = vsel %vm34, %v2327, %v2301
    %v2330 = vsel %vm34, %v2328, %v2302
    %v2331 = vsel %vm28, %v2301, %v2305
    %v2332 = vsel %vm28, %v2302, %v2306
    %v2333 = vsel %vm31, %v2331, %v2309
    %v2334 = vsel %vm31, %v2332, %v2310
    %v2335 = vsel %vm34, %v2333, %v2297
    %v2336 = vsel %vm34, %v2334, %v2298
    %2337 = vrot.lane.b32.xlu0 %v2317, 34
    %v2338 = vpop.permute.xlu0 %2337
    %2339 = vrot.lane.b32.xlu0 %v2323, 34
    %v2340 = vpop.permute.xlu0 %2339
    %2341 = vrot.lane.b32.xlu0 %v2329, 34
    %v2342 = vpop.permute.xlu0 %2341
    %2343 = vrot.lane.b32.xlu0 %v2335, 34
    %v2344 = vpop.permute.xlu0 %2343
    %2345 = vrot.lane.b32.xlu0 %v2318, 34
    %v2346 = vpop.permute.xlu0 %2345
    %2347 = vrot.lane.b32.xlu0 %v2324, 34
    %v2348 = vpop.permute.xlu0 %2347
    %2349 = vrot.lane.b32.xlu0 %v2330, 34
    %v2350 = vpop.permute.xlu0 %2349
    %2351 = vrot.lane.b32.xlu0 %v2336, 34
    %v2352 = vpop.permute.xlu0 %2351
    %v2353 = vsel %vm73, %v2338, %v2346
    %v2354 = vsel %vm73, %v2340, %v2348
    %v2355 = vsel %vm73, %v2342, %v2350
    %v2356 = vsel %vm73, %v2344, %v2352
    %v2357 = vsel %vm73, %v2346, %v2338
    %v2358 = vsel %vm73, %v2348, %v2340
    %v2359 = vsel %vm73, %v2350, %v2342
    %v2360 = vsel %vm73, %v2352, %v2344
    %v2361 = vmul.f32 %v2357, %v82
    %v2362 = vmul.f32 %v2353, %v83
    %v2363 = vmul.f32 %v2358, %v84
    %v2364 = vmul.f32 %v2354, %v85
    %v2365 = vmul.f32 %v2359, %v86
    %v2366 = vmul.f32 %v2355, %v87
    %v2367 = vmul.f32 %v2360, %v88
    %v2368 = vmul.f32 %v2356, %v89
    %2369 = vrot.lane.b32.xlu0 %v2317, 33
    %v2370 = vpop.permute.xlu0 %2369
    %2371 = vrot.lane.b32.xlu0 %v2323, 33
    %v2372 = vpop.permute.xlu0 %2371
    %2373 = vrot.lane.b32.xlu0 %v2329, 33
    %v2374 = vpop.permute.xlu0 %2373
    %2375 = vrot.lane.b32.xlu0 %v2335, 33
    %v2376 = vpop.permute.xlu0 %2375
    %2377 = vrot.lane.b32.xlu0 %v2318, 33
    %v2378 = vpop.permute.xlu0 %2377
    %2379 = vrot.lane.b32.xlu0 %v2324, 33
    %v2380 = vpop.permute.xlu0 %2379
    %2381 = vrot.lane.b32.xlu0 %v2330, 33
    %v2382 = vpop.permute.xlu0 %2381
    %2383 = vrot.lane.b32.xlu0 %v2336, 33
    %v2384 = vpop.permute.xlu0 %2383
    %v2385 = vsel %vm114, %v2370, %v2378
    %v2386 = vsel %vm114, %v2372, %v2380
    %v2387 = vsel %vm114, %v2374, %v2382
    %v2388 = vsel %vm114, %v2376, %v2384
    %v2389 = vsel %vm114, %v2378, %v2370
    %v2390 = vsel %vm114, %v2380, %v2372
    %v2391 = vsel %vm114, %v2382, %v2374
    %v2392 = vsel %vm114, %v2384, %v2376
    %v2393 = vmul.f32 %v2389, %v124
    %v2394 = vmul.f32 %v2385, %v125
    %v2395 = vmul.f32 %v2390, %v126
    %v2396 = vmul.f32 %v2386, %v127
    %v2397 = vmul.f32 %v2391, %v128
    %v2398 = vmul.f32 %v2387, %v129
    %v2399 = vmul.f32 %v2392, %v130
    %v2400 = vmul.f32 %v2388, %v131
    %v2401 = vadd.f32 %v2361, %v2393
    %v2402 = vadd.f32 %v2362, %v2394
    %v2403 = vadd.f32 %v2363, %v2395
    %v2404 = vadd.f32 %v2364, %v2396
    %v2405 = vadd.f32 %v2365, %v2397
    %v2406 = vadd.f32 %v2366, %v2398
    %v2407 = vadd.f32 %v2367, %v2399
    %v2408 = vadd.f32 %v2368, %v2400
    %2409 = vrot.lane.b32.xlu0 %v2317, 32
    %v2410 = vpop.permute.xlu0 %2409
    %2411 = vrot.lane.b32.xlu0 %v2323, 32
    %v2412 = vpop.permute.xlu0 %2411
    %2413 = vrot.lane.b32.xlu0 %v2329, 32
    %v2414 = vpop.permute.xlu0 %2413
    %2415 = vrot.lane.b32.xlu0 %v2335, 32
    %v2416 = vpop.permute.xlu0 %2415
    %2417 = vrot.lane.b32.xlu0 %v2318, 32
    %v2418 = vpop.permute.xlu0 %2417
    %2419 = vrot.lane.b32.xlu0 %v2324, 32
    %v2420 = vpop.permute.xlu0 %2419
    %2421 = vrot.lane.b32.xlu0 %v2330, 32
    %v2422 = vpop.permute.xlu0 %2421
    %2423 = vrot.lane.b32.xlu0 %v2336, 32
    %v2424 = vpop.permute.xlu0 %2423
    %v2425 = vsel %vm164, %v2410, %v2418
    %v2426 = vsel %vm164, %v2412, %v2420
    %v2427 = vsel %vm164, %v2414, %v2422
    %v2428 = vsel %vm164, %v2416, %v2424
    %v2429 = vsel %vm164, %v2418, %v2410
    %v2430 = vsel %vm164, %v2420, %v2412
    %v2431 = vsel %vm164, %v2422, %v2414
    %v2432 = vsel %vm164, %v2424, %v2416
    %v2433 = vmul.f32 %v2429, %v174
    %v2434 = vmul.f32 %v2425, %v175
    %v2435 = vmul.f32 %v2430, %v176
    %v2436 = vmul.f32 %v2426, %v177
    %v2437 = vmul.f32 %v2431, %v178
    %v2438 = vmul.f32 %v2427, %v179
    %v2439 = vmul.f32 %v2432, %v180
    %v2440 = vmul.f32 %v2428, %v181
    %v2441 = vadd.f32 %v2401, %v2433
    %v2442 = vadd.f32 %v2402, %v2434
    %v2443 = vadd.f32 %v2403, %v2435
    %v2444 = vadd.f32 %v2404, %v2436
    %v2445 = vadd.f32 %v2405, %v2437
    %v2446 = vadd.f32 %v2406, %v2438
    %v2447 = vadd.f32 %v2407, %v2439
    %v2448 = vadd.f32 %v2408, %v2440
    %2449 = vrot.lane.b32.xlu0 %v2317, 31
    %v2450 = vpop.permute.xlu0 %2449
    %2451 = vrot.lane.b32.xlu0 %v2323, 31
    %v2452 = vpop.permute.xlu0 %2451
    %2453 = vrot.lane.b32.xlu0 %v2329, 31
    %v2454 = vpop.permute.xlu0 %2453
    %2455 = vrot.lane.b32.xlu0 %v2335, 31
    %v2456 = vpop.permute.xlu0 %2455
    %2457 = vrot.lane.b32.xlu0 %v2318, 31
    %v2458 = vpop.permute.xlu0 %2457
    %2459 = vrot.lane.b32.xlu0 %v2324, 31
    %v2460 = vpop.permute.xlu0 %2459
    %2461 = vrot.lane.b32.xlu0 %v2330, 31
    %v2462 = vpop.permute.xlu0 %2461
    %2463 = vrot.lane.b32.xlu0 %v2336, 31
    %v2464 = vpop.permute.xlu0 %2463
    %v2465 = vsel %vm214, %v2450, %v2458
    %v2466 = vsel %vm214, %v2452, %v2460
    %v2467 = vsel %vm214, %v2454, %v2462
    %v2468 = vsel %vm214, %v2456, %v2464
    %v2469 = vsel %vm214, %v2458, %v2450
    %v2470 = vsel %vm214, %v2460, %v2452
    %v2471 = vsel %vm214, %v2462, %v2454
    %v2472 = vsel %vm214, %v2464, %v2456
    %v2473 = vmul.f32 %v2469, %v224
    %v2474 = vmul.f32 %v2465, %v225
    %v2475 = vmul.f32 %v2470, %v226
    %v2476 = vmul.f32 %v2466, %v227
    %v2477 = vmul.f32 %v2471, %v228
    %v2478 = vmul.f32 %v2467, %v229
    %v2479 = vmul.f32 %v2472, %v230
    %v2480 = vmul.f32 %v2468, %v231
    %v2481 = vadd.f32 %v2441, %v2473
    %v2482 = vadd.f32 %v2442, %v2474
    %v2483 = vadd.f32 %v2443, %v2475
    %v2484 = vadd.f32 %v2444, %v2476
    %v2485 = vadd.f32 %v2445, %v2477
    %v2486 = vadd.f32 %v2446, %v2478
    %v2487 = vadd.f32 %v2447, %v2479
    %v2488 = vadd.f32 %v2448, %v2480
    %2489 = vrot.lane.b32.xlu0 %v2317, 30
    %v2490 = vpop.permute.xlu0 %2489
    %2491 = vrot.lane.b32.xlu0 %v2323, 30
    %v2492 = vpop.permute.xlu0 %2491
    %2493 = vrot.lane.b32.xlu0 %v2329, 30
    %v2494 = vpop.permute.xlu0 %2493
    %2495 = vrot.lane.b32.xlu0 %v2335, 30
    %v2496 = vpop.permute.xlu0 %2495
    %2497 = vrot.lane.b32.xlu0 %v2318, 30
    %v2498 = vpop.permute.xlu0 %2497
    %2499 = vrot.lane.b32.xlu0 %v2324, 30
    %v2500 = vpop.permute.xlu0 %2499
    %2501 = vrot.lane.b32.xlu0 %v2330, 30
    %v2502 = vpop.permute.xlu0 %2501
    %2503 = vrot.lane.b32.xlu0 %v2336, 30
    %v2504 = vpop.permute.xlu0 %2503
    %v2505 = vsel %vm264, %v2490, %v2498
    %v2506 = vsel %vm264, %v2492, %v2500
    %v2507 = vsel %vm264, %v2494, %v2502
    %v2508 = vsel %vm264, %v2496, %v2504
    %v2509 = vsel %vm264, %v2498, %v2490
    %v2510 = vsel %vm264, %v2500, %v2492
    %v2511 = vsel %vm264, %v2502, %v2494
    %v2512 = vsel %vm264, %v2504, %v2496
    %v2513 = vmul.f32 %v2509, %v274
    %v2514 = vmul.f32 %v2505, %v275
    %v2515 = vmul.f32 %v2510, %v276
    %v2516 = vmul.f32 %v2506, %v277
    %v2517 = vmul.f32 %v2511, %v278
    %v2518 = vmul.f32 %v2507, %v279
    %v2519 = vmul.f32 %v2512, %v280
    %v2520 = vmul.f32 %v2508, %v281
    %v2521 = vadd.f32 %v2481, %v2513
    %v2522 = vadd.f32 %v2482, %v2514
    %v2523 = vadd.f32 %v2483, %v2515
    %v2524 = vadd.f32 %v2484, %v2516
    %v2525 = vadd.f32 %v2485, %v2517
    %v2526 = vadd.f32 %v2486, %v2518
    %v2527 = vadd.f32 %v2487, %v2519
    %v2528 = vadd.f32 %v2488, %v2520
    %2529 = vrot.lane.b32.xlu0 %v2317, 18
    %v2530 = vpop.permute.xlu0 %2529
    %2531 = vrot.lane.b32.xlu0 %v2323, 18
    %v2532 = vpop.permute.xlu0 %2531
    %2533 = vrot.lane.b32.xlu0 %v2329, 18
    %v2534 = vpop.permute.xlu0 %2533
    %2535 = vrot.lane.b32.xlu0 %v2335, 18
    %v2536 = vpop.permute.xlu0 %2535
    %2537 = vrot.lane.b32.xlu0 %v2318, 18
    %v2538 = vpop.permute.xlu0 %2537
    %2539 = vrot.lane.b32.xlu0 %v2324, 18
    %v2540 = vpop.permute.xlu0 %2539
    %2541 = vrot.lane.b32.xlu0 %v2330, 18
    %v2542 = vpop.permute.xlu0 %2541
    %2543 = vrot.lane.b32.xlu0 %v2336, 18
    %v2544 = vpop.permute.xlu0 %2543
    %v2545 = vsel %vm314, %v2530, %v2538
    %v2546 = vsel %vm314, %v2532, %v2540
    %v2547 = vsel %vm314, %v2534, %v2542
    %v2548 = vsel %vm314, %v2536, %v2544
    %v2549 = vsel %vm314, %v2538, %v2530
    %v2550 = vsel %vm314, %v2540, %v2532
    %v2551 = vsel %vm314, %v2542, %v2534
    %v2552 = vsel %vm314, %v2544, %v2536
    %v2553 = vmul.f32 %v2549, %v324
    %v2554 = vmul.f32 %v2545, %v325
    %v2555 = vmul.f32 %v2550, %v326
    %v2556 = vmul.f32 %v2546, %v327
    %v2557 = vmul.f32 %v2551, %v328
    %v2558 = vmul.f32 %v2547, %v329
    %v2559 = vmul.f32 %v2552, %v330
    %v2560 = vmul.f32 %v2548, %v331
    %v2561 = vadd.f32 %v2521, %v2553
    %v2562 = vadd.f32 %v2522, %v2554
    %v2563 = vadd.f32 %v2523, %v2555
    %v2564 = vadd.f32 %v2524, %v2556
    %v2565 = vadd.f32 %v2525, %v2557
    %v2566 = vadd.f32 %v2526, %v2558
    %v2567 = vadd.f32 %v2527, %v2559
    %v2568 = vadd.f32 %v2528, %v2560
    %2569 = vrot.lane.b32.xlu0 %v2317, 17
    %v2570 = vpop.permute.xlu0 %2569
    %2571 = vrot.lane.b32.xlu0 %v2323, 17
    %v2572 = vpop.permute.xlu0 %2571
    %2573 = vrot.lane.b32.xlu0 %v2329, 17
    %v2574 = vpop.permute.xlu0 %2573
    %2575 = vrot.lane.b32.xlu0 %v2335, 17
    %v2576 = vpop.permute.xlu0 %2575
    %2577 = vrot.lane.b32.xlu0 %v2318, 17
    %v2578 = vpop.permute.xlu0 %2577
    %2579 = vrot.lane.b32.xlu0 %v2324, 17
    %v2580 = vpop.permute.xlu0 %2579
    %2581 = vrot.lane.b32.xlu0 %v2330, 17
    %v2582 = vpop.permute.xlu0 %2581
    %2583 = vrot.lane.b32.xlu0 %v2336, 17
    %v2584 = vpop.permute.xlu0 %2583
    %v2585 = vsel %vm364, %v2570, %v2578
    %v2586 = vsel %vm364, %v2572, %v2580
    %v2587 = vsel %vm364, %v2574, %v2582
    %v2588 = vsel %vm364, %v2576, %v2584
    %v2589 = vsel %vm364, %v2578, %v2570
    %v2590 = vsel %vm364, %v2580, %v2572
    %v2591 = vsel %vm364, %v2582, %v2574
    %v2592 = vsel %vm364, %v2584, %v2576
    %v2593 = vmul.f32 %v2589, %v374
    %v2594 = vmul.f32 %v2585, %v375
    %v2595 = vmul.f32 %v2590, %v376
    %v2596 = vmul.f32 %v2586, %v377
    %v2597 = vmul.f32 %v2591, %v378
    %v2598 = vmul.f32 %v2587, %v379
    %v2599 = vmul.f32 %v2592, %v380
    %v2600 = vmul.f32 %v2588, %v381
    %v2601 = vadd.f32 %v2561, %v2593
    %v2602 = vadd.f32 %v2562, %v2594
    %v2603 = vadd.f32 %v2563, %v2595
    %v2604 = vadd.f32 %v2564, %v2596
    %v2605 = vadd.f32 %v2565, %v2597
    %v2606 = vadd.f32 %v2566, %v2598
    %v2607 = vadd.f32 %v2567, %v2599
    %v2608 = vadd.f32 %v2568, %v2600
    %2609 = vrot.lane.b32.xlu0 %v2317, 16
    %v2610 = vpop.permute.xlu0 %2609
    %2611 = vrot.lane.b32.xlu0 %v2323, 16
    %v2612 = vpop.permute.xlu0 %2611
    %2613 = vrot.lane.b32.xlu0 %v2329, 16
    %v2614 = vpop.permute.xlu0 %2613
    %2615 = vrot.lane.b32.xlu0 %v2335, 16
    %v2616 = vpop.permute.xlu0 %2615
    %2617 = vrot.lane.b32.xlu0 %v2318, 16
    %v2618 = vpop.permute.xlu0 %2617
    %2619 = vrot.lane.b32.xlu0 %v2324, 16
    %v2620 = vpop.permute.xlu0 %2619
    %2621 = vrot.lane.b32.xlu0 %v2330, 16
    %v2622 = vpop.permute.xlu0 %2621
    %2623 = vrot.lane.b32.xlu0 %v2336, 16
    %v2624 = vpop.permute.xlu0 %2623
    %v2625 = vsel %vm414, %v2610, %v2618
    %v2626 = vsel %vm414, %v2612, %v2620
    %v2627 = vsel %vm414, %v2614, %v2622
    %v2628 = vsel %vm414, %v2616, %v2624
    %v2629 = vsel %vm414, %v2618, %v2610
    %v2630 = vsel %vm414, %v2620, %v2612
    %v2631 = vsel %vm414, %v2622, %v2614
    %v2632 = vsel %vm414, %v2624, %v2616
    %v2633 = vmul.f32 %v2629, %v424
    %v2634 = vmul.f32 %v2625, %v425
    %v2635 = vmul.f32 %v2630, %v426
    %v2636 = vmul.f32 %v2626, %v427
    %v2637 = vmul.f32 %v2631, %v428
    %v2638 = vmul.f32 %v2627, %v429
    %v2639 = vmul.f32 %v2632, %v430
    %v2640 = vmul.f32 %v2628, %v431
    %v2641 = vadd.f32 %v2601, %v2633
    %v2642 = vadd.f32 %v2602, %v2634
    %v2643 = vadd.f32 %v2603, %v2635
    %v2644 = vadd.f32 %v2604, %v2636
    %v2645 = vadd.f32 %v2605, %v2637
    %v2646 = vadd.f32 %v2606, %v2638
    %v2647 = vadd.f32 %v2607, %v2639
    %v2648 = vadd.f32 %v2608, %v2640
    %2649 = vrot.lane.b32.xlu0 %v2317, 15
    %v2650 = vpop.permute.xlu0 %2649
    %2651 = vrot.lane.b32.xlu0 %v2323, 15
    %v2652 = vpop.permute.xlu0 %2651
    %2653 = vrot.lane.b32.xlu0 %v2329, 15
    %v2654 = vpop.permute.xlu0 %2653
    %2655 = vrot.lane.b32.xlu0 %v2335, 15
    %v2656 = vpop.permute.xlu0 %2655
    %2657 = vrot.lane.b32.xlu0 %v2318, 15
    %v2658 = vpop.permute.xlu0 %2657
    %2659 = vrot.lane.b32.xlu0 %v2324, 15
    %v2660 = vpop.permute.xlu0 %2659
    %2661 = vrot.lane.b32.xlu0 %v2330, 15
    %v2662 = vpop.permute.xlu0 %2661
    %2663 = vrot.lane.b32.xlu0 %v2336, 15
    %v2664 = vpop.permute.xlu0 %2663
    %v2665 = vsel %vm464, %v2650, %v2658
    %v2666 = vsel %vm464, %v2652, %v2660
    %v2667 = vsel %vm464, %v2654, %v2662
    %v2668 = vsel %vm464, %v2656, %v2664
    %v2669 = vsel %vm464, %v2658, %v2650
    %v2670 = vsel %vm464, %v2660, %v2652
    %v2671 = vsel %vm464, %v2662, %v2654
    %v2672 = vsel %vm464, %v2664, %v2656
    %v2673 = vmul.f32 %v2669, %v474
    %v2674 = vmul.f32 %v2665, %v475
    %v2675 = vmul.f32 %v2670, %v476
    %v2676 = vmul.f32 %v2666, %v477
    %v2677 = vmul.f32 %v2671, %v478
    %v2678 = vmul.f32 %v2667, %v479
    %v2679 = vmul.f32 %v2672, %v480
    %v2680 = vmul.f32 %v2668, %v481
    %v2681 = vadd.f32 %v2641, %v2673
    %v2682 = vadd.f32 %v2642, %v2674
    %v2683 = vadd.f32 %v2643, %v2675
    %v2684 = vadd.f32 %v2644, %v2676
    %v2685 = vadd.f32 %v2645, %v2677
    %v2686 = vadd.f32 %v2646, %v2678
    %v2687 = vadd.f32 %v2647, %v2679
    %v2688 = vadd.f32 %v2648, %v2680
    %2689 = vrot.lane.b32.xlu0 %v2317, 14
    %v2690 = vpop.permute.xlu0 %2689
    %2691 = vrot.lane.b32.xlu0 %v2323, 14
    %v2692 = vpop.permute.xlu0 %2691
    %2693 = vrot.lane.b32.xlu0 %v2329, 14
    %v2694 = vpop.permute.xlu0 %2693
    %2695 = vrot.lane.b32.xlu0 %v2335, 14
    %v2696 = vpop.permute.xlu0 %2695
    %2697 = vrot.lane.b32.xlu0 %v2318, 14
    %v2698 = vpop.permute.xlu0 %2697
    %2699 = vrot.lane.b32.xlu0 %v2324, 14
    %v2700 = vpop.permute.xlu0 %2699
    %2701 = vrot.lane.b32.xlu0 %v2330, 14
    %v2702 = vpop.permute.xlu0 %2701
    %2703 = vrot.lane.b32.xlu0 %v2336, 14
    %v2704 = vpop.permute.xlu0 %2703
    %v2705 = vsel %vm514, %v2690, %v2698
    %v2706 = vsel %vm514, %v2692, %v2700
    %v2707 = vsel %vm514, %v2694, %v2702
    %v2708 = vsel %vm514, %v2696, %v2704
    %v2709 = vsel %vm514, %v2698, %v2690
    %v2710 = vsel %vm514, %v2700, %v2692
    %v2711 = vsel %vm514, %v2702, %v2694
    %v2712 = vsel %vm514, %v2704, %v2696
    %v2713 = vmul.f32 %v2709, %v524
    %v2714 = vmul.f32 %v2705, %v525
    %v2715 = vmul.f32 %v2710, %v526
    %v2716 = vmul.f32 %v2706, %v527
    %v2717 = vmul.f32 %v2711, %v528
    %v2718 = vmul.f32 %v2707, %v529
    %v2719 = vmul.f32 %v2712, %v530
    %v2720 = vmul.f32 %v2708, %v531
    %v2721 = vadd.f32 %v2681, %v2713
    %v2722 = vadd.f32 %v2682, %v2714
    %v2723 = vadd.f32 %v2683, %v2715
    %v2724 = vadd.f32 %v2684, %v2716
    %v2725 = vadd.f32 %v2685, %v2717
    %v2726 = vadd.f32 %v2686, %v2718
    %v2727 = vadd.f32 %v2687, %v2719
    %v2728 = vadd.f32 %v2688, %v2720
    %2729 = vrot.lane.b32.xlu0 %v2317, 2
    %v2730 = vpop.permute.xlu0 %2729
    %2731 = vrot.lane.b32.xlu0 %v2323, 2
    %v2732 = vpop.permute.xlu0 %2731
    %2733 = vrot.lane.b32.xlu0 %v2329, 2
    %v2734 = vpop.permute.xlu0 %2733
    %2735 = vrot.lane.b32.xlu0 %v2335, 2
    %v2736 = vpop.permute.xlu0 %2735
    %2737 = vrot.lane.b32.xlu0 %v2318, 2
    %v2738 = vpop.permute.xlu0 %2737
    %2739 = vrot.lane.b32.xlu0 %v2324, 2
    %v2740 = vpop.permute.xlu0 %2739
    %2741 = vrot.lane.b32.xlu0 %v2330, 2
    %v2742 = vpop.permute.xlu0 %2741
    %2743 = vrot.lane.b32.xlu0 %v2336, 2
    %v2744 = vpop.permute.xlu0 %2743
    %v2745 = vsel %vm564, %v2730, %v2738
    %v2746 = vsel %vm564, %v2732, %v2740
    %v2747 = vsel %vm564, %v2734, %v2742
    %v2748 = vsel %vm564, %v2736, %v2744
    %v2749 = vsel %vm564, %v2738, %v2730
    %v2750 = vsel %vm564, %v2740, %v2732
    %v2751 = vsel %vm564, %v2742, %v2734
    %v2752 = vsel %vm564, %v2744, %v2736
    %v2753 = vmul.f32 %v2749, %v574
    %v2754 = vmul.f32 %v2745, %v575
    %v2755 = vmul.f32 %v2750, %v576
    %v2756 = vmul.f32 %v2746, %v577
    %v2757 = vmul.f32 %v2751, %v578
    %v2758 = vmul.f32 %v2747, %v579
    %v2759 = vmul.f32 %v2752, %v580
    %v2760 = vmul.f32 %v2748, %v581
    %v2761 = vadd.f32 %v2721, %v2753
    %v2762 = vadd.f32 %v2722, %v2754
    %v2763 = vadd.f32 %v2723, %v2755
    %v2764 = vadd.f32 %v2724, %v2756
    %v2765 = vadd.f32 %v2725, %v2757
    %v2766 = vadd.f32 %v2726, %v2758
    %v2767 = vadd.f32 %v2727, %v2759
    %v2768 = vadd.f32 %v2728, %v2760
    %2769 = vrot.lane.b32.xlu0 %v2317, 1
    %v2770 = vpop.permute.xlu0 %2769
    %2771 = vrot.lane.b32.xlu0 %v2323, 1
    %v2772 = vpop.permute.xlu0 %2771
    %2773 = vrot.lane.b32.xlu0 %v2329, 1
    %v2774 = vpop.permute.xlu0 %2773
    %2775 = vrot.lane.b32.xlu0 %v2335, 1
    %v2776 = vpop.permute.xlu0 %2775
    %2777 = vrot.lane.b32.xlu0 %v2318, 1
    %v2778 = vpop.permute.xlu0 %2777
    %2779 = vrot.lane.b32.xlu0 %v2324, 1
    %v2780 = vpop.permute.xlu0 %2779
    %2781 = vrot.lane.b32.xlu0 %v2330, 1
    %v2782 = vpop.permute.xlu0 %2781
    %2783 = vrot.lane.b32.xlu0 %v2336, 1
    %v2784 = vpop.permute.xlu0 %2783
    %v2785 = vsel %vm614, %v2770, %v2778
    %v2786 = vsel %vm614, %v2772, %v2780
    %v2787 = vsel %vm614, %v2774, %v2782
    %v2788 = vsel %vm614, %v2776, %v2784
    %v2789 = vsel %vm614, %v2778, %v2770
    %v2790 = vsel %vm614, %v2780, %v2772
    %v2791 = vsel %vm614, %v2782, %v2774
    %v2792 = vsel %vm614, %v2784, %v2776
    %v2793 = vmul.f32 %v2789, %v624
    %v2794 = vmul.f32 %v2785, %v625
    %v2795 = vmul.f32 %v2790, %v626
    %v2796 = vmul.f32 %v2786, %v627
    %v2797 = vmul.f32 %v2791, %v628
    %v2798 = vmul.f32 %v2787, %v629
    %v2799 = vmul.f32 %v2792, %v630
    %v2800 = vmul.f32 %v2788, %v631
    %v2801 = vadd.f32 %v2761, %v2793
    %v2802 = vadd.f32 %v2762, %v2794
    %v2803 = vadd.f32 %v2763, %v2795
    %v2804 = vadd.f32 %v2764, %v2796
    %v2805 = vadd.f32 %v2765, %v2797
    %v2806 = vadd.f32 %v2766, %v2798
    %v2807 = vadd.f32 %v2767, %v2799
    %v2808 = vadd.f32 %v2768, %v2800
    %v2809 = vmul.f32 %v2317, %v649
    %v2810 = vmul.f32 %v2318, %v650
    %v2811 = vmul.f32 %v2323, %v651
    %v2812 = vmul.f32 %v2324, %v652
    %v2813 = vmul.f32 %v2329, %v653
    %v2814 = vmul.f32 %v2330, %v654
    %v2815 = vmul.f32 %v2335, %v655
    %v2816 = vmul.f32 %v2336, %v656
    %v2817 = vadd.f32 %v2801, %v2809
    %v2818 = vadd.f32 %v2802, %v2810
    %v2819 = vadd.f32 %v2803, %v2811
    %v2820 = vadd.f32 %v2804, %v2812
    %v2821 = vadd.f32 %v2805, %v2813
    %v2822 = vadd.f32 %v2806, %v2814
    %v2823 = vadd.f32 %v2807, %v2815
    %v2824 = vadd.f32 %v2808, %v2816
    %2825 = vrot.lane.b32.xlu0 %v2317, 127
    %v2826 = vpop.permute.xlu0 %2825
    %2827 = vrot.lane.b32.xlu0 %v2323, 127
    %v2828 = vpop.permute.xlu0 %2827
    %2829 = vrot.lane.b32.xlu0 %v2329, 127
    %v2830 = vpop.permute.xlu0 %2829
    %2831 = vrot.lane.b32.xlu0 %v2335, 127
    %v2832 = vpop.permute.xlu0 %2831
    %2833 = vrot.lane.b32.xlu0 %v2318, 127
    %v2834 = vpop.permute.xlu0 %2833
    %2835 = vrot.lane.b32.xlu0 %v2324, 127
    %v2836 = vpop.permute.xlu0 %2835
    %2837 = vrot.lane.b32.xlu0 %v2330, 127
    %v2838 = vpop.permute.xlu0 %2837
    %2839 = vrot.lane.b32.xlu0 %v2336, 127
    %v2840 = vpop.permute.xlu0 %2839
    %v2841 = vsel %vm689, %v2826, %v2834
    %v2842 = vsel %vm689, %v2828, %v2836
    %v2843 = vsel %vm689, %v2830, %v2838
    %v2844 = vsel %vm689, %v2832, %v2840
    %v2845 = vsel %vm689, %v2834, %v2826
    %v2846 = vsel %vm689, %v2836, %v2828
    %v2847 = vsel %vm689, %v2838, %v2830
    %v2848 = vsel %vm689, %v2840, %v2832
    %v2849 = vmul.f32 %v2841, %v699
    %v2850 = vmul.f32 %v2845, %v700
    %v2851 = vmul.f32 %v2842, %v701
    %v2852 = vmul.f32 %v2846, %v702
    %v2853 = vmul.f32 %v2843, %v703
    %v2854 = vmul.f32 %v2847, %v704
    %v2855 = vmul.f32 %v2844, %v705
    %v2856 = vmul.f32 %v2848, %v706
    %v2857 = vadd.f32 %v2817, %v2849
    %v2858 = vadd.f32 %v2818, %v2850
    %v2859 = vadd.f32 %v2819, %v2851
    %v2860 = vadd.f32 %v2820, %v2852
    %v2861 = vadd.f32 %v2821, %v2853
    %v2862 = vadd.f32 %v2822, %v2854
    %v2863 = vadd.f32 %v2823, %v2855
    %v2864 = vadd.f32 %v2824, %v2856
    %2865 = vrot.lane.b32.xlu0 %v2317, 126
    %v2866 = vpop.permute.xlu0 %2865
    %2867 = vrot.lane.b32.xlu0 %v2323, 126
    %v2868 = vpop.permute.xlu0 %2867
    %2869 = vrot.lane.b32.xlu0 %v2329, 126
    %v2870 = vpop.permute.xlu0 %2869
    %2871 = vrot.lane.b32.xlu0 %v2335, 126
    %v2872 = vpop.permute.xlu0 %2871
    %2873 = vrot.lane.b32.xlu0 %v2318, 126
    %v2874 = vpop.permute.xlu0 %2873
    %2875 = vrot.lane.b32.xlu0 %v2324, 126
    %v2876 = vpop.permute.xlu0 %2875
    %2877 = vrot.lane.b32.xlu0 %v2330, 126
    %v2878 = vpop.permute.xlu0 %2877
    %2879 = vrot.lane.b32.xlu0 %v2336, 126
    %v2880 = vpop.permute.xlu0 %2879
    %v2881 = vsel %vm739, %v2866, %v2874
    %v2882 = vsel %vm739, %v2868, %v2876
    %v2883 = vsel %vm739, %v2870, %v2878
    %v2884 = vsel %vm739, %v2872, %v2880
    %v2885 = vsel %vm739, %v2874, %v2866
    %v2886 = vsel %vm739, %v2876, %v2868
    %v2887 = vsel %vm739, %v2878, %v2870
    %v2888 = vsel %vm739, %v2880, %v2872
    %v2889 = vmul.f32 %v2881, %v749
    %v2890 = vmul.f32 %v2885, %v750
    %v2891 = vmul.f32 %v2882, %v751
    %v2892 = vmul.f32 %v2886, %v752
    %v2893 = vmul.f32 %v2883, %v753
    %v2894 = vmul.f32 %v2887, %v754
    %v2895 = vmul.f32 %v2884, %v755
    %v2896 = vmul.f32 %v2888, %v756
    %v2897 = vadd.f32 %v2857, %v2889
    %v2898 = vadd.f32 %v2858, %v2890
    %v2899 = vadd.f32 %v2859, %v2891
    %v2900 = vadd.f32 %v2860, %v2892
    %v2901 = vadd.f32 %v2861, %v2893
    %v2902 = vadd.f32 %v2862, %v2894
    %v2903 = vadd.f32 %v2863, %v2895
    %v2904 = vadd.f32 %v2864, %v2896
    %2905 = vrot.lane.b32.xlu0 %v2317, 114
    %v2906 = vpop.permute.xlu0 %2905
    %2907 = vrot.lane.b32.xlu0 %v2323, 114
    %v2908 = vpop.permute.xlu0 %2907
    %2909 = vrot.lane.b32.xlu0 %v2329, 114
    %v2910 = vpop.permute.xlu0 %2909
    %2911 = vrot.lane.b32.xlu0 %v2335, 114
    %v2912 = vpop.permute.xlu0 %2911
    %2913 = vrot.lane.b32.xlu0 %v2318, 114
    %v2914 = vpop.permute.xlu0 %2913
    %2915 = vrot.lane.b32.xlu0 %v2324, 114
    %v2916 = vpop.permute.xlu0 %2915
    %2917 = vrot.lane.b32.xlu0 %v2330, 114
    %v2918 = vpop.permute.xlu0 %2917
    %2919 = vrot.lane.b32.xlu0 %v2336, 114
    %v2920 = vpop.permute.xlu0 %2919
    %v2921 = vsel %vm789, %v2906, %v2914
    %v2922 = vsel %vm789, %v2908, %v2916
    %v2923 = vsel %vm789, %v2910, %v2918
    %v2924 = vsel %vm789, %v2912, %v2920
    %v2925 = vsel %vm789, %v2914, %v2906
    %v2926 = vsel %vm789, %v2916, %v2908
    %v2927 = vsel %vm789, %v2918, %v2910
    %v2928 = vsel %vm789, %v2920, %v2912
    %v2929 = vmul.f32 %v2921, %v799
    %v2930 = vmul.f32 %v2925, %v800
    %v2931 = vmul.f32 %v2922, %v801
    %v2932 = vmul.f32 %v2926, %v802
    %v2933 = vmul.f32 %v2923, %v803
    %v2934 = vmul.f32 %v2927, %v804
    %v2935 = vmul.f32 %v2924, %v805
    %v2936 = vmul.f32 %v2928, %v806
    %v2937 = vadd.f32 %v2897, %v2929
    %v2938 = vadd.f32 %v2898, %v2930
    %v2939 = vadd.f32 %v2899, %v2931
    %v2940 = vadd.f32 %v2900, %v2932
    %v2941 = vadd.f32 %v2901, %v2933
    %v2942 = vadd.f32 %v2902, %v2934
    %v2943 = vadd.f32 %v2903, %v2935
    %v2944 = vadd.f32 %v2904, %v2936
    %2945 = vrot.lane.b32.xlu0 %v2317, 113
    %v2946 = vpop.permute.xlu0 %2945
    %2947 = vrot.lane.b32.xlu0 %v2323, 113
    %v2948 = vpop.permute.xlu0 %2947
    %2949 = vrot.lane.b32.xlu0 %v2329, 113
    %v2950 = vpop.permute.xlu0 %2949
    %2951 = vrot.lane.b32.xlu0 %v2335, 113
    %v2952 = vpop.permute.xlu0 %2951
    %2953 = vrot.lane.b32.xlu0 %v2318, 113
    %v2954 = vpop.permute.xlu0 %2953
    %2955 = vrot.lane.b32.xlu0 %v2324, 113
    %v2956 = vpop.permute.xlu0 %2955
    %2957 = vrot.lane.b32.xlu0 %v2330, 113
    %v2958 = vpop.permute.xlu0 %2957
    %2959 = vrot.lane.b32.xlu0 %v2336, 113
    %v2960 = vpop.permute.xlu0 %2959
    %v2961 = vsel %vm839, %v2946, %v2954
    %v2962 = vsel %vm839, %v2948, %v2956
    %v2963 = vsel %vm839, %v2950, %v2958
    %v2964 = vsel %vm839, %v2952, %v2960
    %v2965 = vsel %vm839, %v2954, %v2946
    %v2966 = vsel %vm839, %v2956, %v2948
    %v2967 = vsel %vm839, %v2958, %v2950
    %v2968 = vsel %vm839, %v2960, %v2952
    %v2969 = vmul.f32 %v2961, %v849
    %v2970 = vmul.f32 %v2965, %v850
    %v2971 = vmul.f32 %v2962, %v851
    %v2972 = vmul.f32 %v2966, %v852
    %v2973 = vmul.f32 %v2963, %v853
    %v2974 = vmul.f32 %v2967, %v854
    %v2975 = vmul.f32 %v2964, %v855
    %v2976 = vmul.f32 %v2968, %v856
    %v2977 = vadd.f32 %v2937, %v2969
    %v2978 = vadd.f32 %v2938, %v2970
    %v2979 = vadd.f32 %v2939, %v2971
    %v2980 = vadd.f32 %v2940, %v2972
    %v2981 = vadd.f32 %v2941, %v2973
    %v2982 = vadd.f32 %v2942, %v2974
    %v2983 = vadd.f32 %v2943, %v2975
    %v2984 = vadd.f32 %v2944, %v2976
    %2985 = vrot.lane.b32.xlu0 %v2317, 112
    %v2986 = vpop.permute.xlu0 %2985
    %2987 = vrot.lane.b32.xlu0 %v2323, 112
    %v2988 = vpop.permute.xlu0 %2987
    %2989 = vrot.lane.b32.xlu0 %v2329, 112
    %v2990 = vpop.permute.xlu0 %2989
    %2991 = vrot.lane.b32.xlu0 %v2335, 112
    %v2992 = vpop.permute.xlu0 %2991
    %2993 = vrot.lane.b32.xlu0 %v2318, 112
    %v2994 = vpop.permute.xlu0 %2993
    %2995 = vrot.lane.b32.xlu0 %v2324, 112
    %v2996 = vpop.permute.xlu0 %2995
    %2997 = vrot.lane.b32.xlu0 %v2330, 112
    %v2998 = vpop.permute.xlu0 %2997
    %2999 = vrot.lane.b32.xlu0 %v2336, 112
    %v3000 = vpop.permute.xlu0 %2999
    %v3001 = vsel %vm889, %v2986, %v2994
    %v3002 = vsel %vm889, %v2988, %v2996
    %v3003 = vsel %vm889, %v2990, %v2998
    %v3004 = vsel %vm889, %v2992, %v3000
    %v3005 = vsel %vm889, %v2994, %v2986
    %v3006 = vsel %vm889, %v2996, %v2988
    %v3007 = vsel %vm889, %v2998, %v2990
    %v3008 = vsel %vm889, %v3000, %v2992
    %v3009 = vmul.f32 %v3001, %v899
    %v3010 = vmul.f32 %v3005, %v900
    %v3011 = vmul.f32 %v3002, %v901
    %v3012 = vmul.f32 %v3006, %v902
    %v3013 = vmul.f32 %v3003, %v903
    %v3014 = vmul.f32 %v3007, %v904
    %v3015 = vmul.f32 %v3004, %v905
    %v3016 = vmul.f32 %v3008, %v906
    %v3017 = vadd.f32 %v2977, %v3009
    %v3018 = vadd.f32 %v2978, %v3010
    %v3019 = vadd.f32 %v2979, %v3011
    %v3020 = vadd.f32 %v2980, %v3012
    %v3021 = vadd.f32 %v2981, %v3013
    %v3022 = vadd.f32 %v2982, %v3014
    %v3023 = vadd.f32 %v2983, %v3015
    %v3024 = vadd.f32 %v2984, %v3016
    %3025 = vrot.lane.b32.xlu0 %v2317, 111
    %v3026 = vpop.permute.xlu0 %3025
    %3027 = vrot.lane.b32.xlu0 %v2323, 111
    %v3028 = vpop.permute.xlu0 %3027
    %3029 = vrot.lane.b32.xlu0 %v2329, 111
    %v3030 = vpop.permute.xlu0 %3029
    %3031 = vrot.lane.b32.xlu0 %v2335, 111
    %v3032 = vpop.permute.xlu0 %3031
    %3033 = vrot.lane.b32.xlu0 %v2318, 111
    %v3034 = vpop.permute.xlu0 %3033
    %3035 = vrot.lane.b32.xlu0 %v2324, 111
    %v3036 = vpop.permute.xlu0 %3035
    %3037 = vrot.lane.b32.xlu0 %v2330, 111
    %v3038 = vpop.permute.xlu0 %3037
    %3039 = vrot.lane.b32.xlu0 %v2336, 111
    %v3040 = vpop.permute.xlu0 %3039
    %v3041 = vsel %vm939, %v3026, %v3034
    %v3042 = vsel %vm939, %v3028, %v3036
    %v3043 = vsel %vm939, %v3030, %v3038
    %v3044 = vsel %vm939, %v3032, %v3040
    %v3045 = vsel %vm939, %v3034, %v3026
    %v3046 = vsel %vm939, %v3036, %v3028
    %v3047 = vsel %vm939, %v3038, %v3030
    %v3048 = vsel %vm939, %v3040, %v3032
    %v3049 = vmul.f32 %v3041, %v949
    %v3050 = vmul.f32 %v3045, %v950
    %v3051 = vmul.f32 %v3042, %v951
    %v3052 = vmul.f32 %v3046, %v952
    %v3053 = vmul.f32 %v3043, %v953
    %v3054 = vmul.f32 %v3047, %v954
    %v3055 = vmul.f32 %v3044, %v955
    %v3056 = vmul.f32 %v3048, %v956
    %v3057 = vadd.f32 %v3017, %v3049
    %v3058 = vadd.f32 %v3018, %v3050
    %v3059 = vadd.f32 %v3019, %v3051
    %v3060 = vadd.f32 %v3020, %v3052
    %v3061 = vadd.f32 %v3021, %v3053
    %v3062 = vadd.f32 %v3022, %v3054
    %v3063 = vadd.f32 %v3023, %v3055
    %v3064 = vadd.f32 %v3024, %v3056
    %3065 = vrot.lane.b32.xlu0 %v2317, 110
    %v3066 = vpop.permute.xlu0 %3065
    %3067 = vrot.lane.b32.xlu0 %v2323, 110
    %v3068 = vpop.permute.xlu0 %3067
    %3069 = vrot.lane.b32.xlu0 %v2329, 110
    %v3070 = vpop.permute.xlu0 %3069
    %3071 = vrot.lane.b32.xlu0 %v2335, 110
    %v3072 = vpop.permute.xlu0 %3071
    %3073 = vrot.lane.b32.xlu0 %v2318, 110
    %v3074 = vpop.permute.xlu0 %3073
    %3075 = vrot.lane.b32.xlu0 %v2324, 110
    %v3076 = vpop.permute.xlu0 %3075
    %3077 = vrot.lane.b32.xlu0 %v2330, 110
    %v3078 = vpop.permute.xlu0 %3077
    %3079 = vrot.lane.b32.xlu0 %v2336, 110
    %v3080 = vpop.permute.xlu0 %3079
    %v3081 = vsel %vm989, %v3066, %v3074
    %v3082 = vsel %vm989, %v3068, %v3076
    %v3083 = vsel %vm989, %v3070, %v3078
    %v3084 = vsel %vm989, %v3072, %v3080
    %v3085 = vsel %vm989, %v3074, %v3066
    %v3086 = vsel %vm989, %v3076, %v3068
    %v3087 = vsel %vm989, %v3078, %v3070
    %v3088 = vsel %vm989, %v3080, %v3072
    %v3089 = vmul.f32 %v3081, %v999
    %v3090 = vmul.f32 %v3085, %v1000
    %v3091 = vmul.f32 %v3082, %v1001
    %v3092 = vmul.f32 %v3086, %v1002
    %v3093 = vmul.f32 %v3083, %v1003
    %v3094 = vmul.f32 %v3087, %v1004
    %v3095 = vmul.f32 %v3084, %v1005
    %v3096 = vmul.f32 %v3088, %v1006
    %v3097 = vadd.f32 %v3057, %v3089
    %v3098 = vadd.f32 %v3058, %v3090
    %v3099 = vadd.f32 %v3059, %v3091
    %v3100 = vadd.f32 %v3060, %v3092
    %v3101 = vadd.f32 %v3061, %v3093
    %v3102 = vadd.f32 %v3062, %v3094
    %v3103 = vadd.f32 %v3063, %v3095
    %v3104 = vadd.f32 %v3064, %v3096
    %3105 = vrot.lane.b32.xlu0 %v2317, 98
    %v3106 = vpop.permute.xlu0 %3105
    %3107 = vrot.lane.b32.xlu0 %v2323, 98
    %v3108 = vpop.permute.xlu0 %3107
    %3109 = vrot.lane.b32.xlu0 %v2329, 98
    %v3110 = vpop.permute.xlu0 %3109
    %3111 = vrot.lane.b32.xlu0 %v2335, 98
    %v3112 = vpop.permute.xlu0 %3111
    %3113 = vrot.lane.b32.xlu0 %v2318, 98
    %v3114 = vpop.permute.xlu0 %3113
    %3115 = vrot.lane.b32.xlu0 %v2324, 98
    %v3116 = vpop.permute.xlu0 %3115
    %3117 = vrot.lane.b32.xlu0 %v2330, 98
    %v3118 = vpop.permute.xlu0 %3117
    %3119 = vrot.lane.b32.xlu0 %v2336, 98
    %v3120 = vpop.permute.xlu0 %3119
    %v3121 = vsel %vm1039, %v3106, %v3114
    %v3122 = vsel %vm1039, %v3108, %v3116
    %v3123 = vsel %vm1039, %v3110, %v3118
    %v3124 = vsel %vm1039, %v3112, %v3120
    %v3125 = vsel %vm1039, %v3114, %v3106
    %v3126 = vsel %vm1039, %v3116, %v3108
    %v3127 = vsel %vm1039, %v3118, %v3110
    %v3128 = vsel %vm1039, %v3120, %v3112
    %v3129 = vmul.f32 %v3121, %v1049
    %v3130 = vmul.f32 %v3125, %v1050
    %v3131 = vmul.f32 %v3122, %v1051
    %v3132 = vmul.f32 %v3126, %v1052
    %v3133 = vmul.f32 %v3123, %v1053
    %v3134 = vmul.f32 %v3127, %v1054
    %v3135 = vmul.f32 %v3124, %v1055
    %v3136 = vmul.f32 %v3128, %v1056
    %v3137 = vadd.f32 %v3097, %v3129
    %v3138 = vadd.f32 %v3098, %v3130
    %v3139 = vadd.f32 %v3099, %v3131
    %v3140 = vadd.f32 %v3100, %v3132
    %v3141 = vadd.f32 %v3101, %v3133
    %v3142 = vadd.f32 %v3102, %v3134
    %v3143 = vadd.f32 %v3103, %v3135
    %v3144 = vadd.f32 %v3104, %v3136
    %3145 = vrot.lane.b32.xlu0 %v2317, 97
    %v3146 = vpop.permute.xlu0 %3145
    %3147 = vrot.lane.b32.xlu0 %v2323, 97
    %v3148 = vpop.permute.xlu0 %3147
    %3149 = vrot.lane.b32.xlu0 %v2329, 97
    %v3150 = vpop.permute.xlu0 %3149
    %3151 = vrot.lane.b32.xlu0 %v2335, 97
    %v3152 = vpop.permute.xlu0 %3151
    %3153 = vrot.lane.b32.xlu0 %v2318, 97
    %v3154 = vpop.permute.xlu0 %3153
    %3155 = vrot.lane.b32.xlu0 %v2324, 97
    %v3156 = vpop.permute.xlu0 %3155
    %3157 = vrot.lane.b32.xlu0 %v2330, 97
    %v3158 = vpop.permute.xlu0 %3157
    %3159 = vrot.lane.b32.xlu0 %v2336, 97
    %v3160 = vpop.permute.xlu0 %3159
    %v3161 = vsel %vm1089, %v3146, %v3154
    %v3162 = vsel %vm1089, %v3148, %v3156
    %v3163 = vsel %vm1089, %v3150, %v3158
    %v3164 = vsel %vm1089, %v3152, %v3160
    %v3165 = vsel %vm1089, %v3154, %v3146
    %v3166 = vsel %vm1089, %v3156, %v3148
    %v3167 = vsel %vm1089, %v3158, %v3150
    %v3168 = vsel %vm1089, %v3160, %v3152
    %v3169 = vmul.f32 %v3161, %v1099
    %v3170 = vmul.f32 %v3165, %v1100
    %v3171 = vmul.f32 %v3162, %v1101
    %v3172 = vmul.f32 %v3166, %v1102
    %v3173 = vmul.f32 %v3163, %v1103
    %v3174 = vmul.f32 %v3167, %v1104
    %v3175 = vmul.f32 %v3164, %v1105
    %v3176 = vmul.f32 %v3168, %v1106
    %v3177 = vadd.f32 %v3137, %v3169
    %v3178 = vadd.f32 %v3138, %v3170
    %v3179 = vadd.f32 %v3139, %v3171
    %v3180 = vadd.f32 %v3140, %v3172
    %v3181 = vadd.f32 %v3141, %v3173
    %v3182 = vadd.f32 %v3142, %v3174
    %v3183 = vadd.f32 %v3143, %v3175
    %v3184 = vadd.f32 %v3144, %v3176
    %3185 = vrot.lane.b32.xlu0 %v2317, 96
    %v3186 = vpop.permute.xlu0 %3185
    %3187 = vrot.lane.b32.xlu0 %v2323, 96
    %v3188 = vpop.permute.xlu0 %3187
    %3189 = vrot.lane.b32.xlu0 %v2329, 96
    %v3190 = vpop.permute.xlu0 %3189
    %3191 = vrot.lane.b32.xlu0 %v2335, 96
    %v3192 = vpop.permute.xlu0 %3191
    %3193 = vrot.lane.b32.xlu0 %v2318, 96
    %v3194 = vpop.permute.xlu0 %3193
    %3195 = vrot.lane.b32.xlu0 %v2324, 96
    %v3196 = vpop.permute.xlu0 %3195
    %3197 = vrot.lane.b32.xlu0 %v2330, 96
    %v3198 = vpop.permute.xlu0 %3197
    %3199 = vrot.lane.b32.xlu0 %v2336, 96
    %v3200 = vpop.permute.xlu0 %3199
    %v3201 = vsel %vm1139, %v3186, %v3194
    %v3202 = vsel %vm1139, %v3188, %v3196
    %v3203 = vsel %vm1139, %v3190, %v3198
    %v3204 = vsel %vm1139, %v3192, %v3200
    %v3205 = vsel %vm1139, %v3194, %v3186
    %v3206 = vsel %vm1139, %v3196, %v3188
    %v3207 = vsel %vm1139, %v3198, %v3190
    %v3208 = vsel %vm1139, %v3200, %v3192
    %v3209 = vmul.f32 %v3201, %v1149
    %v3210 = vmul.f32 %v3205, %v1150
    %v3211 = vmul.f32 %v3202, %v1151
    %v3212 = vmul.f32 %v3206, %v1152
    %v3213 = vmul.f32 %v3203, %v1153
    %v3214 = vmul.f32 %v3207, %v1154
    %v3215 = vmul.f32 %v3204, %v1155
    %v3216 = vmul.f32 %v3208, %v1156
    %v3217 = vadd.f32 %v3177, %v3209
    %v3218 = vadd.f32 %v3178, %v3210
    %v3219 = vadd.f32 %v3179, %v3211
    %v3220 = vadd.f32 %v3180, %v3212
    %v3221 = vadd.f32 %v3181, %v3213
    %v3222 = vadd.f32 %v3182, %v3214
    %v3223 = vadd.f32 %v3183, %v3215
    %v3224 = vadd.f32 %v3184, %v3216
    %3225 = vrot.lane.b32.xlu0 %v2317, 95
    %v3226 = vpop.permute.xlu0 %3225
    %3227 = vrot.lane.b32.xlu0 %v2323, 95
    %v3228 = vpop.permute.xlu0 %3227
    %3229 = vrot.lane.b32.xlu0 %v2329, 95
    %v3230 = vpop.permute.xlu0 %3229
    %3231 = vrot.lane.b32.xlu0 %v2335, 95
    %v3232 = vpop.permute.xlu0 %3231
    %3233 = vrot.lane.b32.xlu0 %v2318, 95
    %v3234 = vpop.permute.xlu0 %3233
    %3235 = vrot.lane.b32.xlu0 %v2324, 95
    %v3236 = vpop.permute.xlu0 %3235
    %3237 = vrot.lane.b32.xlu0 %v2330, 95
    %v3238 = vpop.permute.xlu0 %3237
    %3239 = vrot.lane.b32.xlu0 %v2336, 95
    %v3240 = vpop.permute.xlu0 %3239
    %v3241 = vsel %vm1189, %v3226, %v3234
    %v3242 = vsel %vm1189, %v3228, %v3236
    %v3243 = vsel %vm1189, %v3230, %v3238
    %v3244 = vsel %vm1189, %v3232, %v3240
    %v3245 = vsel %vm1189, %v3234, %v3226
    %v3246 = vsel %vm1189, %v3236, %v3228
    %v3247 = vsel %vm1189, %v3238, %v3230
    %v3248 = vsel %vm1189, %v3240, %v3232
    %v3249 = vmul.f32 %v3241, %v1199
    %v3250 = vmul.f32 %v3245, %v1200
    %v3251 = vmul.f32 %v3242, %v1201
    %v3252 = vmul.f32 %v3246, %v1202
    %v3253 = vmul.f32 %v3243, %v1203
    %v3254 = vmul.f32 %v3247, %v1204
    %v3255 = vmul.f32 %v3244, %v1205
    %v3256 = vmul.f32 %v3248, %v1206
    %v3257 = vadd.f32 %v3217, %v3249
    %v3258 = vadd.f32 %v3218, %v3250
    %v3259 = vadd.f32 %v3219, %v3251
    %v3260 = vadd.f32 %v3220, %v3252
    %v3261 = vadd.f32 %v3221, %v3253
    %v3262 = vadd.f32 %v3222, %v3254
    %v3263 = vadd.f32 %v3223, %v3255
    %v3264 = vadd.f32 %v3224, %v3256
    %3265 = vrot.lane.b32.xlu0 %v2317, 94
    %v3266 = vpop.permute.xlu0 %3265
    %3267 = vrot.lane.b32.xlu0 %v2323, 94
    %v3268 = vpop.permute.xlu0 %3267
    %3269 = vrot.lane.b32.xlu0 %v2329, 94
    %v3270 = vpop.permute.xlu0 %3269
    %3271 = vrot.lane.b32.xlu0 %v2335, 94
    %v3272 = vpop.permute.xlu0 %3271
    %3273 = vrot.lane.b32.xlu0 %v2318, 94
    %v3274 = vpop.permute.xlu0 %3273
    %3275 = vrot.lane.b32.xlu0 %v2324, 94
    %v3276 = vpop.permute.xlu0 %3275
    %3277 = vrot.lane.b32.xlu0 %v2330, 94
    %v3278 = vpop.permute.xlu0 %3277
    %3279 = vrot.lane.b32.xlu0 %v2336, 94
    %v3280 = vpop.permute.xlu0 %3279
    %v3281 = vsel %vm1239, %v3266, %v3274
    %v3282 = vsel %vm1239, %v3268, %v3276
    %v3283 = vsel %vm1239, %v3270, %v3278
    %v3284 = vsel %vm1239, %v3272, %v3280
    %v3285 = vsel %vm1239, %v3274, %v3266
    %v3286 = vsel %vm1239, %v3276, %v3268
    %v3287 = vsel %vm1239, %v3278, %v3270
    %v3288 = vsel %vm1239, %v3280, %v3272
    %v3289 = vmul.f32 %v3281, %v1249
    %v3290 = vmul.f32 %v3285, %v1250
    %v3291 = vmul.f32 %v3282, %v1251
    %v3292 = vmul.f32 %v3286, %v1252
    %v3293 = vmul.f32 %v3283, %v1253
    %v3294 = vmul.f32 %v3287, %v1254
    %v3295 = vmul.f32 %v3284, %v1255
    %v3296 = vmul.f32 %v3288, %v1256
    %v3297 = vadd.f32 %v3257, %v3289
    %v3298 = vadd.f32 %v3258, %v3290
    %v3299 = vadd.f32 %v3259, %v3291
    %v3300 = vadd.f32 %v3260, %v3292
    %v3301 = vadd.f32 %v3261, %v3293
    %v3302 = vadd.f32 %v3262, %v3294
    %v3303 = vadd.f32 %v3263, %v3295
    %v3304 = vadd.f32 %v3264, %v3296
    %v3305 = vadd.f32 %v3297, %v3299
    %v3306 = vadd.f32 %v3298, %v3300
    %v3307 = vadd.f32 %v3305, %v3301
    %v3308 = vadd.f32 %v3306, %v3302
    %v3309 = vadd.f32 %v3307, %v3303
    %v3310 = vadd.f32 %v3308, %v3304
    %v3311 = vmul.f32 %v3309, 0.1
    %v3312 = vmul.f32 %v3310, 0.1
    %v3313 = vmax.f32 %v3309, %v3311
    %v3314 = vmax.f32 %v3310, %v3312
    %v3317 = vrot.slane %v3313, 2
    %v3318 = vrot.slane %v3314, 2
    %v3321 = vadd.f32 %v3313, %v3317
    %v3322 = vadd.f32 %v3314, %v3318
    %v3323 = vrot.slane %v3313, 4
    %v3324 = vrot.slane %v3314, 4
    %v3327 = vadd.f32 %v3321, %v3323
    %v3328 = vadd.f32 %v3322, %v3324
    %v3329 = vrot.slane %v3313, 6
    %v3330 = vrot.slane %v3314, 6
    %v3333 = vadd.f32 %v3327, %v3329
    %v3334 = vadd.f32 %v3328, %v3330
    %v3335 = vmul.f32 %v3333, 0.25
    %v3336 = vmul.f32 %v3334, 0.25
    %v3339 = vcombine.low %v3335, %v3336
    %v3341 = vunpack.c.l.s4 1983009808
    %v3342 = vunpack.c.0.s8 %v3341
    %v3343 = vlaneseq
    %v3344 = vshrl.u32 %v3343, 7
    %v3345 = vsub.s32 %v3342, %v3344
    %v3346 = vrot.slane %v3339, %v3345
    %3348 = vst [vmem:[#allocation2] sm:$0xf] %v3346
    // Predicated region
    $region10: #{reservoir_forward.1} parent=1 // pred_check
      _
    $region11: #{reservoir_forward.1} parent=1 // pred_check_branch
      %3350 = sbr.rel (0) target = $region13
    $region12: #{reservoir_forward.1} parent=1 // pred_region
      %s3352 = ssub.s32 64, 64
      %3353 = vsyncadd [#allocation3], %s3352
      %s3355 = sshll.u32 [#allocation2], 4
      %s3356 = int_to_ptr.vmem [resolvable:$true] %s3355
      %3358 = dma.vmem_to_hbm [thread:$0]  %s3356, 64, %s2, [#allocation3]
    $region13: #{reservoir_forward.1} parent=1 // pred_fallthru
      _
    // Predicated region
    $region14: #{reservoir_forward.1} parent=1 // pred_check
      _
    $region15: #{reservoir_forward.1} parent=1 // pred_check_branch
      %3360 = sbr.rel (0) target = $region17
    $region16: #{reservoir_forward.1} parent=1 // pred_region
      %3361 = dma.done [#allocation3], 64
    $region17: #{reservoir_forward.1} parent=1 // pred_fallthru
      _
    %3362 = vsyncpa [#allocation3], 1

</llo_original>
